<compile_context>
chip_gen: v7x
topology: tpu7x:2x2x1
jax: 0.10.0
libtpu: 0.0.40
codegen_flags: <defaults>
</compile_context>

<pallas_src>
import functools
import math

import numpy as np
import jax
import jax.numpy as jnp
from jax import lax
from jax.experimental import pallas as pl
from jax.experimental.pallas import tpu as pltpu


# ------------------------------ small helpers --------------------------------

def _shift_flat(x, s):
    """result[..., i] = x[..., i + s] (static s), zero-filled outside the array."""
    if s == 0:
        return x
    n = x.shape[-1]
    zeros = jnp.zeros(x.shape[:-1] + (abs(s),), x.dtype)
    if s > 0:
        return jnp.concatenate([x[..., s:], zeros], axis=-1)
    return jnp.concatenate([zeros, x[..., :n + s]], axis=-1)


# ----------------------------- Pallas kernels --------------------------------

def _conv1_kernel(x_ref, w1_ref, b1_ref, w3_ref, y_ref, z_ref, *, W):
    """conv1 (1x1x3, BN1 folded) + ReLU6, and z = W3' @ y for the conv2_2 path.

    x_ref: (Cin, St) flattened spatial tile (St % W == 0)
    w1_ref: (3, Cout, Cin)   b1_ref: (Cout, 1)   w3_ref: (Cout, Cout) (BN3 scale folded)
    y_ref, z_ref: (Cout, St)
    """
    St = x_ref.shape[-1]
    x = x_ref[...]
    li = lax.broadcasted_iota(jnp.int32, (1, St), 1)
    w_idx = li % W                                           # tile start is a multiple of W

    acc = jnp.dot(w1_ref[1], x, preferred_element_type=jnp.float32)          # kw = 1
    xl = jnp.where(w_idx >= 1, _shift_flat(x, -1), 0.0)                      # x[w-1]
    acc = acc + jnp.dot(w1_ref[0], xl, preferred_element_type=jnp.float32)   # kw = 0
    xr = jnp.where(w_idx <= W - 2, _shift_flat(x, 1), 0.0)                   # x[w+1]
    acc = acc + jnp.dot(w1_ref[2], xr, preferred_element_type=jnp.float32)   # kw = 2

    y = jnp.clip(acc + b1_ref[...], 0.0, 6.0)                                # ReLU6
    y_ref[...] = y
    z_ref[...] = jnp.dot(w3_ref[...], y, preferred_element_type=jnp.float32)


def _axis_d_kernel(md_ref, z_ref, o_ref):
    """Composed (avgpool 4/2/1 -> trilinear up x2) operator applied along D.
    z_ref/o_ref: (Cout, D, H*W); md_ref: (D, D)."""
    c = z_ref.shape[0]
    md = jnp.broadcast_to(md_ref[...][None, :, :], (c,) + md_ref.shape)
    o_ref[...] = jnp.einsum('bij,bjk->bik', md, z_ref[...],
                            preferred_element_type=jnp.float32)


def _axis_hw_kernel(mh_ref, mwt_ref, z_ref, o_ref):
    """Composed pool+upsample operators applied along H and W.
    z_ref/o_ref: (Cout*D, H, W); mh_ref: (H, H); mwt_ref: (W, W) (already transposed)."""
    b = z_ref.shape[0]
    mh = jnp.broadcast_to(mh_ref[...][None, :, :], (b,) + mh_ref.shape)
    mwt = jnp.broadcast_to(mwt_ref[...][None, :, :], (b,) + mwt_ref.shape)
    t = jnp.einsum('bij,bjk->bik', mh, z_ref[...],
                   preferred_element_type=jnp.float32)
    o_ref[...] = jnp.einsum('bij,bjk->bik', t, mwt,
                            preferred_element_type=jnp.float32)


def _combine_kernel(y_ref, x2_ref, w2_ref, b2_ref, b3_ref, o_ref, *, H, W):
    """conv2_1 (3x3x1, BN2 folded) + ReLU6, sigmoid gate of conv2_2 path, final combine.

    y_ref, x2_ref, o_ref: (Cout, S) with S = D*H*W (one full batch element per grid step)
    w2_ref: (9, Cout, Cout) per-tap weights (BN2 scale folded)   b2_ref, b3_ref: (Cout, 1)
    out = relu6(conv2_1(y)) + sigmoid(x2 + b3) * y
    """
    S = y_ref.shape[-1]
    HW = H * W
    y = y_ref[...]

    li = lax.broadcasted_iota(jnp.int32, (1, S), 1)
    h_idx = (li % HW) // W
    m_lo = h_idx >= 1            # valid where h-1 exists
    m_hi = h_idx <= H - 2        # valid where h+1 exists

    acc = None
    for kd in range(3):
        for kh in range(3):
            t = kd * 3 + kh
            s = (kd - 1) * HW + (kh - 1) * W
            yt = _shift_flat(y, s)          # zero fill handles the D boundaries
            if kh == 0:
                yt = jnp.where(m_lo, yt, 0.0)
            elif kh == 2:
                yt = jnp.where(m_hi, yt, 0.0)
            d = jnp.dot(w2_ref[t], yt, preferred_element_type=jnp.float32)
            acc = d if acc is None else acc + d

    x1 = jnp.clip(acc + b2_ref[...], 0.0, 6.0)                      # ReLU6
    gate = 1.0 / (1.0 + jnp.exp(-(x2_ref[...] + b3_ref[...])))      # sigmoid (EUP exp)
    o_ref[...] = x1 + gate * y


# -------------------- host-side per-axis operator matrices -------------------

def _avgpool_matrix_1d(S: int) -> np.ndarray:
    """1-D factor of AvgPool3d(kernel=4, stride=2, pad=1, count_include_pad=True)."""
    So = (S + 2 - 4) // 2 + 1
    P = np.zeros((So, S), dtype=np.float64)
    for j in range(So):
        for t in range(4):
            i = 2 * j + t - 1
            if 0 <= i < S:
                P[j, i] += 0.25
    return P


def _upsample_matrix_1d(S: int) -> np.ndarray:
    """1-D factor of nn.Upsample(scale_factor=2, mode='trilinear', align_corners=False)."""
    dst = np.arange(2 * S, dtype=np.int64)
    src = np.maximum(dst.astype(np.float64) * 0.5 - 0.25, 0.0)
    i0 = np.floor(src).astype(np.int64)
    frac = src - i0
    i1 = np.minimum(i0 + 1, S - 1)
    U = np.zeros((2 * S, S), dtype=np.float64)
    np.add.at(U, (dst, i0), 1.0 - frac)
    np.add.at(U, (dst, i1), frac)
    return U


def _pool_upsample_matrix_1d(S: int) -> np.ndarray:
    """(S, S) = Upsample_x2 @ AvgPool(4,2,1) composed along one axis."""
    assert S % 2 == 0, "spatial dims must be even for AvgPool(4,2,1) + Upsample(x2)"
    return (_upsample_matrix_1d(S // 2) @ _avgpool_matrix_1d(S)).astype(np.float32)


def _pick_spatial_tile(S: int, W: int, max_tile: int = 16384) -> int:
    """Largest tile dividing S that is a multiple of W (lane shifts stay inside a W-row)
    and a multiple of 128 (lane-dense, unmasked stores); falls back to the full S."""
    if S <= max_tile:
        return S
    unit = W * 128 // math.gcd(W, 128)
    t = (max_tile // unit) * unit
    while t >= unit:
        if S % t == 0:
            return t
        t -= unit
    return S


# --------------------------------- wrapper -----------------------------------

def unet_block_encode(x, p, eps=1e-5):
    N, Cin, D, H, W = x.shape
    Cout = p['w1'].shape[0]
    S = D * H * W
    x = x.astype(jnp.float32)

    # ---- fold eval-mode BatchNorm into conv weights / per-channel biases ----
    def fold(gamma, beta, mean, var):
        s = gamma / jnp.sqrt(var + eps)
        return s, beta - mean * s

    s1, b1 = fold(p['bn1_gamma'], p['bn1_beta'], p['bn1_mean'], p['bn1_var'])
    s2, b2 = fold(p['bn2_gamma'], p['bn2_beta'], p['bn2_mean'], p['bn2_var'])
    s3, b3 = fold(p['bn3_gamma'], p['bn3_beta'], p['bn3_mean'], p['bn3_var'])

    # conv1 weights as (3, Cout, Cin): tap kw -> x[w + kw - 1]
    w1s = jnp.transpose(s1[:, None, None] * p['w1'][:, :, 0, 0, :],
                        (2, 0, 1)).astype(jnp.float32)
    # conv2_1 weights as (9, Cout, Cout): tap kd*3+kh -> y[d+kd-1, h+kh-1]
    w2s = jnp.transpose(s2[:, None, None, None] * p['w2'][:, :, :, :, 0],
                        (2, 3, 0, 1)).reshape(9, Cout, Cout).astype(jnp.float32)
    w3f = (s3[:, None] * p['w3'].reshape(Cout, Cout)).astype(jnp.float32)
    b1 = b1.reshape(Cout, 1).astype(jnp.float32)
    b2 = b2.reshape(Cout, 1).astype(jnp.float32)
    b3 = b3.reshape(Cout, 1).astype(jnp.float32)

    # separable, composed pool+upsample operators (tiny: (S,S) per axis)
    md = jnp.asarray(_pool_upsample_matrix_1d(D))
    mh = jnp.asarray(_pool_upsample_matrix_1d(H))
    mwt = jnp.asarray(_pool_upsample_matrix_1d(W).T)

    St = _pick_spatial_tile(S, W)
    nS = S // St
    cp2 = pltpu.CompilerParams(dimension_semantics=("parallel", "parallel"))
    cp1 = pltpu.CompilerParams(dimension_semantics=("parallel",))

    # ---- stage 1: conv1(1x1x3)+BN1+ReLU6 -> y ; z = W3'(BN3-scaled 1x1x1) @ y ----
    ce1 = pl.CostEstimate(
        flops=2 * N * S * (Cout * 3 * Cin + Cout * Cout),
        transcendentals=0,
        bytes_accessed=4 * (N * Cin * S + 2 * N * Cout * S
                            + 3 * Cout * Cin + Cout * Cout + Cout))

    y, z = pl.pallas_call(
        functools.partial(_conv1_kernel, W=W),
        out_shape=(jax.ShapeDtypeStruct((N, Cout, S), jnp.float32),
                   jax.ShapeDtypeStruct((N, Cout, S), jnp.float32)),
        grid=(N, nS),
        in_specs=[
            pl.BlockSpec((None, Cin, St), lambda n, s: (n, 0, s)),
            pl.BlockSpec((3, Cout, Cin), lambda n, s: (0, 0, 0)),
            pl.BlockSpec((Cout, 1), lambda n, s: (0, 0)),
            pl.BlockSpec((Cout, Cout), lambda n, s: (0, 0)),
        ],
        out_specs=(pl.BlockSpec((None, Cout, St), lambda n, s: (n, 0, s)),
                   pl.BlockSpec((None, Cout, St), lambda n, s: (n, 0, s))),
        compiler_params=cp2,
        cost_estimate=ce1,
    )(x.reshape(N, Cin, S), w1s, b1, w3f)

    # ---- stage 2: conv2_2 spatial part (avgpool -> upsample, composed, separable) ----
    zd = pl.pallas_call(
        _axis_d_kernel,
        out_shape=jax.ShapeDtypeStruct((N, Cout, D, H * W), jnp.float32),
        grid=(N,),
        in_specs=[
            pl.BlockSpec((D, D), lambda n: (0, 0)),
            pl.BlockSpec((None, Cout, D, H * W), lambda n: (n, 0, 0, 0)),
        ],
        out_specs=pl.BlockSpec((None, Cout, D, H * W), lambda n: (n, 0, 0, 0)),
        compiler_params=cp1,
    )(md, z.reshape(N, Cout, D, H * W))

    x2s = pl.pallas_call(
        _axis_hw_kernel,
        out_shape=jax.ShapeDtypeStruct((N, Cout * D, H, W), jnp.float32),
        grid=(N,),
        in_specs=[
            pl.BlockSpec((H, H), lambda n: (0, 0)),
            pl.BlockSpec((W, W), lambda n: (0, 0)),
            pl.BlockSpec((None, Cout * D, H, W), lambda n: (n, 0, 0, 0)),
        ],
        out_specs=pl.BlockSpec((None, Cout * D, H, W), lambda n: (n, 0, 0, 0)),
        compiler_params=cp1,
    )(mh, mwt, zd.reshape(N, Cout * D, H, W))
    x2s = x2s.reshape(N, Cout, S)

    # ---- stage 3: conv2_1(3x3x1)+BN2+ReLU6 and final gated combine -----------
    # TODO(synk): for very large volumes, halo-tile this kernel over D instead of
    # taking the whole flattened volume per grid step.
    ce2 = pl.CostEstimate(
        flops=2 * N * S * 9 * Cout * Cout + 6 * N * Cout * S,
        transcendentals=N * Cout * S,
        bytes_accessed=4 * (4 * N * Cout * S + 9 * Cout * Cout + 2 * Cout))

    out = pl.pallas_call(
        functools.partial(_combine_kernel, H=H, W=W),
        out_shape=jax.ShapeDtypeStruct((N, Cout, S), jnp.float32),
        grid=(N,),
        in_specs=[
            pl.BlockSpec((None, Cout, S), lambda n: (n, 0, 0)),
            pl.BlockSpec((None, Cout, S), lambda n: (n, 0, 0)),
            pl.BlockSpec((9, Cout, Cout), lambda n: (0, 0, 0)),
            pl.BlockSpec((Cout, 1), lambda n: (0, 0)),
            pl.BlockSpec((Cout, 1), lambda n: (0, 0)),
        ],
        out_specs=pl.BlockSpec((None, Cout, S), lambda n: (n, 0, 0)),
        compiler_params=cp1,
        cost_estimate=ce2,
    )(y, x2s, w2s, b2, b3)

    return out.reshape(N, Cout, D, H, W)


# ---------------- pure-JAX reference (independent code path) -----------------

def _bn_eval(x, gamma, beta, mean, var, eps=1e-5):
    s = gamma / jnp.sqrt(var + eps)
    return x * s.reshape(1, -1, 1, 1, 1) + (beta - mean * s).reshape(1, -1, 1, 1, 1)


def _upsample_axis_ref(x, axis):
    S = x.shape[axis]
    dst = np.arange(2 * S)
    src = np.maximum(dst * 0.5 - 0.25, 0.0)
    i0 = np.floor(src).astype(np.int32)
    frac = src - i0
    i1 = np.minimum(i0 + 1, S - 1)
    shape = [1] * x.ndim
    shape[axis] = 2 * S
    fr = jnp.asarray(frac, dtype=x.dtype).reshape(shape)
    x0 = jnp.take(x, jnp.asarray(i0), axis=axis)
    x1 = jnp.take(x, jnp.asarray(i1), axis=axis)
    return x0 * (1.0 - fr) + x1 * fr


def unet_block_encode_ref(x, p, eps=1e-5):
    dn = ('NCDHW', 'OIDHW', 'NCDHW')
    hi = lax.Precision.HIGHEST
    y = lax.conv_general_dilated(x, p['w1'], (1, 1, 1), [(0, 0), (0, 0), (1, 1)],
                                 dimension_numbers=dn, precision=hi)
    y = jnp.clip(_bn_eval(y, p['bn1_gamma'], p['bn1_beta'], p['bn1_mean'], p['bn1_var'], eps), 0.0, 6.0)

    x1 = lax.conv_general_dilated(y, p['w2'], (1, 1, 1), [(1, 1), (1, 1), (0, 0)],
                                  dimension_numbers=dn, precision=hi)
    x1 = jnp.clip(_bn_eval(x1, p['bn2_gamma'], p['bn2_beta'], p['bn2_mean'], p['bn2_var'], eps), 0.0, 6.0)

    yp = jnp.pad(y, ((0, 0), (0, 0), (1, 1), (1, 1), (1, 1)))
    pooled = lax.reduce_window(yp, 0.0, lax.add, (1, 1, 4, 4, 4), (1, 1, 2, 2, 2), 'VALID') / 64.0
    x2 = lax.conv_general_dilated(pooled, p['w3'], (1, 1, 1), [(0, 0), (0, 0), (0, 0)],
                                  dimension_numbers=dn, precision=hi)
    x2 = _bn_eval(x2, p['bn3_gamma'], p['bn3_beta'], p['bn3_mean'], p['bn3_var'], eps)
    for ax in (2, 3, 4):
        x2 = _upsample_axis_ref(x2, ax)
    x2 = jax.nn.sigmoid(x2)
    return x1 + x2 * y


if __name__ == "__main__":
    N, Cin, Cout, D, H, W = 2, 4, 8, 16, 16, 16

    key = jax.random.PRNGKey(0)
    ks = jax.random.split(key, 7)

    def bn_params(k, C):
        kg, kb, km, kv = jax.random.split(k, 4)
        return (1.0 + 0.1 * jax.random.normal(kg, (C,), jnp.float32),
                0.1 * jax.random.normal(kb, (C,), jnp.float32),
                0.1 * jax.random.normal(km, (C,), jnp.float32),
                jax.random.uniform(kv, (C,), jnp.float32, 0.5, 1.5))

    x = jax.random.normal(ks[0], (N, Cin, D, H, W), jnp.float32)
    w1 = 0.3 * jax.random.normal(ks[1], (Cout, Cin, 1, 1, 3), jnp.float32)
    w2 = 0.15 * jax.random.normal(ks[2], (Cout, Cout, 3, 3, 1), jnp.float32)
    w3 = 0.3 * jax.random.normal(ks[3], (Cout, Cout, 1, 1, 1), jnp.float32)
    g1, be1, m1, v1 = bn_params(ks[4], Cout)
    g2, be2, m2, v2 = bn_params(ks[5], Cout)
    g3, be3, m3, v3 = bn_params(ks[6], Cout)

    p = dict(w1=w1, w2=w2, w3=w3,
             bn1_gamma=g1, bn1_beta=be1, bn1_mean=m1, bn1_var=v1,
             bn2_gamma=g2, bn2_beta=be2, bn2_mean=m2, bn2_var=v2,
             bn3_gamma=g3, bn3_beta=be3, bn3_mean=m3, bn3_var=v3)

    out = jax.block_until_ready(unet_block_encode(x, p))
    ref = jax.block_until_ready(unet_block_encode_ref(x, p))

    assert out.shape == (N, Cout, D, H, W), out.shape
    np.testing.assert_allclose(np.asarray(out), np.asarray(ref), rtol=2e-2, atol=2e-2)

    print("KERNEL_OK")
</pallas_src>

<mosaic_0001>
module attributes {stable_mosaic.version = 11 : i64} {
  func.func @_conv1_kernel(%arg0: i32, %arg1: i32, %arg2: memref<1x4x4096xf32, #tpu.memory_space<vmem>>, %arg3: memref<3x8x4xf32, #tpu.memory_space<vmem>>, %arg4: memref<8x1xf32, #tpu.memory_space<vmem>>, %arg5: memref<8x8xf32, #tpu.memory_space<vmem>>, %arg6: memref<1x8x4096xf32, #tpu.memory_space<vmem>>, %arg7: memref<1x8x4096xf32, #tpu.memory_space<vmem>>) attributes {dimension_semantics = [#tpu.dimension_semantics<parallel>, #tpu.dimension_semantics<parallel>], iteration_bounds = array<i64: 2, 1>, scalar_prefetch = 0 : i64, scratch_operands = 0 : i64, tpu.core_type = #tpu.core_type<tc>, window_params = [{transform_indices = @transform_0, window_bounds = array<i64: 1, 4, 4096>}, {pipeline_mode = #tpu.pipeline_mode<synchronous>, transform_indices = @transform_1, window_bounds = array<i64: 3, 8, 4>}, {pipeline_mode = #tpu.pipeline_mode<synchronous>, transform_indices = @transform_2, window_bounds = array<i64: 8, 1>}, {pipeline_mode = #tpu.pipeline_mode<synchronous>, transform_indices = @transform_3, window_bounds = array<i64: 8, 8>}, {transform_indices = @transform_4, window_bounds = array<i64: 1, 8, 4096>}, {transform_indices = @transform_5, window_bounds = array<i64: 1, 8, 4096>}]} {
    %c0 = arith.constant 0 : index
    %c0_0 = arith.constant 0 : index
    %c0_1 = arith.constant 0 : index
    %0 = vector.load %arg2[%c0, %c0_0, %c0_1] : memref<1x4x4096xf32, #tpu.memory_space<vmem>>, vector<1x4x4096xf32>
    %1 = vector.shape_cast %0 : vector<1x4x4096xf32> to vector<4x4096xf32>
    %2 = tpu.iota {dimensions = array<i32: 1>} : vector<1x4096xi32>
    %c16_i32 = arith.constant 16 : i32
    %c0_i32 = arith.constant 0 : i32
    %3 = arith.cmpi eq, %c16_i32, %c0_i32 : i32
    %c1_i32 = arith.constant 1 : i32
    %4 = arith.select %3, %c1_i32, %c16_i32 : i32
    %5 = vector.broadcast %4 : i32 to vector<1x4096xi32>
    %6 = arith.remsi %2, %5 : vector<1x4096xi32>
    %c0_i32_2 = arith.constant 0 : i32
    %7 = vector.broadcast %c0_i32_2 : i32 to vector<1x4096xi32>
    %8 = arith.cmpi ne, %6, %7 : vector<1x4096xi32>
    %c0_i32_3 = arith.constant 0 : i32
    %9 = vector.broadcast %c0_i32_3 : i32 to vector<1x4096xi32>
    %10 = arith.cmpi slt, %6, %9 : vector<1x4096xi32>
    %c0_i32_4 = arith.constant 0 : i32
    %11 = arith.cmpi slt, %4, %c0_i32_4 : i32
    %12 = vector.broadcast %11 : i1 to vector<1x4096xi1>
    %13 = vector.broadcast %12 : vector<1x4096xi1> to vector<1x4096xi1>
    %14 = arith.xori %10, %13 : vector<1x4096xi1>
    %15 = arith.andi %14, %8 : vector<1x4096xi1>
    %16 = vector.broadcast %4 : i32 to vector<1x4096xi32>
    %17 = arith.addi %6, %16 : vector<1x4096xi32>
    %18 = arith.select %15, %17, %6 : vector<1x4096xi1>, vector<1x4096xi32>
    %c1 = arith.constant 1 : index
    %c0_5 = arith.constant 0 : index
    %c0_6 = arith.constant 0 : index
    %19 = vector.load %arg3[%c1, %c0_5, %c0_6] : memref<3x8x4xf32, #tpu.memory_space<vmem>>, vector<1x8x4xf32>
    %20 = vector.shape_cast %19 : vector<1x8x4xf32> to vector<8x4xf32>
    %cst = arith.constant dense<0.000000e+00> : vector<8x4096xf32>
    %21 = tpu.matmul %20, %1, %cst {dimension_numbers = #tpu.dot_dimension_numbers<[1], [0], [0], [1], [0, 0, 1, 1], [], []>} : vector<8x4xf32>, vector<4x4096xf32>, vector<8x4096xf32> -> vector<8x4096xf32>
    %c1_i32_7 = arith.constant 1 : i32
    %22 = vector.broadcast %c1_i32_7 : i32 to vector<1x4096xi32>
    %23 = arith.cmpi sge, %18, %22 : vector<1x4096xi32>
    %cst_8 = arith.constant 0.000000e+00 : f32
    %24 = vector.broadcast %cst_8 : f32 to vector<4x1xf32>
    %25 = vector.extract_strided_slice %1 {offsets = [0, 0], sizes = [4, 4095], strides = [1, 1]} : vector<4x4096xf32> to vector<4x4095xf32>
    %26 = tpu.concatenate %24, %25 in 1 : vector<4x1xf32>, vector<4x4095xf32> -> vector<4x4096xf32>
    %cst_9 = arith.constant 0.000000e+00 : f32
    %27 = vector.shape_cast %23 : vector<1x4096xi1> to vector<1x4096xi1>
    %28 = vector.broadcast %27 : vector<1x4096xi1> to vector<4x4096xi1>
    %29 = vector.broadcast %cst_9 : f32 to vector<4x4096xf32>
    %30 = arith.select %28, %26, %29 : vector<4x4096xi1>, vector<4x4096xf32>
    %c0_10 = arith.constant 0 : index
    %c0_11 = arith.constant 0 : index
    %c0_12 = arith.constant 0 : index
    %31 = vector.load %arg3[%c0_10, %c0_11, %c0_12] : memref<3x8x4xf32, #tpu.memory_space<vmem>>, vector<1x8x4xf32>
    %32 = vector.shape_cast %31 : vector<1x8x4xf32> to vector<8x4xf32>
    %cst_13 = arith.constant dense<0.000000e+00> : vector<8x4096xf32>
    %33 = tpu.matmul %32, %30, %cst_13 {dimension_numbers = #tpu.dot_dimension_numbers<[1], [0], [0], [1], [0, 0, 1, 1], [], []>} : vector<8x4xf32>, vector<4x4096xf32>, vector<8x4096xf32> -> vector<8x4096xf32>
    %34 = arith.addf %21, %33 : vector<8x4096xf32>
    %c14_i32 = arith.constant 14 : i32
    %35 = vector.broadcast %c14_i32 : i32 to vector<1x4096xi32>
    %36 = arith.cmpi sle, %18, %35 : vector<1x4096xi32>
    %cst_14 = arith.constant 0.000000e+00 : f32
    %37 = vector.broadcast %cst_14 : f32 to vector<4x1xf32>
    %38 = vector.extract_strided_slice %1 {offsets = [0, 1], sizes = [4, 4095], strides = [1, 1]} : vector<4x4096xf32> to vector<4x4095xf32>
    %39 = tpu.concatenate %38, %37 in 1 : vector<4x4095xf32>, vector<4x1xf32> -> vector<4x4096xf32>
    %cst_15 = arith.constant 0.000000e+00 : f32
    %40 = vector.shape_cast %36 : vector<1x4096xi1> to vector<1x4096xi1>
    %41 = vector.broadcast %40 : vector<1x4096xi1> to vector<4x4096xi1>
    %42 = vector.broadcast %cst_15 : f32 to vector<4x4096xf32>
    %43 = arith.select %41, %39, %42 : vector<4x4096xi1>, vector<4x4096xf32>
    %c2 = arith.constant 2 : index
    %c0_16 = arith.constant 0 : index
    %c0_17 = arith.constant 0 : index
    %44 = vector.load %arg3[%c2, %c0_16, %c0_17] : memref<3x8x4xf32, #tpu.memory_space<vmem>>, vector<1x8x4xf32>
    %45 = vector.shape_cast %44 : vector<1x8x4xf32> to vector<8x4xf32>
    %cst_18 = arith.constant dense<0.000000e+00> : vector<8x4096xf32>
    %46 = tpu.matmul %45, %43, %cst_18 {dimension_numbers = #tpu.dot_dimension_numbers<[1], [0], [0], [1], [0, 0, 1, 1], [], []>} : vector<8x4xf32>, vector<4x4096xf32>, vector<8x4096xf32> -> vector<8x4096xf32>
    %47 = arith.addf %34, %46 : vector<8x4096xf32>
    %c0_19 = arith.constant 0 : index
    %c0_20 = arith.constant 0 : index
    %48 = vector.load %arg4[%c0_19, %c0_20] : memref<8x1xf32, #tpu.memory_space<vmem>>, vector<8x1xf32>
    %49 = vector.broadcast %48 : vector<8x1xf32> to vector<8x4096xf32>
    %50 = arith.addf %47, %49 : vector<8x4096xf32>
    %cst_21 = arith.constant 0.000000e+00 : f32
    %cst_22 = arith.constant 6.000000e+00 : f32
    %51 = vector.broadcast %cst_21 : f32 to vector<8x4096xf32>
    %52 = arith.maximumf %51, %50 : vector<8x4096xf32>
    %53 = vector.broadcast %cst_22 : f32 to vector<8x4096xf32>
    %54 = arith.minimumf %53, %52 : vector<8x4096xf32>
    %c0_23 = arith.constant 0 : index
    %c0_24 = arith.constant 0 : index
    %c0_25 = arith.constant 0 : index
    %55 = vector.load %arg6[%c0_23, %c0_24, %c0_25] : memref<1x8x4096xf32, #tpu.memory_space<vmem>>, vector<1x8x4096xf32>
    %56 = vector.shape_cast %55 : vector<1x8x4096xf32> to vector<8x4096xf32>
    %57 = vector.shape_cast %54 : vector<8x4096xf32> to vector<1x8x4096xf32>
    tpu.vector_store %arg6[%c0_23, %c0_24, %c0_25], %57 {strides = array<i32>} : memref<1x8x4096xf32, #tpu.memory_space<vmem>>, vector<1x8x4096xf32>,
    %c0_26 = arith.constant 0 : index
    %c0_27 = arith.constant 0 : index
    %58 = vector.load %arg5[%c0_26, %c0_27] : memref<8x8xf32, #tpu.memory_space<vmem>>, vector<8x8xf32>
    %cst_28 = arith.constant dense<0.000000e+00> : vector<8x4096xf32>
    %59 = tpu.matmul %58, %54, %cst_28 {dimension_numbers = #tpu.dot_dimension_numbers<[1], [0], [0], [1], [0, 0, 1, 1], [], []>} : vector<8x8xf32>, vector<8x4096xf32>, vector<8x4096xf32> -> vector<8x4096xf32>
    %c0_29 = arith.constant 0 : index
    %c0_30 = arith.constant 0 : index
    %c0_31 = arith.constant 0 : index
    %60 = vector.load %arg7[%c0_29, %c0_30, %c0_31] : memref<1x8x4096xf32, #tpu.memory_space<vmem>>, vector<1x8x4096xf32>
    %61 = vector.shape_cast %60 : vector<1x8x4096xf32> to vector<8x4096xf32>
    %62 = vector.shape_cast %59 : vector<8x4096xf32> to vector<1x8x4096xf32>
    tpu.vector_store %arg7[%c0_29, %c0_30, %c0_31], %62 {strides = array<i32>} : memref<1x8x4096xf32, #tpu.memory_space<vmem>>, vector<1x8x4096xf32>,
    return
  }
  func.func @transform_0(%arg0: i32, %arg1: i32) -> (i32, i32, i32) {
    %c0_i32 = arith.constant 0 : i32
    %c0_i32_0 = arith.constant 0 : i32
    return %arg0, %c0_i32, %arg1 : i32, i32, i32
  }
  func.func @transform_1(%arg0: i32, %arg1: i32) -> (i32, i32, i32) {
    %c0_i32 = arith.constant 0 : i32
    %c0_i32_0 = arith.constant 0 : i32
    %c0_i32_1 = arith.constant 0 : i32
    %c0_i32_2 = arith.constant 0 : i32
    return %c0_i32, %c0_i32_0, %c0_i32_1 : i32, i32, i32
  }
  func.func @transform_2(%arg0: i32, %arg1: i32) -> (i32, i32) {
    %c0_i32 = arith.constant 0 : i32
    %c0_i32_0 = arith.constant 0 : i32
    %c0_i32_1 = arith.constant 0 : i32
    return %c0_i32, %c0_i32_0 : i32, i32
  }
  func.func @transform_3(%arg0: i32, %arg1: i32) -> (i32, i32) {
    %c0_i32 = arith.constant 0 : i32
    %c0_i32_0 = arith.constant 0 : i32
    %c0_i32_1 = arith.constant 0 : i32
    return %c0_i32, %c0_i32_0 : i32, i32
  }
  func.func @transform_4(%arg0: i32, %arg1: i32) -> (i32, i32, i32) {
    %c0_i32 = arith.constant 0 : i32
    %c0_i32_0 = arith.constant 0 : i32
    return %arg0, %c0_i32, %arg1 : i32, i32, i32
  }
  func.func @transform_5(%arg0: i32, %arg1: i32) -> (i32, i32, i32) {
    %c0_i32 = arith.constant 0 : i32
    %c0_i32_0 = arith.constant 0 : i32
    return %arg0, %c0_i32, %arg1 : i32, i32, i32
  }
}

</mosaic_0001>

<llo_original>
// kernel: tpu_custom_call.1
$region0: #{tpu_custom_call.1}
  #allocation0 [shape = 'u32[]', space=smem, size = 0x4, offset = 0x4, fixed_abs, tag = 'smem constant byte address 0x4 - core index']
  #allocation1 [shape = 'u32[144,128]{1,0:T(1,128)}', space=vmem, size = 0x12000, scoped, tag = 'internal scratch']
  %s0 = inlined_call_operand.hbm [shape: f32[2,4,4096], index: 0, kind: input, shape index: {}]
  %s1 = inlined_call_operand.vmem [shape: f32[3,8,4], index: 1, kind: input, shape index: {}]
  %s2 = inlined_call_operand.vmem [shape: f32[8,1], index: 2, kind: input, shape index: {}]
  %s3 = inlined_call_operand.vmem [shape: f32[8,8], index: 3, kind: input, shape index: {}]
  %s4 = inlined_call_operand.hbm [shape: f32[2,8,4096], index: 4, kind: output, shape index: {0}]
  %s5 = inlined_call_operand.hbm [shape: f32[2,8,4096], index: 5, kind: output, shape index: {1}]
  %6 = xla_tuple %s4, %s5
  %s7 = sld [smem:[#allocation0]]
  $region61: #{tpu_custom_call.1} parent=0
    _
  %s9 = ssub.s32 1, %s7
  %s10 = scalar_select 0, %s9, %s7
  $region1: #{tpu_custom_call.1} parent=0
    #allocation2 [shape = 'u8[131072]{0}', space=vmem, size = 0x20000, scoped, tag = 'input window, operand 0']
    #allocation3 [shape = 's32[2]{0}', space=sflag, size = 0x8, scoped, tag = 'scoped memory for tpu_custom_call.1']
    #allocation4 [shape = 's32[2]{0}', space=sflag, size = 0x8, scoped, tag = 'scoped memory for tpu_custom_call.1']
    #allocation5 [shape = 'u8[262144]{0}', space=vmem, size = 0x40000, scoped, tag = 'output window, operand 0']
    #allocation6 [shape = 'u8[262144]{0}', space=vmem, size = 0x40000, scoped, tag = 'output window, operand 1']
    #allocation7 [shape = 's32[2]{0}', space=sflag, size = 0x8, scoped, tag = 'scoped memory for tpu_custom_call.1']
    %11 = vsyncpa [#allocation3], 0
    %s12 = scalar_lea.sflag [#allocation3], 1
    %13 = vsyncpa %s12, 0
    %14 = vsyncpa [#allocation4], 0
    %s15 = scalar_lea.sflag [#allocation4], 1
    %16 = vsyncpa %s15, 0
    %17 = vsyncpa [#allocation7], 0
    %s18 = scalar_lea.sflag [#allocation7], 1
    %19 = vsyncpa %s18, 0
    loop: start=0, step=1, limit=4
    $region2: #{tpu_custom_call.1} parent=1 // loop_pre_header
      _
    $region3: #{tpu_custom_call.1} parent=1 // loop_header
      %s21 = sphi 0, %s25
      %p22 = scmp.ge.s32.totalorder %s21, 4
      %s28 = sphi 0, %s40
      %s29 = sphi 0, %s36
      %s30 = sphi 0, %s28
      %s31 = sphi 0, %s29
      %s32 = sphi 0, %s30
      %s33 = sphi 0, %s31
      %s45 = sphi 0, %s47
      %s48 = sphi 0, %s45
      %s49 = sphi 0, %s48
      %s65 = sphi 0, %s49
      %s69 = sphi 0, %s69
      %s71 = sphi 0, %s69
      %s72 = sphi 0, %s71
      %s86 = sphi 0, %s72
      %s90 = sphi 0, %s90
      %s92 = sphi 0, %s90
      %s93 = sphi 0, %s92
      %s107 = sphi 0, %s93
      %s111 = sphi 0, %s111
      %s113 = sphi 0, %s111
      %s114 = sphi 0, %s113
      %s128 = sphi 0, %s114
      %s136 = sphi 0, %s138
      %s139 = sphi 0, %s136
      %s140 = sphi 0, %s139
      %s156 = sphi 0, %s140
      %s164 = sphi 0, %s166
      %s167 = sphi 0, %s164
      %s168 = sphi 0, %s167
      %s184 = sphi 0, %s168
    $region4: #{tpu_custom_call.1} parent=1 // loop_header_branch
      %24 = sbr.rel (%p22) target = $region8
    $region5: #{tpu_custom_call.1} parent=1 // loop_body
      %s26 = ssub.s32 %s21, 1
      %s27 = ssub.s32 %s21, 2
      %s34 = sadd.s32 1, %s29
      %p35 = scmp.ge.s32.totalorder %s34, 1
      %s36 = scalar_select %p35, 0, %s34
      %s37 = sadd.s32 1, %s28
      %s38 = scalar_select %p35, %s37, %s28
      %p39 = scmp.ge.s32.totalorder %s38, 2
      %s40 = scalar_select %p39, 0, %s38
      %s41 = ssub.s32 %s28, %s40
      %s42 = ssub.s32 %s29, %s36
      %s43 = sor.u32 %s41, %s42
      %p44 = scmp.eq.s32.totalorder %s43, 0
      %s46 = sadd.s32 %s45, 1
      %s47 = scalar_select %p44, %s45, %s46
      %p50 = pneg %p44
      %p51 = scmp.eq.s32.totalorder %s21, 1
      %p52 = por %p50, %p51
      %p53 = scmp.ne.s32.totalorder %s45, %s48
      %p54 = scmp.eq.s32.totalorder %s21, 0
      %p55 = por %p53, %p54
      %p56 = scmp.ne.s32.totalorder %s45, %s48
      %p57 = scmp.eq.s32.totalorder %s26, 1
      %p58 = por %p56, %p57
      %p59 = scmp.ne.s32.totalorder %s48, %s49
      %p60 = scmp.eq.s32.totalorder %s26, 0
      %p61 = por %p59, %p60
      %p62 = scmp.ne.s32.totalorder %s48, %s49
      %p63 = scmp.eq.s32.totalorder %s27, 1
      %p64 = por %p62, %p63
      %p66 = scmp.ne.s32.totalorder %s49, %s65
      %p67 = scmp.eq.s32.totalorder %s27, 0
      %p68 = por %p66, %p67
      %s70 = sadd.s32 %s69, 1
      %p73 = scmp.eq.s32.totalorder %s21, 1
      %p74 = scmp.ne.s32.totalorder %s69, %s71
      %p75 = scmp.eq.s32.totalorder %s21, 0
      %p76 = por %p74, %p75
      %p77 = scmp.ne.s32.totalorder %s69, %s71
      %p78 = scmp.eq.s32.totalorder %s26, 1
      %p79 = por %p77, %p78
      %p80 = scmp.ne.s32.totalorder %s71, %s72
      %p81 = scmp.eq.s32.totalorder %s26, 0
      %p82 = por %p80, %p81
      %p83 = scmp.ne.s32.totalorder %s71, %s72
      %p84 = scmp.eq.s32.totalorder %s27, 1
      %p85 = por %p83, %p84
      %p87 = scmp.ne.s32.totalorder %s72, %s86
      %p88 = scmp.eq.s32.totalorder %s27, 0
      %p89 = por %p87, %p88
      %s91 = sadd.s32 %s90, 1
      %p94 = scmp.eq.s32.totalorder %s21, 1
      %p95 = scmp.ne.s32.totalorder %s90, %s92
      %p96 = scmp.eq.s32.totalorder %s21, 0
      %p97 = por %p95, %p96
      %p98 = scmp.ne.s32.totalorder %s90, %s92
      %p99 = scmp.eq.s32.totalorder %s26, 1
      %p100 = por %p98, %p99
      %p101 = scmp.ne.s32.totalorder %s92, %s93
      %p102 = scmp.eq.s32.totalorder %s26, 0
      %p103 = por %p101, %p102
      %p104 = scmp.ne.s32.totalorder %s92, %s93
      %p105 = scmp.eq.s32.totalorder %s27, 1
      %p106 = por %p104, %p105
      %p108 = scmp.ne.s32.totalorder %s93, %s107
      %p109 = scmp.eq.s32.totalorder %s27, 0
      %p110 = por %p108, %p109
      %s112 = sadd.s32 %s111, 1
      %p115 = scmp.eq.s32.totalorder %s21, 1
      %p116 = scmp.ne.s32.totalorder %s111, %s113
      %p117 = scmp.eq.s32.totalorder %s21, 0
      %p118 = por %p116, %p117
      %p119 = scmp.ne.s32.totalorder %s111, %s113
      %p120 = scmp.eq.s32.totalorder %s26, 1
      %p121 = por %p119, %p120
      %p122 = scmp.ne.s32.totalorder %s113, %s114
      %p123 = scmp.eq.s32.totalorder %s26, 0
      %p124 = por %p122, %p123
      %p125 = scmp.ne.s32.totalorder %s113, %s114
      %p126 = scmp.eq.s32.totalorder %s27, 1
      %p127 = por %p125, %p126
      %p129 = scmp.ne.s32.totalorder %s114, %s128
      %p130 = scmp.eq.s32.totalorder %s27, 0
      %p131 = por %p129, %p130
      %s132 = ssub.s32 %s28, %s40
      %s133 = ssub.s32 %s29, %s36
      %s134 = sor.u32 %s132, %s133
      %p135 = scmp.eq.s32.totalorder %s134, 0
      %s137 = sadd.s32 %s136, 1
      %s138 = scalar_select %p135, %s136, %s137
      %p141 = pneg %p135
      %p142 = scmp.eq.s32.totalorder %s21, 1
      %p143 = por %p141, %p142
      %p144 = scmp.ne.s32.totalorder %s136, %s139
      %p145 = scmp.eq.s32.totalorder %s21, 0
      %p146 = por %p144, %p145
      %p147 = scmp.ne.s32.totalorder %s136, %s139
      %p148 = scmp.eq.s32.totalorder %s26, 1
      %p149 = por %p147, %p148
      %p150 = scmp.ne.s32.totalorder %s139, %s140
      %p151 = scmp.eq.s32.totalorder %s26, 0
      %p152 = por %p150, %p151
      %p153 = scmp.ne.s32.totalorder %s139, %s140
      %p154 = scmp.eq.s32.totalorder %s27, 1
      %p155 = por %p153, %p154
      %p157 = scmp.ne.s32.totalorder %s140, %s156
      %p158 = scmp.eq.s32.totalorder %s27, 0
      %p159 = por %p157, %p158
      %s160 = ssub.s32 %s28, %s40
      %s161 = ssub.s32 %s29, %s36
      %s162 = sor.u32 %s160, %s161
      %p163 = scmp.eq.s32.totalorder %s162, 0
      %s165 = sadd.s32 %s164, 1
      %s166 = scalar_select %p163, %s164, %s165
      %p169 = pneg %p163
      %p170 = scmp.eq.s32.totalorder %s21, 1
      %p171 = por %p169, %p170
      %p172 = scmp.ne.s32.totalorder %s164, %s167
      %p173 = scmp.eq.s32.totalorder %s21, 0
      %p174 = por %p172, %p173
      %p175 = scmp.ne.s32.totalorder %s164, %s167
      %p176 = scmp.eq.s32.totalorder %s26, 1
      %p177 = por %p175, %p176
      %p178 = scmp.ne.s32.totalorder %s167, %s168
      %p179 = scmp.eq.s32.totalorder %s26, 0
      %p180 = por %p178, %p179
      %p181 = scmp.ne.s32.totalorder %s167, %s168
      %p182 = scmp.eq.s32.totalorder %s27, 1
      %p183 = por %p181, %p182
      %p185 = scmp.ne.s32.totalorder %s168, %s184
      %p186 = scmp.eq.s32.totalorder %s27, 0
      %p187 = por %p185, %p186
      %p188 = scmp.le.s32.totalorder 1, %s21
      %p189 = scmp.lt.s32.totalorder %s21, 3
      %p190 = pnand %p188, %p189
      %p191 = pneg %p190
      // Predicated region
      $region9: #{tpu_custom_call.1} parent=5 // pred_check
        _
      $region10: #{tpu_custom_call.1} parent=5 // pred_check_branch
        %193 = sbr.rel (%p190) target = $region12
      $region11: #{tpu_custom_call.1} parent=5 // pred_region
        %s194 = ssub.s32 %s21, 1
        // Predicated region
        $region13: #{tpu_custom_call.1} parent=11 // pred_check
          %p195 = pneg %p82
        $region14: #{tpu_custom_call.1} parent=11 // pred_check_branch
          %197 = sbr.rel (%p195) target = $region16
        $region15: #{tpu_custom_call.1} parent=11 // pred_region
          _
        $region16: #{tpu_custom_call.1} parent=11 // pred_fallthru
          _
        // Predicated region
        $region17: #{tpu_custom_call.1} parent=11 // pred_check
          %p198 = pneg %p103
        $region18: #{tpu_custom_call.1} parent=11 // pred_check_branch
          %200 = sbr.rel (%p198) target = $region20
        $region19: #{tpu_custom_call.1} parent=11 // pred_region
          _
        $region20: #{tpu_custom_call.1} parent=11 // pred_fallthru
          _
        // Predicated region
        $region21: #{tpu_custom_call.1} parent=11 // pred_check
          %p201 = pneg %p124
        $region22: #{tpu_custom_call.1} parent=11 // pred_check_branch
          %203 = sbr.rel (%p201) target = $region24
        $region23: #{tpu_custom_call.1} parent=11 // pred_region
          _
        $region24: #{tpu_custom_call.1} parent=11 // pred_fallthru
          _
      $region12: #{tpu_custom_call.1} parent=5 // pred_fallthru
        _
      %p204 = scmp.lt.s32.totalorder %s21, 2
      // Predicated region
      $region25: #{tpu_custom_call.1} parent=5 // pred_check
        %p205 = pneg %p204
      $region26: #{tpu_custom_call.1} parent=5 // pred_check_branch
        %207 = sbr.rel (%p205) target = $region28
      $region27: #{tpu_custom_call.1} parent=5 // pred_region
        // Predicated region
        $region29: #{tpu_custom_call.1} parent=27 // pred_check
          %p208 = pneg %p55
        $region30: #{tpu_custom_call.1} parent=27 // pred_check_branch
          %210 = sbr.rel (%p208) target = $region32
        $region31: #{tpu_custom_call.1} parent=27 // pred_region
          %s211 = sand.u32 %s45, 1
          %s212 = scalar_lea.sflag [#allocation3], %s211
          %s213 = sand.u32 %s45, 1
          %s214 = smul.addr %s213, 128
          %s215 = scalar_lea.vmem [#allocation2], %s214
          %s216 = smul.u32 32, %s29
          %s218 = ssub.s32 2048, 2048
          %219 = vsyncadd %s212, %s218
          %s220 = smul.addr %s28, 32
          %s221 = sadd.s32 %s216, %s220
          %s222 = smul.addr %s221, 64
          %s223 = scalar_lea.hbm %s0, %s222
          %s225 = sshll.u32 %s215, 4
          %s226 = int_to_ptr.vmem [resolvable:$true] %s225
          %228 = dma.hbm_to_vmem [thread:$0]  %s223, 2048, %s226, %s212
        $region32: #{tpu_custom_call.1} parent=27 // pred_fallthru
          _
      $region28: #{tpu_custom_call.1} parent=5 // pred_fallthru
        _
      %p229 = scmp.le.s32.totalorder 1, %s21
      %p230 = scmp.lt.s32.totalorder %s21, 3
      %p231 = pnand %p229, %p230
      %p232 = pneg %p231
      // Predicated region
      $region33: #{tpu_custom_call.1} parent=5 // pred_check
        _
      $region34: #{tpu_custom_call.1} parent=5 // pred_check_branch
        %234 = sbr.rel (%p231) target = $region36
      $region35: #{tpu_custom_call.1} parent=5 // pred_region
        %s235 = ssub.s32 %s21, 1
        %s236 = sand.u32 %s48, 1
        %s237 = scalar_lea.sflag [#allocation3], %s236
        %s238 = sand.u32 %s48, 1
        %s239 = smul.addr %s238, 128
        %s240 = scalar_lea.vmem [#allocation2], %s239
        // Predicated region
        $region37: #{tpu_custom_call.1} parent=35 // pred_check
          %p241 = pneg %p61
        $region38: #{tpu_custom_call.1} parent=35 // pred_check_branch
          %243 = sbr.rel (%p241) target = $region40
        $region39: #{tpu_custom_call.1} parent=35 // pred_region
          %244 = dma.done %s237, 2048
        $region40: #{tpu_custom_call.1} parent=35 // pred_fallthru
          _
        %s245 = sand.u32 %s48, 1
        %s246 = scalar_lea.sflag [#allocation3], %s245
        %s247 = sand.u32 %s48, 1
        %s248 = smul.addr %s247, 128
        %s249 = scalar_lea.vmem [#allocation2], %s248
        %p250 = pneg %p61
        %p251 = pneg %p58
        %p252 = pneg %p82
        %p253 = pneg %p79
        %p254 = pneg %p103
        %p255 = pneg %p100
        %p256 = pneg %p124
        %p257 = pneg %p121
        %p258 = pneg %p152
        %p259 = pneg %p149
        %s260 = sand.u32 %s139, 1
        %s261 = scalar_lea.sflag [#allocation4], %s260
        %s262 = sand.u32 %s139, 1
        %s263 = smul.addr %s262, 256
        %s264 = scalar_lea.vmem [#allocation5], %s263
        %p265 = pneg %p180
        %p266 = pneg %p177
        %s267 = sand.u32 %s167, 1
        %s268 = scalar_lea.sflag [#allocation7], %s267
        %s269 = sand.u32 %s167, 1
        %s270 = smul.addr %s269, 256
        %s271 = scalar_lea.vmem [#allocation6], %s270
        %s272 = smul.u32 32, %s31
        %s273 = smul.u32 32, %s31
        %s274 = smul.u32 32, %s31
        %v275 = vld [vmem:[%s240] sm:$0xff]
        %v276 = vld [vmem:[%s240 + $0x8] sm:$0xff]
        %v277 = vld [vmem:[%s240 + $0x10] sm:$0xff]
        %v278 = vld [vmem:[%s240 + $0x18] sm:$0xff]
        %v279 = vld [vmem:[%s240 + $0x20] sm:$0xff]
        %v280 = vld [vmem:[%s240 + $0x28] sm:$0xff]
        %v281 = vld [vmem:[%s240 + $0x30] sm:$0xff]
        %v282 = vld [vmem:[%s240 + $0x38] sm:$0xff]
        %v283 = vld [vmem:[%s240 + $0x40] sm:$0xff]
        %v284 = vld [vmem:[%s240 + $0x48] sm:$0xff]
        %v285 = vld [vmem:[%s240 + $0x50] sm:$0xff]
        %v286 = vld [vmem:[%s240 + $0x58] sm:$0xff]
        %v287 = vld [vmem:[%s240 + $0x60] sm:$0xff]
        %v288 = vld [vmem:[%s240 + $0x68] sm:$0xff]
        %v289 = vld [vmem:[%s240 + $0x70] sm:$0xff]
        %v290 = vld [vmem:[%s240 + $0x78] sm:$0xff]
        %v291 = vlaneseq
        %v292 = vand.u32 %v291, 127
        %v293 = vadd.s32 %v292, 128
        %v294 = vadd.s32 %v292, 256
        %v295 = vadd.s32 %v292, 384
        %v296 = vadd.s32 %v292, 512
        %v297 = vadd.s32 %v292, 640
        %v298 = vadd.s32 %v292, 768
        %v299 = vadd.s32 %v292, 896
        %v300 = vadd.s32 %v292, 1024
        %v301 = vadd.s32 %v292, 1152
        %v302 = vadd.s32 %v292, 1280
        %v303 = vadd.s32 %v292, 1408
        %v304 = vadd.s32 %v292, 1536
        %v305 = vadd.s32 %v292, 1664
        %v306 = vadd.s32 %v292, 1792
        %v307 = vadd.s32 %v292, 1920
        %v308 = vadd.s32 %v292, 2048
        %v309 = vadd.s32 %v292, 2176
        %v310 = vadd.s32 %v292, 2304
        %v311 = vadd.s32 %v292, 2432
        %v312 = vadd.s32 %v292, 2560
        %v313 = vadd.s32 %v292, 2688
        %v314 = vadd.s32 %v292, 2816
        %v315 = vadd.s32 %v292, 2944
        %v316 = vadd.s32 %v292, 3072
        %v317 = vadd.s32 %v292, 3200
        %v318 = vadd.s32 %v292, 3328
        %v319 = vadd.s32 %v292, 3456
        %v320 = vadd.s32 %v292, 3584
        %v321 = vadd.s32 %v292, 3712
        %v322 = vadd.s32 %v292, 3840
        %v323 = vadd.s32 %v292, 3968
        %vm324 = vcmp.lt.s32.totalorder %v292, 0
        %v325 = vsub.s32 0, %v292
        %v326 = vsel %vm324, %v325, %v292
        %v327 = vshrl.u32 %v326, 4
        %v328 = vand.u32 %v326, 15
        %v329 = vsub.s32 0, %v328
        %v330 = vsel %vm324, %v329, %v328
        %vm331 = vcmp.lt.s32.totalorder %v293, 0
        %v332 = vsub.s32 0, %v293
        %v333 = vsel %vm331, %v332, %v293
        %v334 = vshrl.u32 %v333, 4
        %v335 = vand.u32 %v333, 15
        %v336 = vsub.s32 0, %v335
        %v337 = vsel %vm331, %v336, %v335
        %vm338 = vcmp.lt.s32.totalorder %v294, 0
        %v339 = vsub.s32 0, %v294
        %v340 = vsel %vm338, %v339, %v294
        %v341 = vshrl.u32 %v340, 4
        %v342 = vand.u32 %v340, 15
        %v343 = vsub.s32 0, %v342
        %v344 = vsel %vm338, %v343, %v342
        %vm345 = vcmp.lt.s32.totalorder %v295, 0
        %v346 = vsub.s32 0, %v295
        %v347 = vsel %vm345, %v346, %v295
        %v348 = vshrl.u32 %v347, 4
        %v349 = vand.u32 %v347, 15
        %v350 = vsub.s32 0, %v349
        %v351 = vsel %vm345, %v350, %v349
        %vm352 = vcmp.lt.s32.totalorder %v296, 0
        %v353 = vsub.s32 0, %v296
        %v354 = vsel %vm352, %v353, %v296
        %v355 = vshrl.u32 %v354, 4
        %v356 = vand.u32 %v354, 15
        %v357 = vsub.s32 0, %v356
        %v358 = vsel %vm352, %v357, %v356
        %vm359 = vcmp.lt.s32.totalorder %v297, 0
        %v360 = vsub.s32 0, %v297
        %v361 = vsel %vm359, %v360, %v297
        %v362 = vshrl.u32 %v361, 4
        %v363 = vand.u32 %v361, 15
        %v364 = vsub.s32 0, %v363
        %v365 = vsel %vm359, %v364, %v363
        %vm366 = vcmp.lt.s32.totalorder %v298, 0
        %v367 = vsub.s32 0, %v298
        %v368 = vsel %vm366, %v367, %v298
        %v369 = vshrl.u32 %v368, 4
        %v370 = vand.u32 %v368, 15
        %v371 = vsub.s32 0, %v370
        %v372 = vsel %vm366, %v371, %v370
        %vm373 = vcmp.lt.s32.totalorder %v299, 0
        %v374 = vsub.s32 0, %v299
        %v375 = vsel %vm373, %v374, %v299
        %v376 = vshrl.u32 %v375, 4
        %v377 = vand.u32 %v375, 15
        %v378 = vsub.s32 0, %v377
        %v379 = vsel %vm373, %v378, %v377
        %vm380 = vcmp.lt.s32.totalorder %v300, 0
        %v381 = vsub.s32 0, %v300
        %v382 = vsel %vm380, %v381, %v300
        %v383 = vshrl.u32 %v382, 4
        %v384 = vand.u32 %v382, 15
        %v385 = vsub.s32 0, %v384
        %v386 = vsel %vm380, %v385, %v384
        %vm387 = vcmp.lt.s32.totalorder %v301, 0
        %v388 = vsub.s32 0, %v301
        %v389 = vsel %vm387, %v388, %v301
        %v390 = vshrl.u32 %v389, 4
        %v391 = vand.u32 %v389, 15
        %v392 = vsub.s32 0, %v391
        %v393 = vsel %vm387, %v392, %v391
        %vm394 = vcmp.lt.s32.totalorder %v302, 0
        %v395 = vsub.s32 0, %v302
        %v396 = vsel %vm394, %v395, %v302
        %v397 = vshrl.u32 %v396, 4
        %v398 = vand.u32 %v396, 15
        %v399 = vsub.s32 0, %v398
        %v400 = vsel %vm394, %v399, %v398
        %vm401 = vcmp.lt.s32.totalorder %v303, 0
        %v402 = vsub.s32 0, %v303
        %v403 = vsel %vm401, %v402, %v303
        %v404 = vshrl.u32 %v403, 4
        %v405 = vand.u32 %v403, 15
        %v406 = vsub.s32 0, %v405
        %v407 = vsel %vm401, %v406, %v405
        %vm408 = vcmp.lt.s32.totalorder %v304, 0
        %v409 = vsub.s32 0, %v304
        %v410 = vsel %vm408, %v409, %v304
        %v411 = vshrl.u32 %v410, 4
        %v412 = vand.u32 %v410, 15
        %v413 = vsub.s32 0, %v412
        %v414 = vsel %vm408, %v413, %v412
        %vm415 = vcmp.lt.s32.totalorder %v305, 0
        %v416 = vsub.s32 0, %v305
        %v417 = vsel %vm415, %v416, %v305
        %v418 = vshrl.u32 %v417, 4
        %v419 = vand.u32 %v417, 15
        %v420 = vsub.s32 0, %v419
        %v421 = vsel %vm415, %v420, %v419
        %vm422 = vcmp.lt.s32.totalorder %v306, 0
        %v423 = vsub.s32 0, %v306
        %v424 = vsel %vm422, %v423, %v306
        %v425 = vshrl.u32 %v424, 4
        %v426 = vand.u32 %v424, 15
        %v427 = vsub.s32 0, %v426
        %v428 = vsel %vm422, %v427, %v426
        %vm429 = vcmp.lt.s32.totalorder %v307, 0
        %v430 = vsub.s32 0, %v307
        %v431 = vsel %vm429, %v430, %v307
        %v432 = vshrl.u32 %v431, 4
        %v433 = vand.u32 %v431, 15
        %v434 = vsub.s32 0, %v433
        %v435 = vsel %vm429, %v434, %v433
        %vm436 = vcmp.lt.s32.totalorder %v308, 0
        %v437 = vsub.s32 0, %v308
        %v438 = vsel %vm436, %v437, %v308
        %v439 = vshrl.u32 %v438, 4
        %v440 = vand.u32 %v438, 15
        %v441 = vsub.s32 0, %v440
        %v442 = vsel %vm436, %v441, %v440
        %vm443 = vcmp.lt.s32.totalorder %v309, 0
        %v444 = vsub.s32 0, %v309
        %v445 = vsel %vm443, %v444, %v309
        %v446 = vshrl.u32 %v445, 4
        %v447 = vand.u32 %v445, 15
        %v448 = vsub.s32 0, %v447
        %v449 = vsel %vm443, %v448, %v447
        %vm450 = vcmp.lt.s32.totalorder %v310, 0
        %v451 = vsub.s32 0, %v310
        %v452 = vsel %vm450, %v451, %v310
        %v453 = vshrl.u32 %v452, 4
        %v454 = vand.u32 %v452, 15
        %v455 = vsub.s32 0, %v454
        %v456 = vsel %vm450, %v455, %v454
        %vm457 = vcmp.lt.s32.totalorder %v311, 0
        %v458 = vsub.s32 0, %v311
        %v459 = vsel %vm457, %v458, %v311
        %v460 = vshrl.u32 %v459, 4
        %v461 = vand.u32 %v459, 15
        %v462 = vsub.s32 0, %v461
        %v463 = vsel %vm457, %v462, %v461
        %vm464 = vcmp.lt.s32.totalorder %v312, 0
        %v465 = vsub.s32 0, %v312
        %v466 = vsel %vm464, %v465, %v312
        %v467 = vshrl.u32 %v466, 4
        %v468 = vand.u32 %v466, 15
        %v469 = vsub.s32 0, %v468
        %v470 = vsel %vm464, %v469, %v468
        %vm471 = vcmp.lt.s32.totalorder %v313, 0
        %v472 = vsub.s32 0, %v313
        %v473 = vsel %vm471, %v472, %v313
        %v474 = vshrl.u32 %v473, 4
        %v475 = vand.u32 %v473, 15
        %v476 = vsub.s32 0, %v475
        %v477 = vsel %vm471, %v476, %v475
        %vm478 = vcmp.lt.s32.totalorder %v314, 0
        %v479 = vsub.s32 0, %v314
        %v480 = vsel %vm478, %v479, %v314
        %v481 = vshrl.u32 %v480, 4
        %v482 = vand.u32 %v480, 15
        %v483 = vsub.s32 0, %v482
        %v484 = vsel %vm478, %v483, %v482
        %vm485 = vcmp.lt.s32.totalorder %v315, 0
        %v486 = vsub.s32 0, %v315
        %v487 = vsel %vm485, %v486, %v315
        %v488 = vshrl.u32 %v487, 4
        %v489 = vand.u32 %v487, 15
        %v490 = vsub.s32 0, %v489
        %v491 = vsel %vm485, %v490, %v489
        %vm492 = vcmp.lt.s32.totalorder %v316, 0
        %v493 = vsub.s32 0, %v316
        %v494 = vsel %vm492, %v493, %v316
        %v495 = vshrl.u32 %v494, 4
        %v496 = vand.u32 %v494, 15
        %v497 = vsub.s32 0, %v496
        %v498 = vsel %vm492, %v497, %v496
        %vm499 = vcmp.lt.s32.totalorder %v317, 0
        %v500 = vsub.s32 0, %v317
        %v501 = vsel %vm499, %v500, %v317
        %v502 = vshrl.u32 %v501, 4
        %v503 = vand.u32 %v501, 15
        %v504 = vsub.s32 0, %v503
        %v505 = vsel %vm499, %v504, %v503
        %vm506 = vcmp.lt.s32.totalorder %v318, 0
        %v507 = vsub.s32 0, %v318
        %v508 = vsel %vm506, %v507, %v318
        %v509 = vshrl.u32 %v508, 4
        %v510 = vand.u32 %v508, 15
        %v511 = vsub.s32 0, %v510
        %v512 = vsel %vm506, %v511, %v510
        %vm513 = vcmp.lt.s32.totalorder %v319, 0
        %v514 = vsub.s32 0, %v319
        %v515 = vsel %vm513, %v514, %v319
        %v516 = vshrl.u32 %v515, 4
        %v517 = vand.u32 %v515, 15
        %v518 = vsub.s32 0, %v517
        %v519 = vsel %vm513, %v518, %v517
        %vm520 = vcmp.lt.s32.totalorder %v320, 0
        %v521 = vsub.s32 0, %v320
        %v522 = vsel %vm520, %v521, %v320
        %v523 = vshrl.u32 %v522, 4
        %v524 = vand.u32 %v522, 15
        %v525 = vsub.s32 0, %v524
        %v526 = vsel %vm520, %v525, %v524
        %vm527 = vcmp.lt.s32.totalorder %v321, 0
        %v528 = vsub.s32 0, %v321
        %v529 = vsel %vm527, %v528, %v321
        %v530 = vshrl.u32 %v529, 4
        %v531 = vand.u32 %v529, 15
        %v532 = vsub.s32 0, %v531
        %v533 = vsel %vm527, %v532, %v531
        %vm534 = vcmp.lt.s32.totalorder %v322, 0
        %v535 = vsub.s32 0, %v322
        %v536 = vsel %vm534, %v535, %v322
        %v537 = vshrl.u32 %v536, 4
        %v538 = vand.u32 %v536, 15
        %v539 = vsub.s32 0, %v538
        %v540 = vsel %vm534, %v539, %v538
        %vm541 = vcmp.lt.s32.totalorder %v323, 0
        %v542 = vsub.s32 0, %v323
        %v543 = vsel %vm541, %v542, %v323
        %v544 = vshrl.u32 %v543, 4
        %v545 = vand.u32 %v543, 15
        %v546 = vsub.s32 0, %v545
        %v547 = vsel %vm541, %v546, %v545
        %vm548 = vcmp.ne.s32.totalorder %v330, 0
        %vm549 = vcmp.ne.s32.totalorder %v337, 0
        %vm550 = vcmp.ne.s32.totalorder %v344, 0
        %vm551 = vcmp.ne.s32.totalorder %v351, 0
        %vm552 = vcmp.ne.s32.totalorder %v358, 0
        %vm553 = vcmp.ne.s32.totalorder %v365, 0
        %vm554 = vcmp.ne.s32.totalorder %v372, 0
        %vm555 = vcmp.ne.s32.totalorder %v379, 0
        %vm556 = vcmp.ne.s32.totalorder %v386, 0
        %vm557 = vcmp.ne.s32.totalorder %v393, 0
        %vm558 = vcmp.ne.s32.totalorder %v400, 0
        %vm559 = vcmp.ne.s32.totalorder %v407, 0
        %vm560 = vcmp.ne.s32.totalorder %v414, 0
        %vm561 = vcmp.ne.s32.totalorder %v421, 0
        %vm562 = vcmp.ne.s32.totalorder %v428, 0
        %vm563 = vcmp.ne.s32.totalorder %v435, 0
        %vm564 = vcmp.ne.s32.totalorder %v442, 0
        %vm565 = vcmp.ne.s32.totalorder %v449, 0
        %vm566 = vcmp.ne.s32.totalorder %v456, 0
        %vm567 = vcmp.ne.s32.totalorder %v463, 0
        %vm568 = vcmp.ne.s32.totalorder %v470, 0
        %vm569 = vcmp.ne.s32.totalorder %v477, 0
        %vm570 = vcmp.ne.s32.totalorder %v484, 0
        %vm571 = vcmp.ne.s32.totalorder %v491, 0
        %vm572 = vcmp.ne.s32.totalorder %v498, 0
        %vm573 = vcmp.ne.s32.totalorder %v505, 0
        %vm574 = vcmp.ne.s32.totalorder %v512, 0
        %vm575 = vcmp.ne.s32.totalorder %v519, 0
        %vm576 = vcmp.ne.s32.totalorder %v526, 0
        %vm577 = vcmp.ne.s32.totalorder %v533, 0
        %vm578 = vcmp.ne.s32.totalorder %v540, 0
        %vm579 = vcmp.ne.s32.totalorder %v547, 0
        %vm580 = vcmp.lt.s32.totalorder %v330, 0
        %vm581 = vcmp.lt.s32.totalorder %v337, 0
        %vm582 = vcmp.lt.s32.totalorder %v344, 0
        %vm583 = vcmp.lt.s32.totalorder %v351, 0
        %vm584 = vcmp.lt.s32.totalorder %v358, 0
        %vm585 = vcmp.lt.s32.totalorder %v365, 0
        %vm586 = vcmp.lt.s32.totalorder %v372, 0
        %vm587 = vcmp.lt.s32.totalorder %v379, 0
        %vm588 = vcmp.lt.s32.totalorder %v386, 0
        %vm589 = vcmp.lt.s32.totalorder %v393, 0
        %vm590 = vcmp.lt.s32.totalorder %v400, 0
        %vm591 = vcmp.lt.s32.totalorder %v407, 0
        %vm592 = vcmp.lt.s32.totalorder %v414, 0
        %vm593 = vcmp.lt.s32.totalorder %v421, 0
        %vm594 = vcmp.lt.s32.totalorder %v428, 0
        %vm595 = vcmp.lt.s32.totalorder %v435, 0
        %vm596 = vcmp.lt.s32.totalorder %v442, 0
        %vm597 = vcmp.lt.s32.totalorder %v449, 0
        %vm598 = vcmp.lt.s32.totalorder %v456, 0
        %vm599 = vcmp.lt.s32.totalorder %v463, 0
        %vm600 = vcmp.lt.s32.totalorder %v470, 0
        %vm601 = vcmp.lt.s32.totalorder %v477, 0
        %vm602 = vcmp.lt.s32.totalorder %v484, 0
        %vm603 = vcmp.lt.s32.totalorder %v491, 0
        %vm604 = vcmp.lt.s32.totalorder %v498, 0
        %vm605 = vcmp.lt.s32.totalorder %v505, 0
        %vm606 = vcmp.lt.s32.totalorder %v512, 0
        %vm607 = vcmp.lt.s32.totalorder %v519, 0
        %vm608 = vcmp.lt.s32.totalorder %v526, 0
        %vm609 = vcmp.lt.s32.totalorder %v533, 0
        %vm610 = vcmp.lt.s32.totalorder %v540, 0
        %vm611 = vcmp.lt.s32.totalorder %v547, 0
        %vm612 = vmand %vm580, %vm548
        %vm613 = vmand %vm581, %vm549
        %vm614 = vmand %vm582, %vm550
        %vm615 = vmand %vm583, %vm551
        %vm616 = vmand %vm584, %vm552
        %vm617 = vmand %vm585, %vm553
        %vm618 = vmand %vm586, %vm554
        %vm619 = vmand %vm587, %vm555
        %vm620 = vmand %vm588, %vm556
        %vm621 = vmand %vm589, %vm557
        %vm622 = vmand %vm590, %vm558
        %vm623 = vmand %vm591, %vm559
        %vm624 = vmand %vm592, %vm560
        %vm625 = vmand %vm593, %vm561
        %vm626 = vmand %vm594, %vm562
        %vm627 = vmand %vm595, %vm563
        %vm628 = vmand %vm596, %vm564
        %vm629 = vmand %vm597, %vm565
        %vm630 = vmand %vm598, %vm566
        %vm631 = vmand %vm599, %vm567
        %vm632 = vmand %vm600, %vm568
        %vm633 = vmand %vm601, %vm569
        %vm634 = vmand %vm602, %vm570
        %vm635 = vmand %vm603, %vm571
        %vm636 = vmand %vm604, %vm572
        %vm637 = vmand %vm605, %vm573
        %vm638 = vmand %vm606, %vm574
        %vm639 = vmand %vm607, %vm575
        %vm640 = vmand %vm608, %vm576
        %vm641 = vmand %vm609, %vm577
        %vm642 = vmand %vm610, %vm578
        %vm643 = vmand %vm611, %vm579
        %v644 = vadd.s32 %v330, 16
        %v645 = vadd.s32 %v337, 16
        %v646 = vadd.s32 %v344, 16
        %v647 = vadd.s32 %v351, 16
        %v648 = vadd.s32 %v358, 16
        %v649 = vadd.s32 %v365, 16
        %v650 = vadd.s32 %v372, 16
        %v651 = vadd.s32 %v379, 16
        %v652 = vadd.s32 %v386, 16
        %v653 = vadd.s32 %v393, 16
        %v654 = vadd.s32 %v400, 16
        %v655 = vadd.s32 %v407, 16
        %v656 = vadd.s32 %v414, 16
        %v657 = vadd.s32 %v421, 16
        %v658 = vadd.s32 %v428, 16
        %v659 = vadd.s32 %v435, 16
        %v660 = vadd.s32 %v442, 16
        %v661 = vadd.s32 %v449, 16
        %v662 = vadd.s32 %v456, 16
        %v663 = vadd.s32 %v463, 16
        %v664 = vadd.s32 %v470, 16
        %v665 = vadd.s32 %v477, 16
        %v666 = vadd.s32 %v484, 16
        %v667 = vadd.s32 %v491, 16
        %v668 = vadd.s32 %v498, 16
        %v669 = vadd.s32 %v505, 16
        %v670 = vadd.s32 %v512, 16
        %v671 = vadd.s32 %v519, 16
        %v672 = vadd.s32 %v526, 16
        %v673 = vadd.s32 %v533, 16
        %v674 = vadd.s32 %v540, 16
        %v675 = vadd.s32 %v547, 16
        %v676 = vsel %vm612, %v644, %v330
        %v677 = vsel %vm613, %v645, %v337
        %v678 = vsel %vm614, %v646, %v344
        %v679 = vsel %vm615, %v647, %v351
        %v680 = vsel %vm616, %v648, %v358
        %v681 = vsel %vm617, %v649, %v365
        %v682 = vsel %vm618, %v650, %v372
        %v683 = vsel %vm619, %v651, %v379
        %v684 = vsel %vm620, %v652, %v386
        %v685 = vsel %vm621, %v653, %v393
        %v686 = vsel %vm622, %v654, %v400
        %v687 = vsel %vm623, %v655, %v407
        %v688 = vsel %vm624, %v656, %v414
        %v689 = vsel %vm625, %v657, %v421
        %v690 = vsel %vm626, %v658, %v428
        %v691 = vsel %vm627, %v659, %v435
        %v692 = vsel %vm628, %v660, %v442
        %v693 = vsel %vm629, %v661, %v449
        %v694 = vsel %vm630, %v662, %v456
        %v695 = vsel %vm631, %v663, %v463
        %v696 = vsel %vm632, %v664, %v470
        %v697 = vsel %vm633, %v665, %v477
        %v698 = vsel %vm634, %v666, %v484
        %v699 = vsel %vm635, %v667, %v491
        %v700 = vsel %vm636, %v668, %v498
        %v701 = vsel %vm637, %v669, %v505
        %v702 = vsel %vm638, %v670, %v512
        %v703 = vsel %vm639, %v671, %v519
        %v704 = vsel %vm640, %v672, %v526
        %v705 = vsel %vm641, %v673, %v533
        %v706 = vsel %vm642, %v674, %v540
        %v707 = vsel %vm643, %v675, %v547
        %s708 = scalar_lea.vmem %s1, 8
        %v709 = vld [vmem:[%s708] sm:$0xff]
        %vm710 = vcmp.ge.s32.totalorder %v676, 1
        %vm711 = vcmp.ge.s32.totalorder %v677, 1
        %vm712 = vcmp.ge.s32.totalorder %v678, 1
        %vm713 = vcmp.ge.s32.totalorder %v679, 1
        %vm714 = vcmp.ge.s32.totalorder %v680, 1
        %vm715 = vcmp.ge.s32.totalorder %v681, 1
        %vm716 = vcmp.ge.s32.totalorder %v682, 1
        %vm717 = vcmp.ge.s32.totalorder %v683, 1
        %vm718 = vcmp.ge.s32.totalorder %v684, 1
        %vm719 = vcmp.ge.s32.totalorder %v685, 1
        %vm720 = vcmp.ge.s32.totalorder %v686, 1
        %vm721 = vcmp.ge.s32.totalorder %v687, 1
        %vm722 = vcmp.ge.s32.totalorder %v688, 1
        %vm723 = vcmp.ge.s32.totalorder %v689, 1
        %vm724 = vcmp.ge.s32.totalorder %v690, 1
        %vm725 = vcmp.ge.s32.totalorder %v691, 1
        %vm726 = vcmp.ge.s32.totalorder %v692, 1
        %vm727 = vcmp.ge.s32.totalorder %v693, 1
        %vm728 = vcmp.ge.s32.totalorder %v694, 1
        %vm729 = vcmp.ge.s32.totalorder %v695, 1
        %vm730 = vcmp.ge.s32.totalorder %v696, 1
        %vm731 = vcmp.ge.s32.totalorder %v697, 1
        %vm732 = vcmp.ge.s32.totalorder %v698, 1
        %vm733 = vcmp.ge.s32.totalorder %v699, 1
        %vm734 = vcmp.ge.s32.totalorder %v700, 1
        %vm735 = vcmp.ge.s32.totalorder %v701, 1
        %vm736 = vcmp.ge.s32.totalorder %v702, 1
        %vm737 = vcmp.ge.s32.totalorder %v703, 1
        %vm738 = vcmp.ge.s32.totalorder %v704, 1
        %vm739 = vcmp.ge.s32.totalorder %v705, 1
        %vm740 = vcmp.ge.s32.totalorder %v706, 1
        %vm741 = vcmp.ge.s32.totalorder %v707, 1
        %v758 = vcombine.high %v275, %v275
        %v759 = vcombine.high %v276, %v276
        %v760 = vcombine.high %v277, %v277
        %v761 = vcombine.high %v278, %v278
        %v762 = vcombine.high %v279, %v279
        %v763 = vcombine.high %v280, %v280
        %v764 = vcombine.high %v281, %v281
        %v765 = vcombine.high %v282, %v282
        %v766 = vcombine.high %v283, %v283
        %v767 = vcombine.high %v284, %v284
        %v768 = vcombine.high %v285, %v285
        %v769 = vcombine.high %v286, %v286
        %v770 = vcombine.high %v287, %v287
        %v771 = vcombine.high %v288, %v288
        %v772 = vcombine.high %v289, %v289
        %v773 = vcombine.high %v290, %v290
        %774 = vrot.lane.b32.xlu0 %v275, 1
        %v775 = vpop.permute.xlu0 %774
        %776 = vrot.lane.b32.xlu0 %v758, 1
        %v777 = vpop.permute.xlu0 %776
        %778 = vrot.lane.b32.xlu0 %v276, 1
        %v779 = vpop.permute.xlu0 %778
        %780 = vrot.lane.b32.xlu0 %v759, 1
        %v781 = vpop.permute.xlu0 %780
        %782 = vrot.lane.b32.xlu0 %v277, 1
        %v783 = vpop.permute.xlu0 %782
        %784 = vrot.lane.b32.xlu0 %v760, 1
        %v785 = vpop.permute.xlu0 %784
        %786 = vrot.lane.b32.xlu0 %v278, 1
        %v787 = vpop.permute.xlu0 %786
        %788 = vrot.lane.b32.xlu0 %v761, 1
        %v789 = vpop.permute.xlu0 %788
        %790 = vrot.lane.b32.xlu0 %v279, 1
        %v791 = vpop.permute.xlu0 %790
        %792 = vrot.lane.b32.xlu0 %v762, 1
        %v793 = vpop.permute.xlu0 %792
        %794 = vrot.lane.b32.xlu0 %v280, 1
        %v795 = vpop.permute.xlu0 %794
        %796 = vrot.lane.b32.xlu0 %v763, 1
        %v797 = vpop.permute.xlu0 %796
        %798 = vrot.lane.b32.xlu0 %v281, 1
        %v799 = vpop.permute.xlu0 %798
        %800 = vrot.lane.b32.xlu0 %v764, 1
        %v801 = vpop.permute.xlu0 %800
        %802 = vrot.lane.b32.xlu0 %v282, 1
        %v803 = vpop.permute.xlu0 %802
        %804 = vrot.lane.b32.xlu0 %v765, 1
        %v805 = vpop.permute.xlu0 %804
        %806 = vrot.lane.b32.xlu0 %v283, 1
        %v807 = vpop.permute.xlu0 %806
        %808 = vrot.lane.b32.xlu0 %v766, 1
        %v809 = vpop.permute.xlu0 %808
        %810 = vrot.lane.b32.xlu0 %v284, 1
        %v811 = vpop.permute.xlu0 %810
        %812 = vrot.lane.b32.xlu0 %v767, 1
        %v813 = vpop.permute.xlu0 %812
        %814 = vrot.lane.b32.xlu0 %v285, 1
        %v815 = vpop.permute.xlu0 %814
        %816 = vrot.lane.b32.xlu0 %v768, 1
        %v817 = vpop.permute.xlu0 %816
        %818 = vrot.lane.b32.xlu0 %v286, 1
        %v819 = vpop.permute.xlu0 %818
        %820 = vrot.lane.b32.xlu0 %v769, 1
        %v821 = vpop.permute.xlu0 %820
        %822 = vrot.lane.b32.xlu0 %v287, 1
        %v823 = vpop.permute.xlu0 %822
        %824 = vrot.lane.b32.xlu0 %v770, 1
        %v825 = vpop.permute.xlu0 %824
        %826 = vrot.lane.b32.xlu0 %v288, 1
        %v827 = vpop.permute.xlu0 %826
        %828 = vrot.lane.b32.xlu0 %v771, 1
        %v829 = vpop.permute.xlu0 %828
        %830 = vrot.lane.b32.xlu0 %v289, 1
        %v831 = vpop.permute.xlu0 %830
        %832 = vrot.lane.b32.xlu0 %v772, 1
        %v833 = vpop.permute.xlu0 %832
        %834 = vrot.lane.b32.xlu0 %v290, 1
        %v835 = vpop.permute.xlu0 %834
        %836 = vrot.lane.b32.xlu0 %v773, 1
        %v837 = vpop.permute.xlu0 %836
        %vm838 = vcmask 7168
        %v839 = vsel %vm838, %v775, %v777
        %v840 = vsel %vm838, %v777, %v779
        %v841 = vsel %vm838, %v779, %v781
        %v842 = vsel %vm838, %v781, %v783
        %v843 = vsel %vm838, %v783, %v785
        %v844 = vsel %vm838, %v785, %v787
        %v845 = vsel %vm838, %v787, %v789
        %v846 = vsel %vm838, %v789, %v791
        %v847 = vsel %vm838, %v791, %v793
        %v848 = vsel %vm838, %v793, %v795
        %v849 = vsel %vm838, %v795, %v797
        %v850 = vsel %vm838, %v797, %v799
        %v851 = vsel %vm838, %v799, %v801
        %v852 = vsel %vm838, %v801, %v803
        %v853 = vsel %vm838, %v803, %v805
        %v854 = vsel %vm838, %v805, %v807
        %v855 = vsel %vm838, %v807, %v809
        %v856 = vsel %vm838, %v809, %v811
        %v857 = vsel %vm838, %v811, %v813
        %v858 = vsel %vm838, %v813, %v815
        %v859 = vsel %vm838, %v815, %v817
        %v860 = vsel %vm838, %v817, %v819
        %v861 = vsel %vm838, %v819, %v821
        %v862 = vsel %vm838, %v821, %v823
        %v863 = vsel %vm838, %v823, %v825
        %v864 = vsel %vm838, %v825, %v827
        %v865 = vsel %vm838, %v827, %v829
        %v866 = vsel %vm838, %v829, %v831
        %v867 = vsel %vm838, %v831, %v833
        %v868 = vsel %vm838, %v833, %v835
        %v869 = vsel %vm838, %v835, %v837
        %v902 = vsel %vm838, 0.0, %v775
        %v903 = vsel %vm710, 1, 0
        %v904 = vsel %vm711, 1, 0
        %v905 = vsel %vm712, 1, 0
        %v906 = vsel %vm713, 1, 0
        %v907 = vsel %vm714, 1, 0
        %v908 = vsel %vm715, 1, 0
        %v909 = vsel %vm716, 1, 0
        %v910 = vsel %vm717, 1, 0
        %v911 = vsel %vm718, 1, 0
        %v912 = vsel %vm719, 1, 0
        %v913 = vsel %vm720, 1, 0
        %v914 = vsel %vm721, 1, 0
        %v915 = vsel %vm722, 1, 0
        %v916 = vsel %vm723, 1, 0
        %v917 = vsel %vm724, 1, 0
        %v918 = vsel %vm725, 1, 0
        %v919 = vsel %vm726, 1, 0
        %v920 = vsel %vm727, 1, 0
        %v921 = vsel %vm728, 1, 0
        %v922 = vsel %vm729, 1, 0
        %v923 = vsel %vm730, 1, 0
        %v924 = vsel %vm731, 1, 0
        %v925 = vsel %vm732, 1, 0
        %v926 = vsel %vm733, 1, 0
        %v927 = vsel %vm734, 1, 0
        %v928 = vsel %vm735, 1, 0
        %v929 = vsel %vm736, 1, 0
        %v930 = vsel %vm737, 1, 0
        %v931 = vsel %vm738, 1, 0
        %v932 = vsel %vm739, 1, 0
        %v933 = vsel %vm740, 1, 0
        %v934 = vsel %vm741, 1, 0
        %vm935 = vcmp.eq.s32.totalorder %v903, 1
        %vm936 = vcmp.eq.s32.totalorder %v904, 1
        %vm937 = vcmp.eq.s32.totalorder %v905, 1
        %vm938 = vcmp.eq.s32.totalorder %v906, 1
        %vm939 = vcmp.eq.s32.totalorder %v907, 1
        %vm940 = vcmp.eq.s32.totalorder %v908, 1
        %vm941 = vcmp.eq.s32.totalorder %v909, 1
        %vm942 = vcmp.eq.s32.totalorder %v910, 1
        %vm943 = vcmp.eq.s32.totalorder %v911, 1
        %vm944 = vcmp.eq.s32.totalorder %v912, 1
        %vm945 = vcmp.eq.s32.totalorder %v913, 1
        %vm946 = vcmp.eq.s32.totalorder %v914, 1
        %vm947 = vcmp.eq.s32.totalorder %v915, 1
        %vm948 = vcmp.eq.s32.totalorder %v916, 1
        %vm949 = vcmp.eq.s32.totalorder %v917, 1
        %vm950 = vcmp.eq.s32.totalorder %v918, 1
        %vm951 = vcmp.eq.s32.totalorder %v919, 1
        %vm952 = vcmp.eq.s32.totalorder %v920, 1
        %vm953 = vcmp.eq.s32.totalorder %v921, 1
        %vm954 = vcmp.eq.s32.totalorder %v922, 1
        %vm955 = vcmp.eq.s32.totalorder %v923, 1
        %vm956 = vcmp.eq.s32.totalorder %v924, 1
        %vm957 = vcmp.eq.s32.totalorder %v925, 1
        %vm958 = vcmp.eq.s32.totalorder %v926, 1
        %vm959 = vcmp.eq.s32.totalorder %v927, 1
        %vm960 = vcmp.eq.s32.totalorder %v928, 1
        %vm961 = vcmp.eq.s32.totalorder %v929, 1
        %vm962 = vcmp.eq.s32.totalorder %v930, 1
        %vm963 = vcmp.eq.s32.totalorder %v931, 1
        %vm964 = vcmp.eq.s32.totalorder %v932, 1
        %vm965 = vcmp.eq.s32.totalorder %v933, 1
        %vm966 = vcmp.eq.s32.totalorder %v934, 1
        %v967 = vsel %vm935, %v902, 0.0
        %v968 = vsel %vm936, %v839, 0.0
        %v969 = vsel %vm937, %v840, 0.0
        %v970 = vsel %vm938, %v841, 0.0
        %v971 = vsel %vm939, %v842, 0.0
        %v972 = vsel %vm940, %v843, 0.0
        %v973 = vsel %vm941, %v844, 0.0
        %v974 = vsel %vm942, %v845, 0.0
        %v975 = vsel %vm943, %v846, 0.0
        %v976 = vsel %vm944, %v847, 0.0
        %v977 = vsel %vm945, %v848, 0.0
        %v978 = vsel %vm946, %v849, 0.0
        %v979 = vsel %vm947, %v850, 0.0
        %v980 = vsel %vm948, %v851, 0.0
        %v981 = vsel %vm949, %v852, 0.0
        %v982 = vsel %vm950, %v853, 0.0
        %v983 = vsel %vm951, %v854, 0.0
        %v984 = vsel %vm952, %v855, 0.0
        %v985 = vsel %vm953, %v856, 0.0
        %v986 = vsel %vm954, %v857, 0.0
        %v987 = vsel %vm955, %v858, 0.0
        %v988 = vsel %vm956, %v859, 0.0
        %v989 = vsel %vm957, %v860, 0.0
        %v990 = vsel %vm958, %v861, 0.0
        %v991 = vsel %vm959, %v862, 0.0
        %v992 = vsel %vm960, %v863, 0.0
        %v993 = vsel %vm961, %v864, 0.0
        %v994 = vsel %vm962, %v865, 0.0
        %v995 = vsel %vm963, %v866, 0.0
        %v996 = vsel %vm964, %v867, 0.0
        %v997 = vsel %vm965, %v868, 0.0
        %v998 = vsel %vm966, %v869, 0.0
        %v999 = vld [vmem:[%s1] sm:$0xff]
        %vm1000 = vcmask 31744
        %v1002 = vsel %vm1000, %v999, 0
        %vm1004 = vcmask 1043456
        %v1006 = vsel %vm1004, %v967, 0
        %v1009 = vsel %vm1004, %v968, 0
        %v1012 = vsel %vm1004, %v969, 0
        %v1015 = vsel %vm1004, %v970, 0
        %v1018 = vsel %vm1004, %v971, 0
        %v1021 = vsel %vm1004, %v972, 0
        %v1024 = vsel %vm1004, %v973, 0
        %v1027 = vsel %vm1004, %v974, 0
        %v1030 = vsel %vm1004, %v975, 0
        %v1033 = vsel %vm1004, %v976, 0
        %v1036 = vsel %vm1004, %v977, 0
        %v1039 = vsel %vm1004, %v978, 0
        %v1042 = vsel %vm1004, %v979, 0
        %v1045 = vsel %vm1004, %v980, 0
        %v1048 = vsel %vm1004, %v981, 0
        %v1051 = vsel %vm1004, %v982, 0
        %v1054 = vsel %vm1004, %v983, 0
        %v1057 = vsel %vm1004, %v984, 0
        %v1060 = vsel %vm1004, %v985, 0
        %v1063 = vsel %vm1004, %v986, 0
        %v1066 = vsel %vm1004, %v987, 0
        %v1069 = vsel %vm1004, %v988, 0
        %v1072 = vsel %vm1004, %v989, 0
        %v1075 = vsel %vm1004, %v990, 0
        %v1078 = vsel %vm1004, %v991, 0
        %v1081 = vsel %vm1004, %v992, 0
        %v1084 = vsel %vm1004, %v993, 0
        %v1087 = vsel %vm1004, %v994, 0
        %v1090 = vsel %vm1004, %v995, 0
        %v1093 = vsel %vm1004, %v996, 0
        %v1096 = vsel %vm1004, %v997, 0
        %v1099 = vsel %vm1004, %v998, 0
        %1101 = vmatprep.subr.mxu0 %v1009
        %1102 = vmatpush1.msra.mxu0 %v1006
        %1103 = vmatprep.subr.mxu0 0.0
        %1104 = vmatpush1.msra.mxu0 0.0
        %1105 = vmatprep.subr.mxu0 0.0
        %1106 = vmatpush1.msra.mxu0 0.0
        %1107 = vmatprep.subr.mxu0 0.0
        %1108 = vmatpush1.msra.mxu0 0.0
        %1109 = vmatprep.subr.mxu0 0.0
        %1110 = vmatpush1.msra.mxu0 0.0
        %1111 = vmatprep.subr.mxu0 0.0
        %1112 = vmatpush1.msra.mxu0 0.0
        %1113 = vmatprep.subr.mxu0 0.0
        %1114 = vmatpush1.msra.mxu0 0.0
        %1115 = vmatprep.subr.mxu0 0.0
        %1116 = vmatpush1.msra.mxu0 0.0
        %1117 = vmatprep.subr.mxu0 0.0
        %1118 = vmatpush1.msra.mxu0 0.0
        %1119 = vmatprep.subr.mxu0 0.0
        %1120 = vmatpush1.msra.mxu0 0.0
        %1121 = vmatprep.subr.mxu0 0.0
        %1122 = vmatpush1.msra.mxu0 0.0
        %1123 = vmatprep.subr.mxu0 0.0
        %1124 = vmatpush1.msra.mxu0 0.0
        %1125 = vmatprep.subr.mxu0 0.0
        %1126 = vmatpush1.msra.mxu0 0.0
        %1127 = vmatprep.subr.mxu0 0.0
        %1128 = vmatpush1.msra.mxu0 0.0
        %1129 = vmatprep.subr.mxu0 0.0
        %1130 = vmatpush1.msra.mxu0 0.0
        %1131 = vmatprep.subr.mxu0 0.0
        %1132 = vmatpush1.msra.mxu0 0.0
        %1133 = vmatprep.subr.mxu0 0.0
        %1134 = vmatpush1.msra.mxu0 0.0
        %1135 = vmatprep.subr.mxu0 0.0
        %1136 = vmatpush1.msra.mxu0 0.0
        %1137 = vmatprep.subr.mxu0 0.0
        %1138 = vmatpush1.msra.mxu0 0.0
        %1139 = vmatprep.subr.mxu0 0.0
        %1140 = vmatpush1.msra.mxu0 0.0
        %1141 = vmatprep.subr.mxu0 0.0
        %1142 = vmatpush1.msra.mxu0 0.0
        %1143 = vmatprep.subr.mxu0 0.0
        %1144 = vmatpush1.msra.mxu0 0.0
        %1145 = vmatprep.subr.mxu0 0.0
        %1146 = vmatpush1.msra.mxu0 0.0
        %1147 = vmatprep.subr.mxu0 0.0
        %1148 = vmatpush1.msra.mxu0 0.0
        %1149 = vmatprep.subr.mxu0 0.0
        %1150 = vmatpush1.msra.mxu0 0.0
        %1151 = vmatprep.subr.mxu0 0.0
        %1152 = vmatpush1.msra.mxu0 0.0
        %1153 = vmatprep.subr.mxu0 0.0
        %1154 = vmatpush1.msra.mxu0 0.0
        %1155 = vmatprep.subr.mxu0 0.0
        %1156 = vmatpush1.msra.mxu0 0.0
        %1157 = vmatprep.subr.mxu0 0.0
        %1158 = vmatpush1.msra.mxu0 0.0
        %1159 = vmatprep.subr.mxu0 0.0
        %1160 = vmatpush1.msra.mxu0 0.0
        %1161 = vmatprep.subr.mxu0 0.0
        %1162 = vmatpush1.msra.mxu0 0.0
        %1163 = vmatprep.subr.mxu0 0.0
        %1164 = vmatpush1.msra.mxu0 0.0
        %1165 = vmatprep.mubr.f32.mxu0 0.0
        %1166 = vmatmul.mubr.f32.gmra.mrb[0].mxu0 %v1002
        %v1167 = vpop.f32.mrb[0].mxu0
        %v1168 = vadd.f32 0.0, %v1167
        %v1169 = vpop.f32.mrb[0].mxu0
        %v1170 = vadd.f32 0.0, %v1169
        %1171 = vdwg.mxu0
        %1172 = vmatprep.subr.mxu0 %v1015
        %1173 = vmatpush1.msra.mxu0 %v1012
        %1174 = vmatprep.subr.mxu0 0.0
        %1175 = vmatpush1.msra.mxu0 0.0
        %1176 = vmatprep.subr.mxu0 0.0
        %1177 = vmatpush1.msra.mxu0 0.0
        %1178 = vmatprep.subr.mxu0 0.0
        %1179 = vmatpush1.msra.mxu0 0.0
        %1180 = vmatprep.subr.mxu0 0.0
        %1181 = vmatpush1.msra.mxu0 0.0
        %1182 = vmatprep.subr.mxu0 0.0
        %1183 = vmatpush1.msra.mxu0 0.0
        %1184 = vmatprep.subr.mxu0 0.0
        %1185 = vmatpush1.msra.mxu0 0.0
        %1186 = vmatprep.subr.mxu0 0.0
        %1187 = vmatpush1.msra.mxu0 0.0
        %1188 = vmatprep.subr.mxu0 0.0
        %1189 = vmatpush1.msra.mxu0 0.0
        %1190 = vmatprep.subr.mxu0 0.0
        %1191 = vmatpush1.msra.mxu0 0.0
        %1192 = vmatprep.subr.mxu0 0.0
        %1193 = vmatpush1.msra.mxu0 0.0
        %1194 = vmatprep.subr.mxu0 0.0
        %1195 = vmatpush1.msra.mxu0 0.0
        %1196 = vmatprep.subr.mxu0 0.0
        %1197 = vmatpush1.msra.mxu0 0.0
        %1198 = vmatprep.subr.mxu0 0.0
        %1199 = vmatpush1.msra.mxu0 0.0
        %1200 = vmatprep.subr.mxu0 0.0
        %1201 = vmatpush1.msra.mxu0 0.0
        %1202 = vmatprep.subr.mxu0 0.0
        %1203 = vmatpush1.msra.mxu0 0.0
        %1204 = vmatprep.subr.mxu0 0.0
        %1205 = vmatpush1.msra.mxu0 0.0
        %1206 = vmatprep.subr.mxu0 0.0
        %1207 = vmatpush1.msra.mxu0 0.0
        %1208 = vmatprep.subr.mxu0 0.0
        %1209 = vmatpush1.msra.mxu0 0.0
        %1210 = vmatprep.subr.mxu0 0.0
        %1211 = vmatpush1.msra.mxu0 0.0
        %1212 = vmatprep.subr.mxu0 0.0
        %1213 = vmatpush1.msra.mxu0 0.0
        %1214 = vmatprep.subr.mxu0 0.0
        %1215 = vmatpush1.msra.mxu0 0.0
        %1216 = vmatprep.subr.mxu0 0.0
        %1217 = vmatpush1.msra.mxu0 0.0
        %1218 = vmatprep.subr.mxu0 0.0
        %1219 = vmatpush1.msra.mxu0 0.0
        %1220 = vmatprep.subr.mxu0 0.0
        %1221 = vmatpush1.msra.mxu0 0.0
        %1222 = vmatprep.subr.mxu0 0.0
        %1223 = vmatpush1.msra.mxu0 0.0
        %1224 = vmatprep.subr.mxu0 0.0
        %1225 = vmatpush1.msra.mxu0 0.0
        %1226 = vmatprep.subr.mxu0 0.0
        %1227 = vmatpush1.msra.mxu0 0.0
        %1228 = vmatprep.subr.mxu0 0.0
        %1229 = vmatpush1.msra.mxu0 0.0
        %1230 = vmatprep.subr.mxu0 0.0
        %1231 = vmatpush1.msra.mxu0 0.0
        %1232 = vmatprep.subr.mxu0 0.0
        %1233 = vmatpush1.msra.mxu0 0.0
        %1234 = vmatprep.subr.mxu0 0.0
        %1235 = vmatpush1.msra.mxu0 0.0
        %1236 = vmatprep.mubr.f32.mxu0 0.0
        %1237 = vmatmul.mubr.f32.gmra.mrb[0].mxu0 %v1002
        %v1238 = vpop.f32.mrb[0].mxu0
        %v1239 = vadd.f32 0.0, %v1238
        %v1240 = vpop.f32.mrb[0].mxu0
        %v1241 = vadd.f32 0.0, %v1240
        %1242 = vdwg.mxu0
        %1243 = vmatprep.subr.mxu0 %v1021
        %1244 = vmatpush1.msra.mxu0 %v1018
        %1245 = vmatprep.subr.mxu0 0.0
        %1246 = vmatpush1.msra.mxu0 0.0
        %1247 = vmatprep.subr.mxu0 0.0
        %1248 = vmatpush1.msra.mxu0 0.0
        %1249 = vmatprep.subr.mxu0 0.0
        %1250 = vmatpush1.msra.mxu0 0.0
        %1251 = vmatprep.subr.mxu0 0.0
        %1252 = vmatpush1.msra.mxu0 0.0
        %1253 = vmatprep.subr.mxu0 0.0
        %1254 = vmatpush1.msra.mxu0 0.0
        %1255 = vmatprep.subr.mxu0 0.0
        %1256 = vmatpush1.msra.mxu0 0.0
        %1257 = vmatprep.subr.mxu0 0.0
        %1258 = vmatpush1.msra.mxu0 0.0
        %1259 = vmatprep.subr.mxu0 0.0
        %1260 = vmatpush1.msra.mxu0 0.0
        %1261 = vmatprep.subr.mxu0 0.0
        %1262 = vmatpush1.msra.mxu0 0.0
        %1263 = vmatprep.subr.mxu0 0.0
        %1264 = vmatpush1.msra.mxu0 0.0
        %1265 = vmatprep.subr.mxu0 0.0
        %1266 = vmatpush1.msra.mxu0 0.0
        %1267 = vmatprep.subr.mxu0 0.0
        %1268 = vmatpush1.msra.mxu0 0.0
        %1269 = vmatprep.subr.mxu0 0.0
        %1270 = vmatpush1.msra.mxu0 0.0
        %1271 = vmatprep.subr.mxu0 0.0
        %1272 = vmatpush1.msra.mxu0 0.0
        %1273 = vmatprep.subr.mxu0 0.0
        %1274 = vmatpush1.msra.mxu0 0.0
        %1275 = vmatprep.subr.mxu0 0.0
        %1276 = vmatpush1.msra.mxu0 0.0
        %1277 = vmatprep.subr.mxu0 0.0
        %1278 = vmatpush1.msra.mxu0 0.0
        %1279 = vmatprep.subr.mxu0 0.0
        %1280 = vmatpush1.msra.mxu0 0.0
        %1281 = vmatprep.subr.mxu0 0.0
        %1282 = vmatpush1.msra.mxu0 0.0
        %1283 = vmatprep.subr.mxu0 0.0
        %1284 = vmatpush1.msra.mxu0 0.0
        %1285 = vmatprep.subr.mxu0 0.0
        %1286 = vmatpush1.msra.mxu0 0.0
        %1287 = vmatprep.subr.mxu0 0.0
        %1288 = vmatpush1.msra.mxu0 0.0
        %1289 = vmatprep.subr.mxu0 0.0
        %1290 = vmatpush1.msra.mxu0 0.0
        %1291 = vmatprep.subr.mxu0 0.0
        %1292 = vmatpush1.msra.mxu0 0.0
        %1293 = vmatprep.subr.mxu0 0.0
        %1294 = vmatpush1.msra.mxu0 0.0
        %1295 = vmatprep.subr.mxu0 0.0
        %1296 = vmatpush1.msra.mxu0 0.0
        %1297 = vmatprep.subr.mxu0 0.0
        %1298 = vmatpush1.msra.mxu0 0.0
        %1299 = vmatprep.subr.mxu0 0.0
        %1300 = vmatpush1.msra.mxu0 0.0
        %1301 = vmatprep.subr.mxu0 0.0
        %1302 = vmatpush1.msra.mxu0 0.0
        %1303 = vmatprep.subr.mxu0 0.0
        %1304 = vmatpush1.msra.mxu0 0.0
        %1305 = vmatprep.subr.mxu0 0.0
        %1306 = vmatpush1.msra.mxu0 0.0
        %1307 = vmatprep.mubr.f32.mxu0 0.0
        %1308 = vmatmul.mubr.f32.gmra.mrb[0].mxu0 %v1002
        %v1309 = vpop.f32.mrb[0].mxu0
        %v1310 = vadd.f32 0.0, %v1309
        %v1311 = vpop.f32.mrb[0].mxu0
        %v1312 = vadd.f32 0.0, %v1311
        %1313 = vdwg.mxu0
        %1314 = vmatprep.subr.mxu0 %v1027
        %1315 = vmatpush1.msra.mxu0 %v1024
        %1316 = vmatprep.subr.mxu0 0.0
        %1317 = vmatpush1.msra.mxu0 0.0
        %1318 = vmatprep.subr.mxu0 0.0
        %1319 = vmatpush1.msra.mxu0 0.0
        %1320 = vmatprep.subr.mxu0 0.0
        %1321 = vmatpush1.msra.mxu0 0.0
        %1322 = vmatprep.subr.mxu0 0.0
        %1323 = vmatpush1.msra.mxu0 0.0
        %1324 = vmatprep.subr.mxu0 0.0
        %1325 = vmatpush1.msra.mxu0 0.0
        %1326 = vmatprep.subr.mxu0 0.0
        %1327 = vmatpush1.msra.mxu0 0.0
        %1328 = vmatprep.subr.mxu0 0.0
        %1329 = vmatpush1.msra.mxu0 0.0
        %1330 = vmatprep.subr.mxu0 0.0
        %1331 = vmatpush1.msra.mxu0 0.0
        %1332 = vmatprep.subr.mxu0 0.0
        %1333 = vmatpush1.msra.mxu0 0.0
        %1334 = vmatprep.subr.mxu0 0.0
        %1335 = vmatpush1.msra.mxu0 0.0
        %1336 = vmatprep.subr.mxu0 0.0
        %1337 = vmatpush1.msra.mxu0 0.0
        %1338 = vmatprep.subr.mxu0 0.0
        %1339 = vmatpush1.msra.mxu0 0.0
        %1340 = vmatprep.subr.mxu0 0.0
        %1341 = vmatpush1.msra.mxu0 0.0
        %1342 = vmatprep.subr.mxu0 0.0
        %1343 = vmatpush1.msra.mxu0 0.0
        %1344 = vmatprep.subr.mxu0 0.0
        %1345 = vmatpush1.msra.mxu0 0.0
        %1346 = vmatprep.subr.mxu0 0.0
        %1347 = vmatpush1.msra.mxu0 0.0
        %1348 = vmatprep.subr.mxu0 0.0
        %1349 = vmatpush1.msra.mxu0 0.0
        %1350 = vmatprep.subr.mxu0 0.0
        %1351 = vmatpush1.msra.mxu0 0.0
        %1352 = vmatprep.subr.mxu0 0.0
        %1353 = vmatpush1.msra.mxu0 0.0
        %1354 = vmatprep.subr.mxu0 0.0
        %1355 = vmatpush1.msra.mxu0 0.0
        %1356 = vmatprep.subr.mxu0 0.0
        %1357 = vmatpush1.msra.mxu0 0.0
        %1358 = vmatprep.subr.mxu0 0.0
        %1359 = vmatpush1.msra.mxu0 0.0
        %1360 = vmatprep.subr.mxu0 0.0
        %1361 = vmatpush1.msra.mxu0 0.0
        %1362 = vmatprep.subr.mxu0 0.0
        %1363 = vmatpush1.msra.mxu0 0.0
        %1364 = vmatprep.subr.mxu0 0.0
        %1365 = vmatpush1.msra.mxu0 0.0
        %1366 = vmatprep.subr.mxu0 0.0
        %1367 = vmatpush1.msra.mxu0 0.0
        %1368 = vmatprep.subr.mxu0 0.0
        %1369 = vmatpush1.msra.mxu0 0.0
        %1370 = vmatprep.subr.mxu0 0.0
        %1371 = vmatpush1.msra.mxu0 0.0
        %1372 = vmatprep.subr.mxu0 0.0
        %1373 = vmatpush1.msra.mxu0 0.0
        %1374 = vmatprep.subr.mxu0 0.0
        %1375 = vmatpush1.msra.mxu0 0.0
        %1376 = vmatprep.subr.mxu0 0.0
        %1377 = vmatpush1.msra.mxu0 0.0
        %1378 = vmatprep.mubr.f32.mxu0 0.0
        %1379 = vmatmul.mubr.f32.gmra.mrb[0].mxu0 %v1002
        %v1380 = vpop.f32.mrb[0].mxu0
        %v1381 = vadd.f32 0.0, %v1380
        %v1382 = vpop.f32.mrb[0].mxu0
        %v1383 = vadd.f32 0.0, %v1382
        %1384 = vdwg.mxu0
        %1385 = vmatprep.subr.mxu0 %v1033
        %1386 = vmatpush1.msra.mxu0 %v1030
        %1387 = vmatprep.subr.mxu0 0.0
        %1388 = vmatpush1.msra.mxu0 0.0
        %1389 = vmatprep.subr.mxu0 0.0
        %1390 = vmatpush1.msra.mxu0 0.0
        %1391 = vmatprep.subr.mxu0 0.0
        %1392 = vmatpush1.msra.mxu0 0.0
        %1393 = vmatprep.subr.mxu0 0.0
        %1394 = vmatpush1.msra.mxu0 0.0
        %1395 = vmatprep.subr.mxu0 0.0
        %1396 = vmatpush1.msra.mxu0 0.0
        %1397 = vmatprep.subr.mxu0 0.0
        %1398 = vmatpush1.msra.mxu0 0.0
        %1399 = vmatprep.subr.mxu0 0.0
        %1400 = vmatpush1.msra.mxu0 0.0
        %1401 = vmatprep.subr.mxu0 0.0
        %1402 = vmatpush1.msra.mxu0 0.0
        %1403 = vmatprep.subr.mxu0 0.0
        %1404 = vmatpush1.msra.mxu0 0.0
        %1405 = vmatprep.subr.mxu0 0.0
        %1406 = vmatpush1.msra.mxu0 0.0
        %1407 = vmatprep.subr.mxu0 0.0
        %1408 = vmatpush1.msra.mxu0 0.0
        %1409 = vmatprep.subr.mxu0 0.0
        %1410 = vmatpush1.msra.mxu0 0.0
        %1411 = vmatprep.subr.mxu0 0.0
        %1412 = vmatpush1.msra.mxu0 0.0
        %1413 = vmatprep.subr.mxu0 0.0
        %1414 = vmatpush1.msra.mxu0 0.0
        %1415 = vmatprep.subr.mxu0 0.0
        %1416 = vmatpush1.msra.mxu0 0.0
        %1417 = vmatprep.subr.mxu0 0.0
        %1418 = vmatpush1.msra.mxu0 0.0
        %1419 = vmatprep.subr.mxu0 0.0
        %1420 = vmatpush1.msra.mxu0 0.0
        %1421 = vmatprep.subr.mxu0 0.0
        %1422 = vmatpush1.msra.mxu0 0.0
        %1423 = vmatprep.subr.mxu0 0.0
        %1424 = vmatpush1.msra.mxu0 0.0
        %1425 = vmatprep.subr.mxu0 0.0
        %1426 = vmatpush1.msra.mxu0 0.0
        %1427 = vmatprep.subr.mxu0 0.0
        %1428 = vmatpush1.msra.mxu0 0.0
        %1429 = vmatprep.subr.mxu0 0.0
        %1430 = vmatpush1.msra.mxu0 0.0
        %1431 = vmatprep.subr.mxu0 0.0
        %1432 = vmatpush1.msra.mxu0 0.0
        %1433 = vmatprep.subr.mxu0 0.0
        %1434 = vmatpush1.msra.mxu0 0.0
        %1435 = vmatprep.subr.mxu0 0.0
        %1436 = vmatpush1.msra.mxu0 0.0
        %1437 = vmatprep.subr.mxu0 0.0
        %1438 = vmatpush1.msra.mxu0 0.0
        %1439 = vmatprep.subr.mxu0 0.0
        %1440 = vmatpush1.msra.mxu0 0.0
        %1441 = vmatprep.subr.mxu0 0.0
        %1442 = vmatpush1.msra.mxu0 0.0
        %1443 = vmatprep.subr.mxu0 0.0
        %1444 = vmatpush1.msra.mxu0 0.0
        %1445 = vmatprep.subr.mxu0 0.0
        %1446 = vmatpush1.msra.mxu0 0.0
        %1447 = vmatprep.subr.mxu0 0.0
        %1448 = vmatpush1.msra.mxu0 0.0
        %1449 = vmatprep.mubr.f32.mxu0 0.0
        %1450 = vmatmul.mubr.f32.gmra.mrb[0].mxu0 %v1002
        %v1451 = vpop.f32.mrb[0].mxu0
        %v1452 = vadd.f32 0.0, %v1451
        %v1453 = vpop.f32.mrb[0].mxu0
        %v1454 = vadd.f32 0.0, %v1453
        %1455 = vdwg.mxu0
        %1456 = vmatprep.subr.mxu0 %v1039
        %1457 = vmatpush1.msra.mxu0 %v1036
        %1458 = vmatprep.subr.mxu0 0.0
        %1459 = vmatpush1.msra.mxu0 0.0
        %1460 = vmatprep.subr.mxu0 0.0
        %1461 = vmatpush1.msra.mxu0 0.0
        %1462 = vmatprep.subr.mxu0 0.0
        %1463 = vmatpush1.msra.mxu0 0.0
        %1464 = vmatprep.subr.mxu0 0.0
        %1465 = vmatpush1.msra.mxu0 0.0
        %1466 = vmatprep.subr.mxu0 0.0
        %1467 = vmatpush1.msra.mxu0 0.0
        %1468 = vmatprep.subr.mxu0 0.0
        %1469 = vmatpush1.msra.mxu0 0.0
        %1470 = vmatprep.subr.mxu0 0.0
        %1471 = vmatpush1.msra.mxu0 0.0
        %1472 = vmatprep.subr.mxu0 0.0
        %1473 = vmatpush1.msra.mxu0 0.0
        %1474 = vmatprep.subr.mxu0 0.0
        %1475 = vmatpush1.msra.mxu0 0.0
        %1476 = vmatprep.subr.mxu0 0.0
        %1477 = vmatpush1.msra.mxu0 0.0
        %1478 = vmatprep.subr.mxu0 0.0
        %1479 = vmatpush1.msra.mxu0 0.0
        %1480 = vmatprep.subr.mxu0 0.0
        %1481 = vmatpush1.msra.mxu0 0.0
        %1482 = vmatprep.subr.mxu0 0.0
        %1483 = vmatpush1.msra.mxu0 0.0
        %1484 = vmatprep.subr.mxu0 0.0
        %1485 = vmatpush1.msra.mxu0 0.0
        %1486 = vmatprep.subr.mxu0 0.0
        %1487 = vmatpush1.msra.mxu0 0.0
        %1488 = vmatprep.subr.mxu0 0.0
        %1489 = vmatpush1.msra.mxu0 0.0
        %1490 = vmatprep.subr.mxu0 0.0
        %1491 = vmatpush1.msra.mxu0 0.0
        %1492 = vmatprep.subr.mxu0 0.0
        %1493 = vmatpush1.msra.mxu0 0.0
        %1494 = vmatprep.subr.mxu0 0.0
        %1495 = vmatpush1.msra.mxu0 0.0
        %1496 = vmatprep.subr.mxu0 0.0
        %1497 = vmatpush1.msra.mxu0 0.0
        %1498 = vmatprep.subr.mxu0 0.0
        %1499 = vmatpush1.msra.mxu0 0.0
        %1500 = vmatprep.subr.mxu0 0.0
        %1501 = vmatpush1.msra.mxu0 0.0
        %1502 = vmatprep.subr.mxu0 0.0
        %1503 = vmatpush1.msra.mxu0 0.0
        %1504 = vmatprep.subr.mxu0 0.0
        %1505 = vmatpush1.msra.mxu0 0.0
        %1506 = vmatprep.subr.mxu0 0.0
        %1507 = vmatpush1.msra.mxu0 0.0
        %1508 = vmatprep.subr.mxu0 0.0
        %1509 = vmatpush1.msra.mxu0 0.0
        %1510 = vmatprep.subr.mxu0 0.0
        %1511 = vmatpush1.msra.mxu0 0.0
        %1512 = vmatprep.subr.mxu0 0.0
        %1513 = vmatpush1.msra.mxu0 0.0
        %1514 = vmatprep.subr.mxu0 0.0
        %1515 = vmatpush1.msra.mxu0 0.0
        %1516 = vmatprep.subr.mxu0 0.0
        %1517 = vmatpush1.msra.mxu0 0.0
        %1518 = vmatprep.subr.mxu0 0.0
        %1519 = vmatpush1.msra.mxu0 0.0
        %1520 = vmatprep.mubr.f32.mxu0 0.0
        %1521 = vmatmul.mubr.f32.gmra.mrb[0].mxu0 %v1002
        %v1522 = vpop.f32.mrb[0].mxu0
        %v1523 = vadd.f32 0.0, %v1522
        %v1524 = vpop.f32.mrb[0].mxu0
        %v1525 = vadd.f32 0.0, %v1524
        %1526 = vdwg.mxu0
        %1527 = vmatprep.subr.mxu0 %v1045
        %1528 = vmatpush1.msra.mxu0 %v1042
        %1529 = vmatprep.subr.mxu0 0.0
        %1530 = vmatpush1.msra.mxu0 0.0
        %1531 = vmatprep.subr.mxu0 0.0
        %1532 = vmatpush1.msra.mxu0 0.0
        %1533 = vmatprep.subr.mxu0 0.0
        %1534 = vmatpush1.msra.mxu0 0.0
        %1535 = vmatprep.subr.mxu0 0.0
        %1536 = vmatpush1.msra.mxu0 0.0
        %1537 = vmatprep.subr.mxu0 0.0
        %1538 = vmatpush1.msra.mxu0 0.0
        %1539 = vmatprep.subr.mxu0 0.0
        %1540 = vmatpush1.msra.mxu0 0.0
        %1541 = vmatprep.subr.mxu0 0.0
        %1542 = vmatpush1.msra.mxu0 0.0
        %1543 = vmatprep.subr.mxu0 0.0
        %1544 = vmatpush1.msra.mxu0 0.0
        %1545 = vmatprep.subr.mxu0 0.0
        %1546 = vmatpush1.msra.mxu0 0.0
        %1547 = vmatprep.subr.mxu0 0.0
        %1548 = vmatpush1.msra.mxu0 0.0
        %1549 = vmatprep.subr.mxu0 0.0
        %1550 = vmatpush1.msra.mxu0 0.0
        %1551 = vmatprep.subr.mxu0 0.0
        %1552 = vmatpush1.msra.mxu0 0.0
        %1553 = vmatprep.subr.mxu0 0.0
        %1554 = vmatpush1.msra.mxu0 0.0
        %1555 = vmatprep.subr.mxu0 0.0
        %1556 = vmatpush1.msra.mxu0 0.0
        %1557 = vmatprep.subr.mxu0 0.0
        %1558 = vmatpush1.msra.mxu0 0.0
        %1559 = vmatprep.subr.mxu0 0.0
        %1560 = vmatpush1.msra.mxu0 0.0
        %1561 = vmatprep.subr.mxu0 0.0
        %1562 = vmatpush1.msra.mxu0 0.0
        %1563 = vmatprep.subr.mxu0 0.0
        %1564 = vmatpush1.msra.mxu0 0.0
        %1565 = vmatprep.subr.mxu0 0.0
        %1566 = vmatpush1.msra.mxu0 0.0
        %1567 = vmatprep.subr.mxu0 0.0
        %1568 = vmatpush1.msra.mxu0 0.0
        %1569 = vmatprep.subr.mxu0 0.0
        %1570 = vmatpush1.msra.mxu0 0.0
        %1571 = vmatprep.subr.mxu0 0.0
        %1572 = vmatpush1.msra.mxu0 0.0
        %1573 = vmatprep.subr.mxu0 0.0
        %1574 = vmatpush1.msra.mxu0 0.0
        %1575 = vmatprep.subr.mxu0 0.0
        %1576 = vmatpush1.msra.mxu0 0.0
        %1577 = vmatprep.subr.mxu0 0.0
        %1578 = vmatpush1.msra.mxu0 0.0
        %1579 = vmatprep.subr.mxu0 0.0
        %1580 = vmatpush1.msra.mxu0 0.0
        %1581 = vmatprep.subr.mxu0 0.0
        %1582 = vmatpush1.msra.mxu0 0.0
        %1583 = vmatprep.subr.mxu0 0.0
        %1584 = vmatpush1.msra.mxu0 0.0
        %1585 = vmatprep.subr.mxu0 0.0
        %1586 = vmatpush1.msra.mxu0 0.0
        %1587 = vmatprep.subr.mxu0 0.0
        %1588 = vmatpush1.msra.mxu0 0.0
        %1589 = vmatprep.subr.mxu0 0.0
        %1590 = vmatpush1.msra.mxu0 0.0
        %1591 = vmatprep.mubr.f32.mxu0 0.0
        %1592 = vmatmul.mubr.f32.gmra.mrb[0].mxu0 %v1002
        %v1593 = vpop.f32.mrb[0].mxu0
        %v1594 = vadd.f32 0.0, %v1593
        %v1595 = vpop.f32.mrb[0].mxu0
        %v1596 = vadd.f32 0.0, %v1595
        %1597 = vdwg.mxu0
        %1598 = vmatprep.subr.mxu0 %v1051
        %1599 = vmatpush1.msra.mxu0 %v1048
        %1600 = vmatprep.subr.mxu0 0.0
        %1601 = vmatpush1.msra.mxu0 0.0
        %1602 = vmatprep.subr.mxu0 0.0
        %1603 = vmatpush1.msra.mxu0 0.0
        %1604 = vmatprep.subr.mxu0 0.0
        %1605 = vmatpush1.msra.mxu0 0.0
        %1606 = vmatprep.subr.mxu0 0.0
        %1607 = vmatpush1.msra.mxu0 0.0
        %1608 = vmatprep.subr.mxu0 0.0
        %1609 = vmatpush1.msra.mxu0 0.0
        %1610 = vmatprep.subr.mxu0 0.0
        %1611 = vmatpush1.msra.mxu0 0.0
        %1612 = vmatprep.subr.mxu0 0.0
        %1613 = vmatpush1.msra.mxu0 0.0
        %1614 = vmatprep.subr.mxu0 0.0
        %1615 = vmatpush1.msra.mxu0 0.0
        %1616 = vmatprep.subr.mxu0 0.0
        %1617 = vmatpush1.msra.mxu0 0.0
        %1618 = vmatprep.subr.mxu0 0.0
        %1619 = vmatpush1.msra.mxu0 0.0
        %1620 = vmatprep.subr.mxu0 0.0
        %1621 = vmatpush1.msra.mxu0 0.0
        %1622 = vmatprep.subr.mxu0 0.0
        %1623 = vmatpush1.msra.mxu0 0.0
        %1624 = vmatprep.subr.mxu0 0.0
        %1625 = vmatpush1.msra.mxu0 0.0
        %1626 = vmatprep.subr.mxu0 0.0
        %1627 = vmatpush1.msra.mxu0 0.0
        %1628 = vmatprep.subr.mxu0 0.0
        %1629 = vmatpush1.msra.mxu0 0.0
        %1630 = vmatprep.subr.mxu0 0.0
        %1631 = vmatpush1.msra.mxu0 0.0
        %1632 = vmatprep.subr.mxu0 0.0
        %1633 = vmatpush1.msra.mxu0 0.0
        %1634 = vmatprep.subr.mxu0 0.0
        %1635 = vmatpush1.msra.mxu0 0.0
        %1636 = vmatprep.subr.mxu0 0.0
        %1637 = vmatpush1.msra.mxu0 0.0
        %1638 = vmatprep.subr.mxu0 0.0
        %1639 = vmatpush1.msra.mxu0 0.0
        %1640 = vmatprep.subr.mxu0 0.0
        %1641 = vmatpush1.msra.mxu0 0.0
        %1642 = vmatprep.subr.mxu0 0.0
        %1643 = vmatpush1.msra.mxu0 0.0
        %1644 = vmatprep.subr.mxu0 0.0
        %1645 = vmatpush1.msra.mxu0 0.0
        %1646 = vmatprep.subr.mxu0 0.0
        %1647 = vmatpush1.msra.mxu0 0.0
        %1648 = vmatprep.subr.mxu0 0.0
        %1649 = vmatpush1.msra.mxu0 0.0
        %1650 = vmatprep.subr.mxu0 0.0
        %1651 = vmatpush1.msra.mxu0 0.0
        %1652 = vmatprep.subr.mxu0 0.0
        %1653 = vmatpush1.msra.mxu0 0.0
        %1654 = vmatprep.subr.mxu0 0.0
        %1655 = vmatpush1.msra.mxu0 0.0
        %1656 = vmatprep.subr.mxu0 0.0
        %1657 = vmatpush1.msra.mxu0 0.0
        %1658 = vmatprep.subr.mxu0 0.0
        %1659 = vmatpush1.msra.mxu0 0.0
        %1660 = vmatprep.subr.mxu0 0.0
        %1661 = vmatpush1.msra.mxu0 0.0
        %1662 = vmatprep.mubr.f32.mxu0 0.0
        %1663 = vmatmul.mubr.f32.gmra.mrb[0].mxu0 %v1002
        %v1664 = vpop.f32.mrb[0].mxu0
        %v1665 = vadd.f32 0.0, %v1664
        %v1666 = vpop.f32.mrb[0].mxu0
        %v1667 = vadd.f32 0.0, %v1666
        %1668 = vdwg.mxu0
        %1669 = vmatprep.subr.mxu0 %v1057
        %1670 = vmatpush1.msra.mxu0 %v1054
        %1671 = vmatprep.subr.mxu0 0.0
        %1672 = vmatpush1.msra.mxu0 0.0
        %1673 = vmatprep.subr.mxu0 0.0
        %1674 = vmatpush1.msra.mxu0 0.0
        %1675 = vmatprep.subr.mxu0 0.0
        %1676 = vmatpush1.msra.mxu0 0.0
        %1677 = vmatprep.subr.mxu0 0.0
        %1678 = vmatpush1.msra.mxu0 0.0
        %1679 = vmatprep.subr.mxu0 0.0
        %1680 = vmatpush1.msra.mxu0 0.0
        %1681 = vmatprep.subr.mxu0 0.0
        %1682 = vmatpush1.msra.mxu0 0.0
        %1683 = vmatprep.subr.mxu0 0.0
        %1684 = vmatpush1.msra.mxu0 0.0
        %1685 = vmatprep.subr.mxu0 0.0
        %1686 = vmatpush1.msra.mxu0 0.0
        %1687 = vmatprep.subr.mxu0 0.0
        %1688 = vmatpush1.msra.mxu0 0.0
        %1689 = vmatprep.subr.mxu0 0.0
        %1690 = vmatpush1.msra.mxu0 0.0
        %1691 = vmatprep.subr.mxu0 0.0
        %1692 = vmatpush1.msra.mxu0 0.0
        %1693 = vmatprep.subr.mxu0 0.0
        %1694 = vmatpush1.msra.mxu0 0.0
        %1695 = vmatprep.subr.mxu0 0.0
        %1696 = vmatpush1.msra.mxu0 0.0
        %1697 = vmatprep.subr.mxu0 0.0
        %1698 = vmatpush1.msra.mxu0 0.0
        %1699 = vmatprep.subr.mxu0 0.0
        %1700 = vmatpush1.msra.mxu0 0.0
        %1701 = vmatprep.subr.mxu0 0.0
        %1702 = vmatpush1.msra.mxu0 0.0
        %1703 = vmatprep.subr.mxu0 0.0
        %1704 = vmatpush1.msra.mxu0 0.0
        %1705 = vmatprep.subr.mxu0 0.0
        %1706 = vmatpush1.msra.mxu0 0.0
        %1707 = vmatprep.subr.mxu0 0.0
        %1708 = vmatpush1.msra.mxu0 0.0
        %1709 = vmatprep.subr.mxu0 0.0
        %1710 = vmatpush1.msra.mxu0 0.0
        %1711 = vmatprep.subr.mxu0 0.0
        %1712 = vmatpush1.msra.mxu0 0.0
        %1713 = vmatprep.subr.mxu0 0.0
        %1714 = vmatpush1.msra.mxu0 0.0
        %1715 = vmatprep.subr.mxu0 0.0
        %1716 = vmatpush1.msra.mxu0 0.0
        %1717 = vmatprep.subr.mxu0 0.0
        %1718 = vmatpush1.msra.mxu0 0.0
        %1719 = vmatprep.subr.mxu0 0.0
        %1720 = vmatpush1.msra.mxu0 0.0
        %1721 = vmatprep.subr.mxu0 0.0
        %1722 = vmatpush1.msra.mxu0 0.0
        %1723 = vmatprep.subr.mxu0 0.0
        %1724 = vmatpush1.msra.mxu0 0.0
        %1725 = vmatprep.subr.mxu0 0.0
        %1726 = vmatpush1.msra.mxu0 0.0
        %1727 = vmatprep.subr.mxu0 0.0
        %1728 = vmatpush1.msra.mxu0 0.0
        %1729 = vmatprep.subr.mxu0 0.0
        %1730 = vmatpush1.msra.mxu0 0.0
        %1731 = vmatprep.subr.mxu0 0.0
        %1732 = vmatpush1.msra.mxu0 0.0
        %1733 = vmatprep.mubr.f32.mxu0 0.0
        %1734 = vmatmul.mubr.f32.gmra.mrb[0].mxu0 %v1002
        %v1735 = vpop.f32.mrb[0].mxu0
        %v1736 = vadd.f32 0.0, %v1735
        %v1737 = vpop.f32.mrb[0].mxu0
        %v1738 = vadd.f32 0.0, %v1737
        %1739 = vdwg.mxu0
        %1740 = vmatprep.subr.mxu0 %v1063
        %1741 = vmatpush1.msra.mxu0 %v1060
        %1742 = vmatprep.subr.mxu0 0.0
        %1743 = vmatpush1.msra.mxu0 0.0
        %1744 = vmatprep.subr.mxu0 0.0
        %1745 = vmatpush1.msra.mxu0 0.0
        %1746 = vmatprep.subr.mxu0 0.0
        %1747 = vmatpush1.msra.mxu0 0.0
        %1748 = vmatprep.subr.mxu0 0.0
        %1749 = vmatpush1.msra.mxu0 0.0
        %1750 = vmatprep.subr.mxu0 0.0
        %1751 = vmatpush1.msra.mxu0 0.0
        %1752 = vmatprep.subr.mxu0 0.0
        %1753 = vmatpush1.msra.mxu0 0.0
        %1754 = vmatprep.subr.mxu0 0.0
        %1755 = vmatpush1.msra.mxu0 0.0
        %1756 = vmatprep.subr.mxu0 0.0
        %1757 = vmatpush1.msra.mxu0 0.0
        %1758 = vmatprep.subr.mxu0 0.0
        %1759 = vmatpush1.msra.mxu0 0.0
        %1760 = vmatprep.subr.mxu0 0.0
        %1761 = vmatpush1.msra.mxu0 0.0
        %1762 = vmatprep.subr.mxu0 0.0
        %1763 = vmatpush1.msra.mxu0 0.0
        %1764 = vmatprep.subr.mxu0 0.0
        %1765 = vmatpush1.msra.mxu0 0.0
        %1766 = vmatprep.subr.mxu0 0.0
        %1767 = vmatpush1.msra.mxu0 0.0
        %1768 = vmatprep.subr.mxu0 0.0
        %1769 = vmatpush1.msra.mxu0 0.0
        %1770 = vmatprep.subr.mxu0 0.0
        %1771 = vmatpush1.msra.mxu0 0.0
        %1772 = vmatprep.subr.mxu0 0.0
        %1773 = vmatpush1.msra.mxu0 0.0
        %1774 = vmatprep.subr.mxu0 0.0
        %1775 = vmatpush1.msra.mxu0 0.0
        %1776 = vmatprep.subr.mxu0 0.0
        %1777 = vmatpush1.msra.mxu0 0.0
        %1778 = vmatprep.subr.mxu0 0.0
        %1779 = vmatpush1.msra.mxu0 0.0
        %1780 = vmatprep.subr.mxu0 0.0
        %1781 = vmatpush1.msra.mxu0 0.0
        %1782 = vmatprep.subr.mxu0 0.0
        %1783 = vmatpush1.msra.mxu0 0.0
        %1784 = vmatprep.subr.mxu0 0.0
        %1785 = vmatpush1.msra.mxu0 0.0
        %1786 = vmatprep.subr.mxu0 0.0
        %1787 = vmatpush1.msra.mxu0 0.0
        %1788 = vmatprep.subr.mxu0 0.0
        %1789 = vmatpush1.msra.mxu0 0.0
        %1790 = vmatprep.subr.mxu0 0.0
        %1791 = vmatpush1.msra.mxu0 0.0
        %1792 = vmatprep.subr.mxu0 0.0
        %1793 = vmatpush1.msra.mxu0 0.0
        %1794 = vmatprep.subr.mxu0 0.0
        %1795 = vmatpush1.msra.mxu0 0.0
        %1796 = vmatprep.subr.mxu0 0.0
        %1797 = vmatpush1.msra.mxu0 0.0
        %1798 = vmatprep.subr.mxu0 0.0
        %1799 = vmatpush1.msra.mxu0 0.0
        %1800 = vmatprep.subr.mxu0 0.0
        %1801 = vmatpush1.msra.mxu0 0.0
        %1802 = vmatprep.subr.mxu0 0.0
        %1803 = vmatpush1.msra.mxu0 0.0
        %1804 = vmatprep.mubr.f32.mxu0 0.0
        %1805 = vmatmul.mubr.f32.gmra.mrb[0].mxu0 %v1002
        %v1806 = vpop.f32.mrb[0].mxu0
        %v1807 = vadd.f32 0.0, %v1806
        %v1808 = vpop.f32.mrb[0].mxu0
        %v1809 = vadd.f32 0.0, %v1808
        %1810 = vdwg.mxu0
        %1811 = vmatprep.subr.mxu0 %v1069
        %1812 = vmatpush1.msra.mxu0 %v1066
        %1813 = vmatprep.subr.mxu0 0.0
        %1814 = vmatpush1.msra.mxu0 0.0
        %1815 = vmatprep.subr.mxu0 0.0
        %1816 = vmatpush1.msra.mxu0 0.0
        %1817 = vmatprep.subr.mxu0 0.0
        %1818 = vmatpush1.msra.mxu0 0.0
        %1819 = vmatprep.subr.mxu0 0.0
        %1820 = vmatpush1.msra.mxu0 0.0
        %1821 = vmatprep.subr.mxu0 0.0
        %1822 = vmatpush1.msra.mxu0 0.0
        %1823 = vmatprep.subr.mxu0 0.0
        %1824 = vmatpush1.msra.mxu0 0.0
        %1825 = vmatprep.subr.mxu0 0.0
        %1826 = vmatpush1.msra.mxu0 0.0
        %1827 = vmatprep.subr.mxu0 0.0
        %1828 = vmatpush1.msra.mxu0 0.0
        %1829 = vmatprep.subr.mxu0 0.0
        %1830 = vmatpush1.msra.mxu0 0.0
        %1831 = vmatprep.subr.mxu0 0.0
        %1832 = vmatpush1.msra.mxu0 0.0
        %1833 = vmatprep.subr.mxu0 0.0
        %1834 = vmatpush1.msra.mxu0 0.0
        %1835 = vmatprep.subr.mxu0 0.0
        %1836 = vmatpush1.msra.mxu0 0.0
        %1837 = vmatprep.subr.mxu0 0.0
        %1838 = vmatpush1.msra.mxu0 0.0
        %1839 = vmatprep.subr.mxu0 0.0
        %1840 = vmatpush1.msra.mxu0 0.0
        %1841 = vmatprep.subr.mxu0 0.0
        %1842 = vmatpush1.msra.mxu0 0.0
        %1843 = vmatprep.subr.mxu0 0.0
        %1844 = vmatpush1.msra.mxu0 0.0
        %1845 = vmatprep.subr.mxu0 0.0
        %1846 = vmatpush1.msra.mxu0 0.0
        %1847 = vmatprep.subr.mxu0 0.0
        %1848 = vmatpush1.msra.mxu0 0.0
        %1849 = vmatprep.subr.mxu0 0.0
        %1850 = vmatpush1.msra.mxu0 0.0
        %1851 = vmatprep.subr.mxu0 0.0
        %1852 = vmatpush1.msra.mxu0 0.0
        %1853 = vmatprep.subr.mxu0 0.0
        %1854 = vmatpush1.msra.mxu0 0.0
        %1855 = vmatprep.subr.mxu0 0.0
        %1856 = vmatpush1.msra.mxu0 0.0
        %1857 = vmatprep.subr.mxu0 0.0
        %1858 = vmatpush1.msra.mxu0 0.0
        %1859 = vmatprep.subr.mxu0 0.0
        %1860 = vmatpush1.msra.mxu0 0.0
        %1861 = vmatprep.subr.mxu0 0.0
        %1862 = vmatpush1.msra.mxu0 0.0
        %1863 = vmatprep.subr.mxu0 0.0
        %1864 = vmatpush1.msra.mxu0 0.0
        %1865 = vmatprep.subr.mxu0 0.0
        %1866 = vmatpush1.msra.mxu0 0.0
        %1867 = vmatprep.subr.mxu0 0.0
        %1868 = vmatpush1.msra.mxu0 0.0
        %1869 = vmatprep.subr.mxu0 0.0
        %1870 = vmatpush1.msra.mxu0 0.0
        %1871 = vmatprep.subr.mxu0 0.0
        %1872 = vmatpush1.msra.mxu0 0.0
        %1873 = vmatprep.subr.mxu0 0.0
        %1874 = vmatpush1.msra.mxu0 0.0
        %1875 = vmatprep.mubr.f32.mxu0 0.0
        %1876 = vmatmul.mubr.f32.gmra.mrb[0].mxu0 %v1002
        %v1877 = vpop.f32.mrb[0].mxu0
        %v1878 = vadd.f32 0.0, %v1877
        %v1879 = vpop.f32.mrb[0].mxu0
        %v1880 = vadd.f32 0.0, %v1879
        %1881 = vdwg.mxu0
        %1882 = vmatprep.subr.mxu0 %v1075
        %1883 = vmatpush1.msra.mxu0 %v1072
        %1884 = vmatprep.subr.mxu0 0.0
        %1885 = vmatpush1.msra.mxu0 0.0
        %1886 = vmatprep.subr.mxu0 0.0
        %1887 = vmatpush1.msra.mxu0 0.0
        %1888 = vmatprep.subr.mxu0 0.0
        %1889 = vmatpush1.msra.mxu0 0.0
        %1890 = vmatprep.subr.mxu0 0.0
        %1891 = vmatpush1.msra.mxu0 0.0
        %1892 = vmatprep.subr.mxu0 0.0
        %1893 = vmatpush1.msra.mxu0 0.0
        %1894 = vmatprep.subr.mxu0 0.0
        %1895 = vmatpush1.msra.mxu0 0.0
        %1896 = vmatprep.subr.mxu0 0.0
        %1897 = vmatpush1.msra.mxu0 0.0
        %1898 = vmatprep.subr.mxu0 0.0
        %1899 = vmatpush1.msra.mxu0 0.0
        %1900 = vmatprep.subr.mxu0 0.0
        %1901 = vmatpush1.msra.mxu0 0.0
        %1902 = vmatprep.subr.mxu0 0.0
        %1903 = vmatpush1.msra.mxu0 0.0
        %1904 = vmatprep.subr.mxu0 0.0
        %1905 = vmatpush1.msra.mxu0 0.0
        %1906 = vmatprep.subr.mxu0 0.0
        %1907 = vmatpush1.msra.mxu0 0.0
        %1908 = vmatprep.subr.mxu0 0.0
        %1909 = vmatpush1.msra.mxu0 0.0
        %1910 = vmatprep.subr.mxu0 0.0
        %1911 = vmatpush1.msra.mxu0 0.0
        %1912 = vmatprep.subr.mxu0 0.0
        %1913 = vmatpush1.msra.mxu0 0.0
        %1914 = vmatprep.subr.mxu0 0.0
        %1915 = vmatpush1.msra.mxu0 0.0
        %1916 = vmatprep.subr.mxu0 0.0
        %1917 = vmatpush1.msra.mxu0 0.0
        %1918 = vmatprep.subr.mxu0 0.0
        %1919 = vmatpush1.msra.mxu0 0.0
        %1920 = vmatprep.subr.mxu0 0.0
        %1921 = vmatpush1.msra.mxu0 0.0
        %1922 = vmatprep.subr.mxu0 0.0
        %1923 = vmatpush1.msra.mxu0 0.0
        %1924 = vmatprep.subr.mxu0 0.0
        %1925 = vmatpush1.msra.mxu0 0.0
        %1926 = vmatprep.subr.mxu0 0.0
        %1927 = vmatpush1.msra.mxu0 0.0
        %1928 = vmatprep.subr.mxu0 0.0
        %1929 = vmatpush1.msra.mxu0 0.0
        %1930 = vmatprep.subr.mxu0 0.0
        %1931 = vmatpush1.msra.mxu0 0.0
        %1932 = vmatprep.subr.mxu0 0.0
        %1933 = vmatpush1.msra.mxu0 0.0
        %1934 = vmatprep.subr.mxu0 0.0
        %1935 = vmatpush1.msra.mxu0 0.0
        %1936 = vmatprep.subr.mxu0 0.0
        %1937 = vmatpush1.msra.mxu0 0.0
        %1938 = vmatprep.subr.mxu0 0.0
        %1939 = vmatpush1.msra.mxu0 0.0
        %1940 = vmatprep.subr.mxu0 0.0
        %1941 = vmatpush1.msra.mxu0 0.0
        %1942 = vmatprep.subr.mxu0 0.0
        %1943 = vmatpush1.msra.mxu0 0.0
        %1944 = vmatprep.subr.mxu0 0.0
        %1945 = vmatpush1.msra.mxu0 0.0
        %1946 = vmatprep.mubr.f32.mxu0 0.0
        %1947 = vmatmul.mubr.f32.gmra.mrb[0].mxu0 %v1002
        %v1948 = vpop.f32.mrb[0].mxu0
        %v1949 = vadd.f32 0.0, %v1948
        %v1950 = vpop.f32.mrb[0].mxu0
        %v1951 = vadd.f32 0.0, %v1950
        %1952 = vdwg.mxu0
        %1953 = vmatprep.subr.mxu0 %v1081
        %1954 = vmatpush1.msra.mxu0 %v1078
        %1955 = vmatprep.subr.mxu0 0.0
        %1956 = vmatpush1.msra.mxu0 0.0
        %1957 = vmatprep.subr.mxu0 0.0
        %1958 = vmatpush1.msra.mxu0 0.0
        %1959 = vmatprep.subr.mxu0 0.0
        %1960 = vmatpush1.msra.mxu0 0.0
        %1961 = vmatprep.subr.mxu0 0.0
        %1962 = vmatpush1.msra.mxu0 0.0
        %1963 = vmatprep.subr.mxu0 0.0
        %1964 = vmatpush1.msra.mxu0 0.0
        %1965 = vmatprep.subr.mxu0 0.0
        %1966 = vmatpush1.msra.mxu0 0.0
        %1967 = vmatprep.subr.mxu0 0.0
        %1968 = vmatpush1.msra.mxu0 0.0
        %1969 = vmatprep.subr.mxu0 0.0
        %1970 = vmatpush1.msra.mxu0 0.0
        %1971 = vmatprep.subr.mxu0 0.0
        %1972 = vmatpush1.msra.mxu0 0.0
        %1973 = vmatprep.subr.mxu0 0.0
        %1974 = vmatpush1.msra.mxu0 0.0
        %1975 = vmatprep.subr.mxu0 0.0
        %1976 = vmatpush1.msra.mxu0 0.0
        %1977 = vmatprep.subr.mxu0 0.0
        %1978 = vmatpush1.msra.mxu0 0.0
        %1979 = vmatprep.subr.mxu0 0.0
        %1980 = vmatpush1.msra.mxu0 0.0
        %1981 = vmatprep.subr.mxu0 0.0
        %1982 = vmatpush1.msra.mxu0 0.0
        %1983 = vmatprep.subr.mxu0 0.0
        %1984 = vmatpush1.msra.mxu0 0.0
        %1985 = vmatprep.subr.mxu0 0.0
        %1986 = vmatpush1.msra.mxu0 0.0
        %1987 = vmatprep.subr.mxu0 0.0
        %1988 = vmatpush1.msra.mxu0 0.0
        %1989 = vmatprep.subr.mxu0 0.0
        %1990 = vmatpush1.msra.mxu0 0.0
        %1991 = vmatprep.subr.mxu0 0.0
        %1992 = vmatpush1.msra.mxu0 0.0
        %1993 = vmatprep.subr.mxu0 0.0
        %1994 = vmatpush1.msra.mxu0 0.0
        %1995 = vmatprep.subr.mxu0 0.0
        %1996 = vmatpush1.msra.mxu0 0.0
        %1997 = vmatprep.subr.mxu0 0.0
        %1998 = vmatpush1.msra.mxu0 0.0
        %1999 = vmatprep.subr.mxu0 0.0
        %2000 = vmatpush1.msra.mxu0 0.0
        %2001 = vmatprep.subr.mxu0 0.0
        %2002 = vmatpush1.msra.mxu0 0.0
        %2003 = vmatprep.subr.mxu0 0.0
        %2004 = vmatpush1.msra.mxu0 0.0
        %2005 = vmatprep.subr.mxu0 0.0
        %2006 = vmatpush1.msra.mxu0 0.0
        %2007 = vmatprep.subr.mxu0 0.0
        %2008 = vmatpush1.msra.mxu0 0.0
        %2009 = vmatprep.subr.mxu0 0.0
        %2010 = vmatpush1.msra.mxu0 0.0
        %2011 = vmatprep.subr.mxu0 0.0
        %2012 = vmatpush1.msra.mxu0 0.0
        %2013 = vmatprep.subr.mxu0 0.0
        %2014 = vmatpush1.msra.mxu0 0.0
        %2015 = vmatprep.subr.mxu0 0.0
        %2016 = vmatpush1.msra.mxu0 0.0
        %2017 = vmatprep.mubr.f32.mxu0 0.0
        %2018 = vmatmul.mubr.f32.gmra.mrb[0].mxu0 %v1002
        %v2019 = vpop.f32.mrb[0].mxu0
        %v2020 = vadd.f32 0.0, %v2019
        %v2021 = vpop.f32.mrb[0].mxu0
        %v2022 = vadd.f32 0.0, %v2021
        %2023 = vdwg.mxu0
        %2024 = vmatprep.subr.mxu0 %v1087
        %2025 = vmatpush1.msra.mxu0 %v1084
        %2026 = vmatprep.subr.mxu0 0.0
        %2027 = vmatpush1.msra.mxu0 0.0
        %2028 = vmatprep.subr.mxu0 0.0
        %2029 = vmatpush1.msra.mxu0 0.0
        %2030 = vmatprep.subr.mxu0 0.0
        %2031 = vmatpush1.msra.mxu0 0.0
        %2032 = vmatprep.subr.mxu0 0.0
        %2033 = vmatpush1.msra.mxu0 0.0
        %2034 = vmatprep.subr.mxu0 0.0
        %2035 = vmatpush1.msra.mxu0 0.0
        %2036 = vmatprep.subr.mxu0 0.0
        %2037 = vmatpush1.msra.mxu0 0.0
        %2038 = vmatprep.subr.mxu0 0.0
        %2039 = vmatpush1.msra.mxu0 0.0
        %2040 = vmatprep.subr.mxu0 0.0
        %2041 = vmatpush1.msra.mxu0 0.0
        %2042 = vmatprep.subr.mxu0 0.0
        %2043 = vmatpush1.msra.mxu0 0.0
        %2044 = vmatprep.subr.mxu0 0.0
        %2045 = vmatpush1.msra.mxu0 0.0
        %2046 = vmatprep.subr.mxu0 0.0
        %2047 = vmatpush1.msra.mxu0 0.0
        %2048 = vmatprep.subr.mxu0 0.0
        %2049 = vmatpush1.msra.mxu0 0.0
        %2050 = vmatprep.subr.mxu0 0.0
        %2051 = vmatpush1.msra.mxu0 0.0
        %2052 = vmatprep.subr.mxu0 0.0
        %2053 = vmatpush1.msra.mxu0 0.0
        %2054 = vmatprep.subr.mxu0 0.0
        %2055 = vmatpush1.msra.mxu0 0.0
        %2056 = vmatprep.subr.mxu0 0.0
        %2057 = vmatpush1.msra.mxu0 0.0
        %2058 = vmatprep.subr.mxu0 0.0
        %2059 = vmatpush1.msra.mxu0 0.0
        %2060 = vmatprep.subr.mxu0 0.0
        %2061 = vmatpush1.msra.mxu0 0.0
        %2062 = vmatprep.subr.mxu0 0.0
        %2063 = vmatpush1.msra.mxu0 0.0
        %2064 = vmatprep.subr.mxu0 0.0
        %2065 = vmatpush1.msra.mxu0 0.0
        %2066 = vmatprep.subr.mxu0 0.0
        %2067 = vmatpush1.msra.mxu0 0.0
        %2068 = vmatprep.subr.mxu0 0.0
        %2069 = vmatpush1.msra.mxu0 0.0
        %2070 = vmatprep.subr.mxu0 0.0
        %2071 = vmatpush1.msra.mxu0 0.0
        %2072 = vmatprep.subr.mxu0 0.0
        %2073 = vmatpush1.msra.mxu0 0.0
        %2074 = vmatprep.subr.mxu0 0.0
        %2075 = vmatpush1.msra.mxu0 0.0
        %2076 = vmatprep.subr.mxu0 0.0
        %2077 = vmatpush1.msra.mxu0 0.0
        %2078 = vmatprep.subr.mxu0 0.0
        %2079 = vmatpush1.msra.mxu0 0.0
        %2080 = vmatprep.subr.mxu0 0.0
        %2081 = vmatpush1.msra.mxu0 0.0
        %2082 = vmatprep.subr.mxu0 0.0
        %2083 = vmatpush1.msra.mxu0 0.0
        %2084 = vmatprep.subr.mxu0 0.0
        %2085 = vmatpush1.msra.mxu0 0.0
        %2086 = vmatprep.subr.mxu0 0.0
        %2087 = vmatpush1.msra.mxu0 0.0
        %2088 = vmatprep.mubr.f32.mxu0 0.0
        %2089 = vmatmul.mubr.f32.gmra.mrb[0].mxu0 %v1002
        %v2090 = vpop.f32.mrb[0].mxu0
        %v2091 = vadd.f32 0.0, %v2090
        %v2092 = vpop.f32.mrb[0].mxu0
        %v2093 = vadd.f32 0.0, %v2092
        %2094 = vdwg.mxu0
        %2095 = vmatprep.subr.mxu0 %v1093
        %2096 = vmatpush1.msra.mxu0 %v1090
        %2097 = vmatprep.subr.mxu0 0.0
        %2098 = vmatpush1.msra.mxu0 0.0
        %2099 = vmatprep.subr.mxu0 0.0
        %2100 = vmatpush1.msra.mxu0 0.0
        %2101 = vmatprep.subr.mxu0 0.0
        %2102 = vmatpush1.msra.mxu0 0.0
        %2103 = vmatprep.subr.mxu0 0.0
        %2104 = vmatpush1.msra.mxu0 0.0
        %2105 = vmatprep.subr.mxu0 0.0
        %2106 = vmatpush1.msra.mxu0 0.0
        %2107 = vmatprep.subr.mxu0 0.0
        %2108 = vmatpush1.msra.mxu0 0.0
        %2109 = vmatprep.subr.mxu0 0.0
        %2110 = vmatpush1.msra.mxu0 0.0
        %2111 = vmatprep.subr.mxu0 0.0
        %2112 = vmatpush1.msra.mxu0 0.0
        %2113 = vmatprep.subr.mxu0 0.0
        %2114 = vmatpush1.msra.mxu0 0.0
        %2115 = vmatprep.subr.mxu0 0.0
        %2116 = vmatpush1.msra.mxu0 0.0
        %2117 = vmatprep.subr.mxu0 0.0
        %2118 = vmatpush1.msra.mxu0 0.0
        %2119 = vmatprep.subr.mxu0 0.0
        %2120 = vmatpush1.msra.mxu0 0.0
        %2121 = vmatprep.subr.mxu0 0.0
        %2122 = vmatpush1.msra.mxu0 0.0
        %2123 = vmatprep.subr.mxu0 0.0
        %2124 = vmatpush1.msra.mxu0 0.0
        %2125 = vmatprep.subr.mxu0 0.0
        %2126 = vmatpush1.msra.mxu0 0.0
        %2127 = vmatprep.subr.mxu0 0.0
        %2128 = vmatpush1.msra.mxu0 0.0
        %2129 = vmatprep.subr.mxu0 0.0
        %2130 = vmatpush1.msra.mxu0 0.0
        %2131 = vmatprep.subr.mxu0 0.0
        %2132 = vmatpush1.msra.mxu0 0.0
        %2133 = vmatprep.subr.mxu0 0.0
        %2134 = vmatpush1.msra.mxu0 0.0
        %2135 = vmatprep.subr.mxu0 0.0
        %2136 = vmatpush1.msra.mxu0 0.0
        %2137 = vmatprep.subr.mxu0 0.0
        %2138 = vmatpush1.msra.mxu0 0.0
        %2139 = vmatprep.subr.mxu0 0.0
        %2140 = vmatpush1.msra.mxu0 0.0
        %2141 = vmatprep.subr.mxu0 0.0
        %2142 = vmatpush1.msra.mxu0 0.0
        %2143 = vmatprep.subr.mxu0 0.0
        %2144 = vmatpush1.msra.mxu0 0.0
        %2145 = vmatprep.subr.mxu0 0.0
        %2146 = vmatpush1.msra.mxu0 0.0
        %2147 = vmatprep.subr.mxu0 0.0
        %2148 = vmatpush1.msra.mxu0 0.0
        %2149 = vmatprep.subr.mxu0 0.0
        %2150 = vmatpush1.msra.mxu0 0.0
        %2151 = vmatprep.subr.mxu0 0.0
        %2152 = vmatpush1.msra.mxu0 0.0
        %2153 = vmatprep.subr.mxu0 0.0
        %2154 = vmatpush1.msra.mxu0 0.0
        %2155 = vmatprep.subr.mxu0 0.0
        %2156 = vmatpush1.msra.mxu0 0.0
        %2157 = vmatprep.subr.mxu0 0.0
        %2158 = vmatpush1.msra.mxu0 0.0
        %2159 = vmatprep.mubr.f32.mxu0 0.0
        %2160 = vmatmul.mubr.f32.gmra.mrb[0].mxu0 %v1002
        %v2161 = vpop.f32.mrb[0].mxu0
        %v2162 = vadd.f32 0.0, %v2161
        %v2163 = vpop.f32.mrb[0].mxu0
        %v2164 = vadd.f32 0.0, %v2163
        %2165 = vdwg.mxu0
        %2166 = vmatprep.subr.mxu0 %v1099
        %2167 = vmatpush1.msra.mxu0 %v1096
        %2168 = vmatprep.subr.mxu0 0.0
        %2169 = vmatpush1.msra.mxu0 0.0
        %2170 = vmatprep.subr.mxu0 0.0
        %2171 = vmatpush1.msra.mxu0 0.0
        %2172 = vmatprep.subr.mxu0 0.0
        %2173 = vmatpush1.msra.mxu0 0.0
        %2174 = vmatprep.subr.mxu0 0.0
        %2175 = vmatpush1.msra.mxu0 0.0
        %2176 = vmatprep.subr.mxu0 0.0
        %2177 = vmatpush1.msra.mxu0 0.0
        %2178 = vmatprep.subr.mxu0 0.0
        %2179 = vmatpush1.msra.mxu0 0.0
        %2180 = vmatprep.subr.mxu0 0.0
        %2181 = vmatpush1.msra.mxu0 0.0
        %2182 = vmatprep.subr.mxu0 0.0
        %2183 = vmatpush1.msra.mxu0 0.0
        %2184 = vmatprep.subr.mxu0 0.0
        %2185 = vmatpush1.msra.mxu0 0.0
        %2186 = vmatprep.subr.mxu0 0.0
        %2187 = vmatpush1.msra.mxu0 0.0
        %2188 = vmatprep.subr.mxu0 0.0
        %2189 = vmatpush1.msra.mxu0 0.0
        %2190 = vmatprep.subr.mxu0 0.0
        %2191 = vmatpush1.msra.mxu0 0.0
        %2192 = vmatprep.subr.mxu0 0.0
        %2193 = vmatpush1.msra.mxu0 0.0
        %2194 = vmatprep.subr.mxu0 0.0
        %2195 = vmatpush1.msra.mxu0 0.0
        %2196 = vmatprep.subr.mxu0 0.0
        %2197 = vmatpush1.msra.mxu0 0.0
        %2198 = vmatprep.subr.mxu0 0.0
        %2199 = vmatpush1.msra.mxu0 0.0
        %2200 = vmatprep.subr.mxu0 0.0
        %2201 = vmatpush1.msra.mxu0 0.0
        %2202 = vmatprep.subr.mxu0 0.0
        %2203 = vmatpush1.msra.mxu0 0.0
        %2204 = vmatprep.subr.mxu0 0.0
        %2205 = vmatpush1.msra.mxu0 0.0
        %2206 = vmatprep.subr.mxu0 0.0
        %2207 = vmatpush1.msra.mxu0 0.0
        %2208 = vmatprep.subr.mxu0 0.0
        %2209 = vmatpush1.msra.mxu0 0.0
        %2210 = vmatprep.subr.mxu0 0.0
        %2211 = vmatpush1.msra.mxu0 0.0
        %2212 = vmatprep.subr.mxu0 0.0
        %2213 = vmatpush1.msra.mxu0 0.0
        %2214 = vmatprep.subr.mxu0 0.0
        %2215 = vmatpush1.msra.mxu0 0.0
        %2216 = vmatprep.subr.mxu0 0.0
        %2217 = vmatpush1.msra.mxu0 0.0
        %2218 = vmatprep.subr.mxu0 0.0
        %2219 = vmatpush1.msra.mxu0 0.0
        %2220 = vmatprep.subr.mxu0 0.0
        %2221 = vmatpush1.msra.mxu0 0.0
        %2222 = vmatprep.subr.mxu0 0.0
        %2223 = vmatpush1.msra.mxu0 0.0
        %2224 = vmatprep.subr.mxu0 0.0
        %2225 = vmatpush1.msra.mxu0 0.0
        %2226 = vmatprep.subr.mxu0 0.0
        %2227 = vmatpush1.msra.mxu0 0.0
        %2228 = vmatprep.subr.mxu0 0.0
        %2229 = vmatpush1.msra.mxu0 0.0
        %2230 = vmatprep.mubr.f32.mxu0 0.0
        %2231 = vmatmul.mubr.f32.gmra.mrb[0].mxu0 %v1002
        %v2232 = vpop.f32.mrb[0].mxu0
        %v2233 = vadd.f32 0.0, %v2232
        %v2234 = vpop.f32.mrb[0].mxu0
        %v2235 = vadd.f32 0.0, %v2234
        %2236 = vdwg.mxu0
        %v2238 = vsel %vm1000, %v709, 0
        %v2240 = vsel %vm1004, %v275, 0
        %v2242 = vsel %vm1004, %v758, 0
        %v2244 = vsel %vm1004, %v276, 0
        %v2246 = vsel %vm1004, %v759, 0
        %v2248 = vsel %vm1004, %v277, 0
        %v2250 = vsel %vm1004, %v760, 0
        %v2252 = vsel %vm1004, %v278, 0
        %v2254 = vsel %vm1004, %v761, 0
        %v2256 = vsel %vm1004, %v279, 0
        %v2258 = vsel %vm1004, %v762, 0
        %v2260 = vsel %vm1004, %v280, 0
        %v2262 = vsel %vm1004, %v763, 0
        %v2264 = vsel %vm1004, %v281, 0
        %v2266 = vsel %vm1004, %v764, 0
        %v2268 = vsel %vm1004, %v282, 0
        %v2270 = vsel %vm1004, %v765, 0
        %v2272 = vsel %vm1004, %v283, 0
        %v2274 = vsel %vm1004, %v766, 0
        %v2276 = vsel %vm1004, %v284, 0
        %v2278 = vsel %vm1004, %v767, 0
        %v2280 = vsel %vm1004, %v285, 0
        %v2282 = vsel %vm1004, %v768, 0
        %v2284 = vsel %vm1004, %v286, 0
        %v2286 = vsel %vm1004, %v769, 0
        %v2288 = vsel %vm1004, %v287, 0
        %v2290 = vsel %vm1004, %v770, 0
        %v2292 = vsel %vm1004, %v288, 0
        %v2294 = vsel %vm1004, %v771, 0
        %v2296 = vsel %vm1004, %v289, 0
        %v2298 = vsel %vm1004, %v772, 0
        %v2300 = vsel %vm1004, %v290, 0
        %v2302 = vsel %vm1004, %v773, 0
        %2304 = vmatprep.subr.mxu0 %v2242
        %2305 = vmatpush1.msra.mxu0 %v2240
        %2306 = vmatprep.subr.mxu0 0.0
        %2307 = vmatpush1.msra.mxu0 0.0
        %2308 = vmatprep.subr.mxu0 0.0
        %2309 = vmatpush1.msra.mxu0 0.0
        %2310 = vmatprep.subr.mxu0 0.0
        %2311 = vmatpush1.msra.mxu0 0.0
        %2312 = vmatprep.subr.mxu0 0.0
        %2313 = vmatpush1.msra.mxu0 0.0
        %2314 = vmatprep.subr.mxu0 0.0
        %2315 = vmatpush1.msra.mxu0 0.0
        %2316 = vmatprep.subr.mxu0 0.0
        %2317 = vmatpush1.msra.mxu0 0.0
        %2318 = vmatprep.subr.mxu0 0.0
        %2319 = vmatpush1.msra.mxu0 0.0
        %2320 = vmatprep.subr.mxu0 0.0
        %2321 = vmatpush1.msra.mxu0 0.0
        %2322 = vmatprep.subr.mxu0 0.0
        %2323 = vmatpush1.msra.mxu0 0.0
        %2324 = vmatprep.subr.mxu0 0.0
        %2325 = vmatpush1.msra.mxu0 0.0
        %2326 = vmatprep.subr.mxu0 0.0
        %2327 = vmatpush1.msra.mxu0 0.0
        %2328 = vmatprep.subr.mxu0 0.0
        %2329 = vmatpush1.msra.mxu0 0.0
        %2330 = vmatprep.subr.mxu0 0.0
        %2331 = vmatpush1.msra.mxu0 0.0
        %2332 = vmatprep.subr.mxu0 0.0
        %2333 = vmatpush1.msra.mxu0 0.0
        %2334 = vmatprep.subr.mxu0 0.0
        %2335 = vmatpush1.msra.mxu0 0.0
        %2336 = vmatprep.subr.mxu0 0.0
        %2337 = vmatpush1.msra.mxu0 0.0
        %2338 = vmatprep.subr.mxu0 0.0
        %2339 = vmatpush1.msra.mxu0 0.0
        %2340 = vmatprep.subr.mxu0 0.0
        %2341 = vmatpush1.msra.mxu0 0.0
        %2342 = vmatprep.subr.mxu0 0.0
        %2343 = vmatpush1.msra.mxu0 0.0
        %2344 = vmatprep.subr.mxu0 0.0
        %2345 = vmatpush1.msra.mxu0 0.0
        %2346 = vmatprep.subr.mxu0 0.0
        %2347 = vmatpush1.msra.mxu0 0.0
        %2348 = vmatprep.subr.mxu0 0.0
        %2349 = vmatpush1.msra.mxu0 0.0
        %2350 = vmatprep.subr.mxu0 0.0
        %2351 = vmatpush1.msra.mxu0 0.0
        %2352 = vmatprep.subr.mxu0 0.0
        %2353 = vmatpush1.msra.mxu0 0.0
        %2354 = vmatprep.subr.mxu0 0.0
        %2355 = vmatpush1.msra.mxu0 0.0
        %2356 = vmatprep.subr.mxu0 0.0
        %2357 = vmatpush1.msra.mxu0 0.0
        %2358 = vmatprep.subr.mxu0 0.0
        %2359 = vmatpush1.msra.mxu0 0.0
        %2360 = vmatprep.subr.mxu0 0.0
        %2361 = vmatpush1.msra.mxu0 0.0
        %2362 = vmatprep.subr.mxu0 0.0
        %2363 = vmatpush1.msra.mxu0 0.0
        %2364 = vmatprep.subr.mxu0 0.0
        %2365 = vmatpush1.msra.mxu0 0.0
        %2366 = vmatprep.subr.mxu0 0.0
        %2367 = vmatpush1.msra.mxu0 0.0
        %2368 = vmatprep.mubr.f32.mxu0 0.0
        %2369 = vmatmul.mubr.f32.gmra.mrb[0].mxu0 %v2238
        %v2370 = vpop.f32.mrb[0].mxu0
        %v2371 = vadd.f32 %v1168, %v2370
        %v2372 = vpop.f32.mrb[0].mxu0
        %v2373 = vadd.f32 %v1170, %v2372
        %2374 = vdwg.mxu0
        %2375 = vmatprep.subr.mxu0 %v2246
        %2376 = vmatpush1.msra.mxu0 %v2244
        %2377 = vmatprep.subr.mxu0 0.0
        %2378 = vmatpush1.msra.mxu0 0.0
        %2379 = vmatprep.subr.mxu0 0.0
        %2380 = vmatpush1.msra.mxu0 0.0
        %2381 = vmatprep.subr.mxu0 0.0
        %2382 = vmatpush1.msra.mxu0 0.0
        %2383 = vmatprep.subr.mxu0 0.0
        %2384 = vmatpush1.msra.mxu0 0.0
        %2385 = vmatprep.subr.mxu0 0.0
        %2386 = vmatpush1.msra.mxu0 0.0
        %2387 = vmatprep.subr.mxu0 0.0
        %2388 = vmatpush1.msra.mxu0 0.0
        %2389 = vmatprep.subr.mxu0 0.0
        %2390 = vmatpush1.msra.mxu0 0.0
        %2391 = vmatprep.subr.mxu0 0.0
        %2392 = vmatpush1.msra.mxu0 0.0
        %2393 = vmatprep.subr.mxu0 0.0
        %2394 = vmatpush1.msra.mxu0 0.0
        %2395 = vmatprep.subr.mxu0 0.0
        %2396 = vmatpush1.msra.mxu0 0.0
        %2397 = vmatprep.subr.mxu0 0.0
        %2398 = vmatpush1.msra.mxu0 0.0
        %2399 = vmatprep.subr.mxu0 0.0
        %2400 = vmatpush1.msra.mxu0 0.0
        %2401 = vmatprep.subr.mxu0 0.0
        %2402 = vmatpush1.msra.mxu0 0.0
        %2403 = vmatprep.subr.mxu0 0.0
        %2404 = vmatpush1.msra.mxu0 0.0
        %2405 = vmatprep.subr.mxu0 0.0
        %2406 = vmatpush1.msra.mxu0 0.0
        %2407 = vmatprep.subr.mxu0 0.0
        %2408 = vmatpush1.msra.mxu0 0.0
        %2409 = vmatprep.subr.mxu0 0.0
        %2410 = vmatpush1.msra.mxu0 0.0
        %2411 = vmatprep.subr.mxu0 0.0
        %2412 = vmatpush1.msra.mxu0 0.0
        %2413 = vmatprep.subr.mxu0 0.0
        %2414 = vmatpush1.msra.mxu0 0.0
        %2415 = vmatprep.subr.mxu0 0.0
        %2416 = vmatpush1.msra.mxu0 0.0
        %2417 = vmatprep.subr.mxu0 0.0
        %2418 = vmatpush1.msra.mxu0 0.0
        %2419 = vmatprep.subr.mxu0 0.0
        %2420 = vmatpush1.msra.mxu0 0.0
        %2421 = vmatprep.subr.mxu0 0.0
        %2422 = vmatpush1.msra.mxu0 0.0
        %2423 = vmatprep.subr.mxu0 0.0
        %2424 = vmatpush1.msra.mxu0 0.0
        %2425 = vmatprep.subr.mxu0 0.0
        %2426 = vmatpush1.msra.mxu0 0.0
        %2427 = vmatprep.subr.mxu0 0.0
        %2428 = vmatpush1.msra.mxu0 0.0
        %2429 = vmatprep.subr.mxu0 0.0
        %2430 = vmatpush1.msra.mxu0 0.0
        %2431 = vmatprep.subr.mxu0 0.0
        %2432 = vmatpush1.msra.mxu0 0.0
        %2433 = vmatprep.subr.mxu0 0.0
        %2434 = vmatpush1.msra.mxu0 0.0
        %2435 = vmatprep.subr.mxu0 0.0
        %2436 = vmatpush1.msra.mxu0 0.0
        %2437 = vmatprep.subr.mxu0 0.0
        %2438 = vmatpush1.msra.mxu0 0.0
        %2439 = vmatprep.mubr.f32.mxu0 0.0
        %2440 = vmatmul.mubr.f32.gmra.mrb[0].mxu0 %v2238
        %v2441 = vpop.f32.mrb[0].mxu0
        %v2442 = vadd.f32 %v1239, %v2441
        %v2443 = vpop.f32.mrb[0].mxu0
        %v2444 = vadd.f32 %v1241, %v2443
        %2445 = vdwg.mxu0
        %2446 = vmatprep.subr.mxu0 %v2250
        %2447 = vmatpush1.msra.mxu0 %v2248
        %2448 = vmatprep.subr.mxu0 0.0
        %2449 = vmatpush1.msra.mxu0 0.0
        %2450 = vmatprep.subr.mxu0 0.0
        %2451 = vmatpush1.msra.mxu0 0.0
        %2452 = vmatprep.subr.mxu0 0.0
        %2453 = vmatpush1.msra.mxu0 0.0
        %2454 = vmatprep.subr.mxu0 0.0
        %2455 = vmatpush1.msra.mxu0 0.0
        %2456 = vmatprep.subr.mxu0 0.0
        %2457 = vmatpush1.msra.mxu0 0.0
        %2458 = vmatprep.subr.mxu0 0.0
        %2459 = vmatpush1.msra.mxu0 0.0
        %2460 = vmatprep.subr.mxu0 0.0
        %2461 = vmatpush1.msra.mxu0 0.0
        %2462 = vmatprep.subr.mxu0 0.0
        %2463 = vmatpush1.msra.mxu0 0.0
        %2464 = vmatprep.subr.mxu0 0.0
        %2465 = vmatpush1.msra.mxu0 0.0
        %2466 = vmatprep.subr.mxu0 0.0
        %2467 = vmatpush1.msra.mxu0 0.0
        %2468 = vmatprep.subr.mxu0 0.0
        %2469 = vmatpush1.msra.mxu0 0.0
        %2470 = vmatprep.subr.mxu0 0.0
        %2471 = vmatpush1.msra.mxu0 0.0
        %2472 = vmatprep.subr.mxu0 0.0
        %2473 = vmatpush1.msra.mxu0 0.0
        %2474 = vmatprep.subr.mxu0 0.0
        %2475 = vmatpush1.msra.mxu0 0.0
        %2476 = vmatprep.subr.mxu0 0.0
        %2477 = vmatpush1.msra.mxu0 0.0
        %2478 = vmatprep.subr.mxu0 0.0
        %2479 = vmatpush1.msra.mxu0 0.0
        %2480 = vmatprep.subr.mxu0 0.0
        %2481 = vmatpush1.msra.mxu0 0.0
        %2482 = vmatprep.subr.mxu0 0.0
        %2483 = vmatpush1.msra.mxu0 0.0
        %2484 = vmatprep.subr.mxu0 0.0
        %2485 = vmatpush1.msra.mxu0 0.0
        %2486 = vmatprep.subr.mxu0 0.0
        %2487 = vmatpush1.msra.mxu0 0.0
        %2488 = vmatprep.subr.mxu0 0.0
        %2489 = vmatpush1.msra.mxu0 0.0
        %2490 = vmatprep.subr.mxu0 0.0
        %2491 = vmatpush1.msra.mxu0 0.0
        %2492 = vmatprep.subr.mxu0 0.0
        %2493 = vmatpush1.msra.mxu0 0.0
        %2494 = vmatprep.subr.mxu0 0.0
        %2495 = vmatpush1.msra.mxu0 0.0
        %2496 = vmatprep.subr.mxu0 0.0
        %2497 = vmatpush1.msra.mxu0 0.0
        %2498 = vmatprep.subr.mxu0 0.0
        %2499 = vmatpush1.msra.mxu0 0.0
        %2500 = vmatprep.subr.mxu0 0.0
        %2501 = vmatpush1.msra.mxu0 0.0
        %2502 = vmatprep.subr.mxu0 0.0
        %2503 = vmatpush1.msra.mxu0 0.0
        %2504 = vmatprep.subr.mxu0 0.0
        %2505 = vmatpush1.msra.mxu0 0.0
        %2506 = vmatprep.subr.mxu0 0.0
        %2507 = vmatpush1.msra.mxu0 0.0
        %2508 = vmatprep.subr.mxu0 0.0
        %2509 = vmatpush1.msra.mxu0 0.0
        %2510 = vmatprep.mubr.f32.mxu0 0.0
        %2511 = vmatmul.mubr.f32.gmra.mrb[0].mxu0 %v2238
        %v2512 = vpop.f32.mrb[0].mxu0
        %v2513 = vadd.f32 %v1310, %v2512
        %v2514 = vpop.f32.mrb[0].mxu0
        %v2515 = vadd.f32 %v1312, %v2514
        %2516 = vdwg.mxu0
        %2517 = vmatprep.subr.mxu0 %v2254
        %2518 = vmatpush1.msra.mxu0 %v2252
        %2519 = vmatprep.subr.mxu0 0.0
        %2520 = vmatpush1.msra.mxu0 0.0
        %2521 = vmatprep.subr.mxu0 0.0
        %2522 = vmatpush1.msra.mxu0 0.0
        %2523 = vmatprep.subr.mxu0 0.0
        %2524 = vmatpush1.msra.mxu0 0.0
        %2525 = vmatprep.subr.mxu0 0.0
        %2526 = vmatpush1.msra.mxu0 0.0
        %2527 = vmatprep.subr.mxu0 0.0
        %2528 = vmatpush1.msra.mxu0 0.0
        %2529 = vmatprep.subr.mxu0 0.0
        %2530 = vmatpush1.msra.mxu0 0.0
        %2531 = vmatprep.subr.mxu0 0.0
        %2532 = vmatpush1.msra.mxu0 0.0
        %2533 = vmatprep.subr.mxu0 0.0
        %2534 = vmatpush1.msra.mxu0 0.0
        %2535 = vmatprep.subr.mxu0 0.0
        %2536 = vmatpush1.msra.mxu0 0.0
        %2537 = vmatprep.subr.mxu0 0.0
        %2538 = vmatpush1.msra.mxu0 0.0
        %2539 = vmatprep.subr.mxu0 0.0
        %2540 = vmatpush1.msra.mxu0 0.0
        %2541 = vmatprep.subr.mxu0 0.0
        %2542 = vmatpush1.msra.mxu0 0.0
        %2543 = vmatprep.subr.mxu0 0.0
        %2544 = vmatpush1.msra.mxu0 0.0
        %2545 = vmatprep.subr.mxu0 0.0
        %2546 = vmatpush1.msra.mxu0 0.0
        %2547 = vmatprep.subr.mxu0 0.0
        %2548 = vmatpush1.msra.mxu0 0.0
        %2549 = vmatprep.subr.mxu0 0.0
        %2550 = vmatpush1.msra.mxu0 0.0
        %2551 = vmatprep.subr.mxu0 0.0
        %2552 = vmatpush1.msra.mxu0 0.0
        %2553 = vmatprep.subr.mxu0 0.0
        %2554 = vmatpush1.msra.mxu0 0.0
        %2555 = vmatprep.subr.mxu0 0.0
        %2556 = vmatpush1.msra.mxu0 0.0
        %2557 = vmatprep.subr.mxu0 0.0
        %2558 = vmatpush1.msra.mxu0 0.0
        %2559 = vmatprep.subr.mxu0 0.0
        %2560 = vmatpush1.msra.mxu0 0.0
        %2561 = vmatprep.subr.mxu0 0.0
        %2562 = vmatpush1.msra.mxu0 0.0
        %2563 = vmatprep.subr.mxu0 0.0
        %2564 = vmatpush1.msra.mxu0 0.0
        %2565 = vmatprep.subr.mxu0 0.0
        %2566 = vmatpush1.msra.mxu0 0.0
        %2567 = vmatprep.subr.mxu0 0.0
        %2568 = vmatpush1.msra.mxu0 0.0
        %2569 = vmatprep.subr.mxu0 0.0
        %2570 = vmatpush1.msra.mxu0 0.0
        %2571 = vmatprep.subr.mxu0 0.0
        %2572 = vmatpush1.msra.mxu0 0.0
        %2573 = vmatprep.subr.mxu0 0.0
        %2574 = vmatpush1.msra.mxu0 0.0
        %2575 = vmatprep.subr.mxu0 0.0
        %2576 = vmatpush1.msra.mxu0 0.0
        %2577 = vmatprep.subr.mxu0 0.0
        %2578 = vmatpush1.msra.mxu0 0.0
        %2579 = vmatprep.subr.mxu0 0.0
        %2580 = vmatpush1.msra.mxu0 0.0
        %2581 = vmatprep.mubr.f32.mxu0 0.0
        %2582 = vmatmul.mubr.f32.gmra.mrb[0].mxu0 %v2238
        %v2583 = vpop.f32.mrb[0].mxu0
        %v2584 = vadd.f32 %v1381, %v2583
        %v2585 = vpop.f32.mrb[0].mxu0
        %v2586 = vadd.f32 %v1383, %v2585
        %2587 = vdwg.mxu0
        %2588 = vmatprep.subr.mxu0 %v2258
        %2589 = vmatpush1.msra.mxu0 %v2256
        %2590 = vmatprep.subr.mxu0 0.0
        %2591 = vmatpush1.msra.mxu0 0.0
        %2592 = vmatprep.subr.mxu0 0.0
        %2593 = vmatpush1.msra.mxu0 0.0
        %2594 = vmatprep.subr.mxu0 0.0
        %2595 = vmatpush1.msra.mxu0 0.0
        %2596 = vmatprep.subr.mxu0 0.0
        %2597 = vmatpush1.msra.mxu0 0.0
        %2598 = vmatprep.subr.mxu0 0.0
        %2599 = vmatpush1.msra.mxu0 0.0
        %2600 = vmatprep.subr.mxu0 0.0
        %2601 = vmatpush1.msra.mxu0 0.0
        %2602 = vmatprep.subr.mxu0 0.0
        %2603 = vmatpush1.msra.mxu0 0.0
        %2604 = vmatprep.subr.mxu0 0.0
        %2605 = vmatpush1.msra.mxu0 0.0
        %2606 = vmatprep.subr.mxu0 0.0
        %2607 = vmatpush1.msra.mxu0 0.0
        %2608 = vmatprep.subr.mxu0 0.0
        %2609 = vmatpush1.msra.mxu0 0.0
        %2610 = vmatprep.subr.mxu0 0.0
        %2611 = vmatpush1.msra.mxu0 0.0
        %2612 = vmatprep.subr.mxu0 0.0
        %2613 = vmatpush1.msra.mxu0 0.0
        %2614 = vmatprep.subr.mxu0 0.0
        %2615 = vmatpush1.msra.mxu0 0.0
        %2616 = vmatprep.subr.mxu0 0.0
        %2617 = vmatpush1.msra.mxu0 0.0
        %2618 = vmatprep.subr.mxu0 0.0
        %2619 = vmatpush1.msra.mxu0 0.0
        %2620 = vmatprep.subr.mxu0 0.0
        %2621 = vmatpush1.msra.mxu0 0.0
        %2622 = vmatprep.subr.mxu0 0.0
        %2623 = vmatpush1.msra.mxu0 0.0
        %2624 = vmatprep.subr.mxu0 0.0
        %2625 = vmatpush1.msra.mxu0 0.0
        %2626 = vmatprep.subr.mxu0 0.0
        %2627 = vmatpush1.msra.mxu0 0.0
        %2628 = vmatprep.subr.mxu0 0.0
        %2629 = vmatpush1.msra.mxu0 0.0
        %2630 = vmatprep.subr.mxu0 0.0
        %2631 = vmatpush1.msra.mxu0 0.0
        %2632 = vmatprep.subr.mxu0 0.0
        %2633 = vmatpush1.msra.mxu0 0.0
        %2634 = vmatprep.subr.mxu0 0.0
        %2635 = vmatpush1.msra.mxu0 0.0
        %2636 = vmatprep.subr.mxu0 0.0
        %2637 = vmatpush1.msra.mxu0 0.0
        %2638 = vmatprep.subr.mxu0 0.0
        %2639 = vmatpush1.msra.mxu0 0.0
        %2640 = vmatprep.subr.mxu0 0.0
        %2641 = vmatpush1.msra.mxu0 0.0
        %2642 = vmatprep.subr.mxu0 0.0
        %2643 = vmatpush1.msra.mxu0 0.0
        %2644 = vmatprep.subr.mxu0 0.0
        %2645 = vmatpush1.msra.mxu0 0.0
        %2646 = vmatprep.subr.mxu0 0.0
        %2647 = vmatpush1.msra.mxu0 0.0
        %2648 = vmatprep.subr.mxu0 0.0
        %2649 = vmatpush1.msra.mxu0 0.0
        %2650 = vmatprep.subr.mxu0 0.0
        %2651 = vmatpush1.msra.mxu0 0.0
        %2652 = vmatprep.mubr.f32.mxu0 0.0
        %2653 = vmatmul.mubr.f32.gmra.mrb[0].mxu0 %v2238
        %v2654 = vpop.f32.mrb[0].mxu0
        %v2655 = vadd.f32 %v1452, %v2654
        %v2656 = vpop.f32.mrb[0].mxu0
        %v2657 = vadd.f32 %v1454, %v2656
        %2658 = vdwg.mxu0
        %2659 = vmatprep.subr.mxu0 %v2262
        %2660 = vmatpush1.msra.mxu0 %v2260
        %2661 = vmatprep.subr.mxu0 0.0
        %2662 = vmatpush1.msra.mxu0 0.0
        %2663 = vmatprep.subr.mxu0 0.0
        %2664 = vmatpush1.msra.mxu0 0.0
        %2665 = vmatprep.subr.mxu0 0.0
        %2666 = vmatpush1.msra.mxu0 0.0
        %2667 = vmatprep.subr.mxu0 0.0
        %2668 = vmatpush1.msra.mxu0 0.0
        %2669 = vmatprep.subr.mxu0 0.0
        %2670 = vmatpush1.msra.mxu0 0.0
        %2671 = vmatprep.subr.mxu0 0.0
        %2672 = vmatpush1.msra.mxu0 0.0
        %2673 = vmatprep.subr.mxu0 0.0
        %2674 = vmatpush1.msra.mxu0 0.0
        %2675 = vmatprep.subr.mxu0 0.0
        %2676 = vmatpush1.msra.mxu0 0.0
        %2677 = vmatprep.subr.mxu0 0.0
        %2678 = vmatpush1.msra.mxu0 0.0
        %2679 = vmatprep.subr.mxu0 0.0
        %2680 = vmatpush1.msra.mxu0 0.0
        %2681 = vmatprep.subr.mxu0 0.0
        %2682 = vmatpush1.msra.mxu0 0.0
        %2683 = vmatprep.subr.mxu0 0.0
        %2684 = vmatpush1.msra.mxu0 0.0
        %2685 = vmatprep.subr.mxu0 0.0
        %2686 = vmatpush1.msra.mxu0 0.0
        %2687 = vmatprep.subr.mxu0 0.0
        %2688 = vmatpush1.msra.mxu0 0.0
        %2689 = vmatprep.subr.mxu0 0.0
        %2690 = vmatpush1.msra.mxu0 0.0
        %2691 = vmatprep.subr.mxu0 0.0
        %2692 = vmatpush1.msra.mxu0 0.0
        %2693 = vmatprep.subr.mxu0 0.0
        %2694 = vmatpush1.msra.mxu0 0.0
        %2695 = vmatprep.subr.mxu0 0.0
        %2696 = vmatpush1.msra.mxu0 0.0
        %2697 = vmatprep.subr.mxu0 0.0
        %2698 = vmatpush1.msra.mxu0 0.0
        %2699 = vmatprep.subr.mxu0 0.0
        %2700 = vmatpush1.msra.mxu0 0.0
        %2701 = vmatprep.subr.mxu0 0.0
        %2702 = vmatpush1.msra.mxu0 0.0
        %2703 = vmatprep.subr.mxu0 0.0
        %2704 = vmatpush1.msra.mxu0 0.0
        %2705 = vmatprep.subr.mxu0 0.0
        %2706 = vmatpush1.msra.mxu0 0.0
        %2707 = vmatprep.subr.mxu0 0.0
        %2708 = vmatpush1.msra.mxu0 0.0
        %2709 = vmatprep.subr.mxu0 0.0
        %2710 = vmatpush1.msra.mxu0 0.0
        %2711 = vmatprep.subr.mxu0 0.0
        %2712 = vmatpush1.msra.mxu0 0.0
        %2713 = vmatprep.subr.mxu0 0.0
        %2714 = vmatpush1.msra.mxu0 0.0
        %2715 = vmatprep.subr.mxu0 0.0
        %2716 = vmatpush1.msra.mxu0 0.0
        %2717 = vmatprep.subr.mxu0 0.0
        %2718 = vmatpush1.msra.mxu0 0.0
        %2719 = vmatprep.subr.mxu0 0.0
        %2720 = vmatpush1.msra.mxu0 0.0
        %2721 = vmatprep.subr.mxu0 0.0
        %2722 = vmatpush1.msra.mxu0 0.0
        %2723 = vmatprep.mubr.f32.mxu0 0.0
        %2724 = vmatmul.mubr.f32.gmra.mrb[0].mxu0 %v2238
        %v2725 = vpop.f32.mrb[0].mxu0
        %v2726 = vadd.f32 %v1523, %v2725
        %v2727 = vpop.f32.mrb[0].mxu0
        %v2728 = vadd.f32 %v1525, %v2727
        %2729 = vdwg.mxu0
        %2730 = vmatprep.subr.mxu0 %v2266
        %2731 = vmatpush1.msra.mxu0 %v2264
        %2732 = vmatprep.subr.mxu0 0.0
        %2733 = vmatpush1.msra.mxu0 0.0
        %2734 = vmatprep.subr.mxu0 0.0
        %2735 = vmatpush1.msra.mxu0 0.0
        %2736 = vmatprep.subr.mxu0 0.0
        %2737 = vmatpush1.msra.mxu0 0.0
        %2738 = vmatprep.subr.mxu0 0.0
        %2739 = vmatpush1.msra.mxu0 0.0
        %2740 = vmatprep.subr.mxu0 0.0
        %2741 = vmatpush1.msra.mxu0 0.0
        %2742 = vmatprep.subr.mxu0 0.0
        %2743 = vmatpush1.msra.mxu0 0.0
        %2744 = vmatprep.subr.mxu0 0.0
        %2745 = vmatpush1.msra.mxu0 0.0
        %2746 = vmatprep.subr.mxu0 0.0
        %2747 = vmatpush1.msra.mxu0 0.0
        %2748 = vmatprep.subr.mxu0 0.0
        %2749 = vmatpush1.msra.mxu0 0.0
        %2750 = vmatprep.subr.mxu0 0.0
        %2751 = vmatpush1.msra.mxu0 0.0
        %2752 = vmatprep.subr.mxu0 0.0
        %2753 = vmatpush1.msra.mxu0 0.0
        %2754 = vmatprep.subr.mxu0 0.0
        %2755 = vmatpush1.msra.mxu0 0.0
        %2756 = vmatprep.subr.mxu0 0.0
        %2757 = vmatpush1.msra.mxu0 0.0
        %2758 = vmatprep.subr.mxu0 0.0
        %2759 = vmatpush1.msra.mxu0 0.0
        %2760 = vmatprep.subr.mxu0 0.0
        %2761 = vmatpush1.msra.mxu0 0.0
        %2762 = vmatprep.subr.mxu0 0.0
        %2763 = vmatpush1.msra.mxu0 0.0
        %2764 = vmatprep.subr.mxu0 0.0
        %2765 = vmatpush1.msra.mxu0 0.0
        %2766 = vmatprep.subr.mxu0 0.0
        %2767 = vmatpush1.msra.mxu0 0.0
        %2768 = vmatprep.subr.mxu0 0.0
        %2769 = vmatpush1.msra.mxu0 0.0
        %2770 = vmatprep.subr.mxu0 0.0
        %2771 = vmatpush1.msra.mxu0 0.0
        %2772 = vmatprep.subr.mxu0 0.0
        %2773 = vmatpush1.msra.mxu0 0.0
        %2774 = vmatprep.subr.mxu0 0.0
        %2775 = vmatpush1.msra.mxu0 0.0
        %2776 = vmatprep.subr.mxu0 0.0
        %2777 = vmatpush1.msra.mxu0 0.0
        %2778 = vmatprep.subr.mxu0 0.0
        %2779 = vmatpush1.msra.mxu0 0.0
        %2780 = vmatprep.subr.mxu0 0.0
        %2781 = vmatpush1.msra.mxu0 0.0
        %2782 = vmatprep.subr.mxu0 0.0
        %2783 = vmatpush1.msra.mxu0 0.0
        %2784 = vmatprep.subr.mxu0 0.0
        %2785 = vmatpush1.msra.mxu0 0.0
        %2786 = vmatprep.subr.mxu0 0.0
        %2787 = vmatpush1.msra.mxu0 0.0
        %2788 = vmatprep.subr.mxu0 0.0
        %2789 = vmatpush1.msra.mxu0 0.0
        %2790 = vmatprep.subr.mxu0 0.0
        %2791 = vmatpush1.msra.mxu0 0.0
        %2792 = vmatprep.subr.mxu0 0.0
        %2793 = vmatpush1.msra.mxu0 0.0
        %2794 = vmatprep.mubr.f32.mxu0 0.0
        %2795 = vmatmul.mubr.f32.gmra.mrb[0].mxu0 %v2238
        %v2796 = vpop.f32.mrb[0].mxu0
        %v2797 = vadd.f32 %v1594, %v2796
        %v2798 = vpop.f32.mrb[0].mxu0
        %v2799 = vadd.f32 %v1596, %v2798
        %2800 = vdwg.mxu0
        %2801 = vmatprep.subr.mxu0 %v2270
        %2802 = vmatpush1.msra.mxu0 %v2268
        %2803 = vmatprep.subr.mxu0 0.0
        %2804 = vmatpush1.msra.mxu0 0.0
        %2805 = vmatprep.subr.mxu0 0.0
        %2806 = vmatpush1.msra.mxu0 0.0
        %2807 = vmatprep.subr.mxu0 0.0
        %2808 = vmatpush1.msra.mxu0 0.0
        %2809 = vmatprep.subr.mxu0 0.0
        %2810 = vmatpush1.msra.mxu0 0.0
        %2811 = vmatprep.subr.mxu0 0.0
        %2812 = vmatpush1.msra.mxu0 0.0
        %2813 = vmatprep.subr.mxu0 0.0
        %2814 = vmatpush1.msra.mxu0 0.0
        %2815 = vmatprep.subr.mxu0 0.0
        %2816 = vmatpush1.msra.mxu0 0.0
        %2817 = vmatprep.subr.mxu0 0.0
        %2818 = vmatpush1.msra.mxu0 0.0
        %2819 = vmatprep.subr.mxu0 0.0
        %2820 = vmatpush1.msra.mxu0 0.0
        %2821 = vmatprep.subr.mxu0 0.0
        %2822 = vmatpush1.msra.mxu0 0.0
        %2823 = vmatprep.subr.mxu0 0.0
        %2824 = vmatpush1.msra.mxu0 0.0
        %2825 = vmatprep.subr.mxu0 0.0
        %2826 = vmatpush1.msra.mxu0 0.0
        %2827 = vmatprep.subr.mxu0 0.0
        %2828 = vmatpush1.msra.mxu0 0.0
        %2829 = vmatprep.subr.mxu0 0.0
        %2830 = vmatpush1.msra.mxu0 0.0
        %2831 = vmatprep.subr.mxu0 0.0
        %2832 = vmatpush1.msra.mxu0 0.0
        %2833 = vmatprep.subr.mxu0 0.0
        %2834 = vmatpush1.msra.mxu0 0.0
        %2835 = vmatprep.subr.mxu0 0.0
        %2836 = vmatpush1.msra.mxu0 0.0
        %2837 = vmatprep.subr.mxu0 0.0
        %2838 = vmatpush1.msra.mxu0 0.0
        %2839 = vmatprep.subr.mxu0 0.0
        %2840 = vmatpush1.msra.mxu0 0.0
        %2841 = vmatprep.subr.mxu0 0.0
        %2842 = vmatpush1.msra.mxu0 0.0
        %2843 = vmatprep.subr.mxu0 0.0
        %2844 = vmatpush1.msra.mxu0 0.0
        %2845 = vmatprep.subr.mxu0 0.0
        %2846 = vmatpush1.msra.mxu0 0.0
        %2847 = vmatprep.subr.mxu0 0.0
        %2848 = vmatpush1.msra.mxu0 0.0
        %2849 = vmatprep.subr.mxu0 0.0
        %2850 = vmatpush1.msra.mxu0 0.0
        %2851 = vmatprep.subr.mxu0 0.0
        %2852 = vmatpush1.msra.mxu0 0.0
        %2853 = vmatprep.subr.mxu0 0.0
        %2854 = vmatpush1.msra.mxu0 0.0
        %2855 = vmatprep.subr.mxu0 0.0
        %2856 = vmatpush1.msra.mxu0 0.0
        %2857 = vmatprep.subr.mxu0 0.0
        %2858 = vmatpush1.msra.mxu0 0.0
        %2859 = vmatprep.subr.mxu0 0.0
        %2860 = vmatpush1.msra.mxu0 0.0
        %2861 = vmatprep.subr.mxu0 0.0
        %2862 = vmatpush1.msra.mxu0 0.0
        %2863 = vmatprep.subr.mxu0 0.0
        %2864 = vmatpush1.msra.mxu0 0.0
        %2865 = vmatprep.mubr.f32.mxu0 0.0
        %2866 = vmatmul.mubr.f32.gmra.mrb[0].mxu0 %v2238
        %v2867 = vpop.f32.mrb[0].mxu0
        %v2868 = vadd.f32 %v1665, %v2867
        %v2869 = vpop.f32.mrb[0].mxu0
        %v2870 = vadd.f32 %v1667, %v2869
        %2871 = vdwg.mxu0
        %2872 = vmatprep.subr.mxu0 %v2274
        %2873 = vmatpush1.msra.mxu0 %v2272
        %2874 = vmatprep.subr.mxu0 0.0
        %2875 = vmatpush1.msra.mxu0 0.0
        %2876 = vmatprep.subr.mxu0 0.0
        %2877 = vmatpush1.msra.mxu0 0.0
        %2878 = vmatprep.subr.mxu0 0.0
        %2879 = vmatpush1.msra.mxu0 0.0
        %2880 = vmatprep.subr.mxu0 0.0
        %2881 = vmatpush1.msra.mxu0 0.0
        %2882 = vmatprep.subr.mxu0 0.0
        %2883 = vmatpush1.msra.mxu0 0.0
        %2884 = vmatprep.subr.mxu0 0.0
        %2885 = vmatpush1.msra.mxu0 0.0
        %2886 = vmatprep.subr.mxu0 0.0
        %2887 = vmatpush1.msra.mxu0 0.0
        %2888 = vmatprep.subr.mxu0 0.0
        %2889 = vmatpush1.msra.mxu0 0.0
        %2890 = vmatprep.subr.mxu0 0.0
        %2891 = vmatpush1.msra.mxu0 0.0
        %2892 = vmatprep.subr.mxu0 0.0
        %2893 = vmatpush1.msra.mxu0 0.0
        %2894 = vmatprep.subr.mxu0 0.0
        %2895 = vmatpush1.msra.mxu0 0.0
        %2896 = vmatprep.subr.mxu0 0.0
        %2897 = vmatpush1.msra.mxu0 0.0
        %2898 = vmatprep.subr.mxu0 0.0
        %2899 = vmatpush1.msra.mxu0 0.0
        %2900 = vmatprep.subr.mxu0 0.0
        %2901 = vmatpush1.msra.mxu0 0.0
        %2902 = vmatprep.subr.mxu0 0.0
        %2903 = vmatpush1.msra.mxu0 0.0
        %2904 = vmatprep.subr.mxu0 0.0
        %2905 = vmatpush1.msra.mxu0 0.0
        %2906 = vmatprep.subr.mxu0 0.0
        %2907 = vmatpush1.msra.mxu0 0.0
        %2908 = vmatprep.subr.mxu0 0.0
        %2909 = vmatpush1.msra.mxu0 0.0
        %2910 = vmatprep.subr.mxu0 0.0
        %2911 = vmatpush1.msra.mxu0 0.0
        %2912 = vmatprep.subr.mxu0 0.0
        %2913 = vmatpush1.msra.mxu0 0.0
        %2914 = vmatprep.subr.mxu0 0.0
        %2915 = vmatpush1.msra.mxu0 0.0
        %2916 = vmatprep.subr.mxu0 0.0
        %2917 = vmatpush1.msra.mxu0 0.0
        %2918 = vmatprep.subr.mxu0 0.0
        %2919 = vmatpush1.msra.mxu0 0.0
        %2920 = vmatprep.subr.mxu0 0.0
        %2921 = vmatpush1.msra.mxu0 0.0
        %2922 = vmatprep.subr.mxu0 0.0
        %2923 = vmatpush1.msra.mxu0 0.0
        %2924 = vmatprep.subr.mxu0 0.0
        %2925 = vmatpush1.msra.mxu0 0.0
        %2926 = vmatprep.subr.mxu0 0.0
        %2927 = vmatpush1.msra.mxu0 0.0
        %2928 = vmatprep.subr.mxu0 0.0
        %2929 = vmatpush1.msra.mxu0 0.0
        %2930 = vmatprep.subr.mxu0 0.0
        %2931 = vmatpush1.msra.mxu0 0.0
        %2932 = vmatprep.subr.mxu0 0.0
        %2933 = vmatpush1.msra.mxu0 0.0
        %2934 = vmatprep.subr.mxu0 0.0
        %2935 = vmatpush1.msra.mxu0 0.0
        %2936 = vmatprep.mubr.f32.mxu0 0.0
        %2937 = vmatmul.mubr.f32.gmra.mrb[0].mxu0 %v2238
        %v2938 = vpop.f32.mrb[0].mxu0
        %v2939 = vadd.f32 %v1736, %v2938
        %v2940 = vpop.f32.mrb[0].mxu0
        %v2941 = vadd.f32 %v1738, %v2940
        %2942 = vdwg.mxu0
        %2943 = vmatprep.subr.mxu0 %v2278
        %2944 = vmatpush1.msra.mxu0 %v2276
        %2945 = vmatprep.subr.mxu0 0.0
        %2946 = vmatpush1.msra.mxu0 0.0
        %2947 = vmatprep.subr.mxu0 0.0
        %2948 = vmatpush1.msra.mxu0 0.0
        %2949 = vmatprep.subr.mxu0 0.0
        %2950 = vmatpush1.msra.mxu0 0.0
        %2951 = vmatprep.subr.mxu0 0.0
        %2952 = vmatpush1.msra.mxu0 0.0
        %2953 = vmatprep.subr.mxu0 0.0
        %2954 = vmatpush1.msra.mxu0 0.0
        %2955 = vmatprep.subr.mxu0 0.0
        %2956 = vmatpush1.msra.mxu0 0.0
        %2957 = vmatprep.subr.mxu0 0.0
        %2958 = vmatpush1.msra.mxu0 0.0
        %2959 = vmatprep.subr.mxu0 0.0
        %2960 = vmatpush1.msra.mxu0 0.0
        %2961 = vmatprep.subr.mxu0 0.0
        %2962 = vmatpush1.msra.mxu0 0.0
        %2963 = vmatprep.subr.mxu0 0.0
        %2964 = vmatpush1.msra.mxu0 0.0
        %2965 = vmatprep.subr.mxu0 0.0
        %2966 = vmatpush1.msra.mxu0 0.0
        %2967 = vmatprep.subr.mxu0 0.0
        %2968 = vmatpush1.msra.mxu0 0.0
        %2969 = vmatprep.subr.mxu0 0.0
        %2970 = vmatpush1.msra.mxu0 0.0
        %2971 = vmatprep.subr.mxu0 0.0
        %2972 = vmatpush1.msra.mxu0 0.0
        %2973 = vmatprep.subr.mxu0 0.0
        %2974 = vmatpush1.msra.mxu0 0.0
        %2975 = vmatprep.subr.mxu0 0.0
        %2976 = vmatpush1.msra.mxu0 0.0
        %2977 = vmatprep.subr.mxu0 0.0
        %2978 = vmatpush1.msra.mxu0 0.0
        %2979 = vmatprep.subr.mxu0 0.0
        %2980 = vmatpush1.msra.mxu0 0.0
        %2981 = vmatprep.subr.mxu0 0.0
        %2982 = vmatpush1.msra.mxu0 0.0
        %2983 = vmatprep.subr.mxu0 0.0
        %2984 = vmatpush1.msra.mxu0 0.0
        %2985 = vmatprep.subr.mxu0 0.0
        %2986 = vmatpush1.msra.mxu0 0.0
        %2987 = vmatprep.subr.mxu0 0.0
        %2988 = vmatpush1.msra.mxu0 0.0
        %2989 = vmatprep.subr.mxu0 0.0
        %2990 = vmatpush1.msra.mxu0 0.0
        %2991 = vmatprep.subr.mxu0 0.0
        %2992 = vmatpush1.msra.mxu0 0.0
        %2993 = vmatprep.subr.mxu0 0.0
        %2994 = vmatpush1.msra.mxu0 0.0
        %2995 = vmatprep.subr.mxu0 0.0
        %2996 = vmatpush1.msra.mxu0 0.0
        %2997 = vmatprep.subr.mxu0 0.0
        %2998 = vmatpush1.msra.mxu0 0.0
        %2999 = vmatprep.subr.mxu0 0.0
        %3000 = vmatpush1.msra.mxu0 0.0
        %3001 = vmatprep.subr.mxu0 0.0
        %3002 = vmatpush1.msra.mxu0 0.0
        %3003 = vmatprep.subr.mxu0 0.0
        %3004 = vmatpush1.msra.mxu0 0.0
        %3005 = vmatprep.subr.mxu0 0.0
        %3006 = vmatpush1.msra.mxu0 0.0
        %3007 = vmatprep.mubr.f32.mxu0 0.0
        %3008 = vmatmul.mubr.f32.gmra.mrb[0].mxu0 %v2238
        %v3009 = vpop.f32.mrb[0].mxu0
        %v3010 = vadd.f32 %v1807, %v3009
        %v3011 = vpop.f32.mrb[0].mxu0
        %v3012 = vadd.f32 %v1809, %v3011
        %3013 = vdwg.mxu0
        %3014 = vmatprep.subr.mxu0 %v2282
        %3015 = vmatpush1.msra.mxu0 %v2280
        %3016 = vmatprep.subr.mxu0 0.0
        %3017 = vmatpush1.msra.mxu0 0.0
        %3018 = vmatprep.subr.mxu0 0.0
        %3019 = vmatpush1.msra.mxu0 0.0
        %3020 = vmatprep.subr.mxu0 0.0
        %3021 = vmatpush1.msra.mxu0 0.0
        %3022 = vmatprep.subr.mxu0 0.0
        %3023 = vmatpush1.msra.mxu0 0.0
        %3024 = vmatprep.subr.mxu0 0.0
        %3025 = vmatpush1.msra.mxu0 0.0
        %3026 = vmatprep.subr.mxu0 0.0
        %3027 = vmatpush1.msra.mxu0 0.0
        %3028 = vmatprep.subr.mxu0 0.0
        %3029 = vmatpush1.msra.mxu0 0.0
        %3030 = vmatprep.subr.mxu0 0.0
        %3031 = vmatpush1.msra.mxu0 0.0
        %3032 = vmatprep.subr.mxu0 0.0
        %3033 = vmatpush1.msra.mxu0 0.0
        %3034 = vmatprep.subr.mxu0 0.0
        %3035 = vmatpush1.msra.mxu0 0.0
        %3036 = vmatprep.subr.mxu0 0.0
        %3037 = vmatpush1.msra.mxu0 0.0
        %3038 = vmatprep.subr.mxu0 0.0
        %3039 = vmatpush1.msra.mxu0 0.0
        %3040 = vmatprep.subr.mxu0 0.0
        %3041 = vmatpush1.msra.mxu0 0.0
        %3042 = vmatprep.subr.mxu0 0.0
        %3043 = vmatpush1.msra.mxu0 0.0
        %3044 = vmatprep.subr.mxu0 0.0
        %3045 = vmatpush1.msra.mxu0 0.0
        %3046 = vmatprep.subr.mxu0 0.0
        %3047 = vmatpush1.msra.mxu0 0.0
        %3048 = vmatprep.subr.mxu0 0.0
        %3049 = vmatpush1.msra.mxu0 0.0
        %3050 = vmatprep.subr.mxu0 0.0
        %3051 = vmatpush1.msra.mxu0 0.0
        %3052 = vmatprep.subr.mxu0 0.0
        %3053 = vmatpush1.msra.mxu0 0.0
        %3054 = vmatprep.subr.mxu0 0.0
        %3055 = vmatpush1.msra.mxu0 0.0
        %3056 = vmatprep.subr.mxu0 0.0
        %3057 = vmatpush1.msra.mxu0 0.0
        %3058 = vmatprep.subr.mxu0 0.0
        %3059 = vmatpush1.msra.mxu0 0.0
        %3060 = vmatprep.subr.mxu0 0.0
        %3061 = vmatpush1.msra.mxu0 0.0
        %3062 = vmatprep.subr.mxu0 0.0
        %3063 = vmatpush1.msra.mxu0 0.0
        %3064 = vmatprep.subr.mxu0 0.0
        %3065 = vmatpush1.msra.mxu0 0.0
        %3066 = vmatprep.subr.mxu0 0.0
        %3067 = vmatpush1.msra.mxu0 0.0
        %3068 = vmatprep.subr.mxu0 0.0
        %3069 = vmatpush1.msra.mxu0 0.0
        %3070 = vmatprep.subr.mxu0 0.0
        %3071 = vmatpush1.msra.mxu0 0.0
        %3072 = vmatprep.subr.mxu0 0.0
        %3073 = vmatpush1.msra.mxu0 0.0
        %3074 = vmatprep.subr.mxu0 0.0
        %3075 = vmatpush1.msra.mxu0 0.0
        %3076 = vmatprep.subr.mxu0 0.0
        %3077 = vmatpush1.msra.mxu0 0.0
        %3078 = vmatprep.mubr.f32.mxu0 0.0
        %3079 = vmatmul.mubr.f32.gmra.mrb[0].mxu0 %v2238
        %v3080 = vpop.f32.mrb[0].mxu0
        %v3081 = vadd.f32 %v1878, %v3080
        %v3082 = vpop.f32.mrb[0].mxu0
        %v3083 = vadd.f32 %v1880, %v3082
        %3084 = vdwg.mxu0
        %3085 = vmatprep.subr.mxu0 %v2286
        %3086 = vmatpush1.msra.mxu0 %v2284
        %3087 = vmatprep.subr.mxu0 0.0
        %3088 = vmatpush1.msra.mxu0 0.0
        %3089 = vmatprep.subr.mxu0 0.0
        %3090 = vmatpush1.msra.mxu0 0.0
        %3091 = vmatprep.subr.mxu0 0.0
        %3092 = vmatpush1.msra.mxu0 0.0
        %3093 = vmatprep.subr.mxu0 0.0
        %3094 = vmatpush1.msra.mxu0 0.0
        %3095 = vmatprep.subr.mxu0 0.0
        %3096 = vmatpush1.msra.mxu0 0.0
        %3097 = vmatprep.subr.mxu0 0.0
        %3098 = vmatpush1.msra.mxu0 0.0
        %3099 = vmatprep.subr.mxu0 0.0
        %3100 = vmatpush1.msra.mxu0 0.0
        %3101 = vmatprep.subr.mxu0 0.0
        %3102 = vmatpush1.msra.mxu0 0.0
        %3103 = vmatprep.subr.mxu0 0.0
        %3104 = vmatpush1.msra.mxu0 0.0
        %3105 = vmatprep.subr.mxu0 0.0
        %3106 = vmatpush1.msra.mxu0 0.0
        %3107 = vmatprep.subr.mxu0 0.0
        %3108 = vmatpush1.msra.mxu0 0.0
        %3109 = vmatprep.subr.mxu0 0.0
        %3110 = vmatpush1.msra.mxu0 0.0
        %3111 = vmatprep.subr.mxu0 0.0
        %3112 = vmatpush1.msra.mxu0 0.0
        %3113 = vmatprep.subr.mxu0 0.0
        %3114 = vmatpush1.msra.mxu0 0.0
        %3115 = vmatprep.subr.mxu0 0.0
        %3116 = vmatpush1.msra.mxu0 0.0
        %3117 = vmatprep.subr.mxu0 0.0
        %3118 = vmatpush1.msra.mxu0 0.0
        %3119 = vmatprep.subr.mxu0 0.0
        %3120 = vmatpush1.msra.mxu0 0.0
        %3121 = vmatprep.subr.mxu0 0.0
        %3122 = vmatpush1.msra.mxu0 0.0
        %3123 = vmatprep.subr.mxu0 0.0
        %3124 = vmatpush1.msra.mxu0 0.0
        %3125 = vmatprep.subr.mxu0 0.0
        %3126 = vmatpush1.msra.mxu0 0.0
        %3127 = vmatprep.subr.mxu0 0.0
        %3128 = vmatpush1.msra.mxu0 0.0
        %3129 = vmatprep.subr.mxu0 0.0
        %3130 = vmatpush1.msra.mxu0 0.0
        %3131 = vmatprep.subr.mxu0 0.0
        %3132 = vmatpush1.msra.mxu0 0.0
        %3133 = vmatprep.subr.mxu0 0.0
        %3134 = vmatpush1.msra.mxu0 0.0
        %3135 = vmatprep.subr.mxu0 0.0
        %3136 = vmatpush1.msra.mxu0 0.0
        %3137 = vmatprep.subr.mxu0 0.0
        %3138 = vmatpush1.msra.mxu0 0.0
        %3139 = vmatprep.subr.mxu0 0.0
        %3140 = vmatpush1.msra.mxu0 0.0
        %3141 = vmatprep.subr.mxu0 0.0
        %3142 = vmatpush1.msra.mxu0 0.0
        %3143 = vmatprep.subr.mxu0 0.0
        %3144 = vmatpush1.msra.mxu0 0.0
        %3145 = vmatprep.subr.mxu0 0.0
        %3146 = vmatpush1.msra.mxu0 0.0
        %3147 = vmatprep.subr.mxu0 0.0
        %3148 = vmatpush1.msra.mxu0 0.0
        %3149 = vmatprep.mubr.f32.mxu0 0.0
        %3150 = vmatmul.mubr.f32.gmra.mrb[0].mxu0 %v2238
        %v3151 = vpop.f32.mrb[0].mxu0
        %v3152 = vadd.f32 %v1949, %v3151
        %v3153 = vpop.f32.mrb[0].mxu0
        %v3154 = vadd.f32 %v1951, %v3153
        %3155 = vdwg.mxu0
        %3156 = vmatprep.subr.mxu0 %v2290
        %3157 = vmatpush1.msra.mxu0 %v2288
        %3158 = vmatprep.subr.mxu0 0.0
        %3159 = vmatpush1.msra.mxu0 0.0
        %3160 = vmatprep.subr.mxu0 0.0
        %3161 = vmatpush1.msra.mxu0 0.0
        %3162 = vmatprep.subr.mxu0 0.0
        %3163 = vmatpush1.msra.mxu0 0.0
        %3164 = vmatprep.subr.mxu0 0.0
        %3165 = vmatpush1.msra.mxu0 0.0
        %3166 = vmatprep.subr.mxu0 0.0
        %3167 = vmatpush1.msra.mxu0 0.0
        %3168 = vmatprep.subr.mxu0 0.0
        %3169 = vmatpush1.msra.mxu0 0.0
        %3170 = vmatprep.subr.mxu0 0.0
        %3171 = vmatpush1.msra.mxu0 0.0
        %3172 = vmatprep.subr.mxu0 0.0
        %3173 = vmatpush1.msra.mxu0 0.0
        %3174 = vmatprep.subr.mxu0 0.0
        %3175 = vmatpush1.msra.mxu0 0.0
        %3176 = vmatprep.subr.mxu0 0.0
        %3177 = vmatpush1.msra.mxu0 0.0
        %3178 = vmatprep.subr.mxu0 0.0
        %3179 = vmatpush1.msra.mxu0 0.0
        %3180 = vmatprep.subr.mxu0 0.0
        %3181 = vmatpush1.msra.mxu0 0.0
        %3182 = vmatprep.subr.mxu0 0.0
        %3183 = vmatpush1.msra.mxu0 0.0
        %3184 = vmatprep.subr.mxu0 0.0
        %3185 = vmatpush1.msra.mxu0 0.0
        %3186 = vmatprep.subr.mxu0 0.0
        %3187 = vmatpush1.msra.mxu0 0.0
        %3188 = vmatprep.subr.mxu0 0.0
        %3189 = vmatpush1.msra.mxu0 0.0
        %3190 = vmatprep.subr.mxu0 0.0
        %3191 = vmatpush1.msra.mxu0 0.0
        %3192 = vmatprep.subr.mxu0 0.0
        %3193 = vmatpush1.msra.mxu0 0.0
        %3194 = vmatprep.subr.mxu0 0.0
        %3195 = vmatpush1.msra.mxu0 0.0
        %3196 = vmatprep.subr.mxu0 0.0
        %3197 = vmatpush1.msra.mxu0 0.0
        %3198 = vmatprep.subr.mxu0 0.0
        %3199 = vmatpush1.msra.mxu0 0.0
        %3200 = vmatprep.subr.mxu0 0.0
        %3201 = vmatpush1.msra.mxu0 0.0
        %3202 = vmatprep.subr.mxu0 0.0
        %3203 = vmatpush1.msra.mxu0 0.0
        %3204 = vmatprep.subr.mxu0 0.0
        %3205 = vmatpush1.msra.mxu0 0.0
        %3206 = vmatprep.subr.mxu0 0.0
        %3207 = vmatpush1.msra.mxu0 0.0
        %3208 = vmatprep.subr.mxu0 0.0
        %3209 = vmatpush1.msra.mxu0 0.0
        %3210 = vmatprep.subr.mxu0 0.0
        %3211 = vmatpush1.msra.mxu0 0.0
        %3212 = vmatprep.subr.mxu0 0.0
        %3213 = vmatpush1.msra.mxu0 0.0
        %3214 = vmatprep.subr.mxu0 0.0
        %3215 = vmatpush1.msra.mxu0 0.0
        %3216 = vmatprep.subr.mxu0 0.0
        %3217 = vmatpush1.msra.mxu0 0.0
        %3218 = vmatprep.subr.mxu0 0.0
        %3219 = vmatpush1.msra.mxu0 0.0
        %3220 = vmatprep.mubr.f32.mxu0 0.0
        %3221 = vmatmul.mubr.f32.gmra.mrb[0].mxu0 %v2238
        %v3222 = vpop.f32.mrb[0].mxu0
        %v3223 = vadd.f32 %v2020, %v3222
        %v3224 = vpop.f32.mrb[0].mxu0
        %v3225 = vadd.f32 %v2022, %v3224
        %3226 = vdwg.mxu0
        %3227 = vmatprep.subr.mxu0 %v2294
        %3228 = vmatpush1.msra.mxu0 %v2292
        %3229 = vmatprep.subr.mxu0 0.0
        %3230 = vmatpush1.msra.mxu0 0.0
        %3231 = vmatprep.subr.mxu0 0.0
        %3232 = vmatpush1.msra.mxu0 0.0
        %3233 = vmatprep.subr.mxu0 0.0
        %3234 = vmatpush1.msra.mxu0 0.0
        %3235 = vmatprep.subr.mxu0 0.0
        %3236 = vmatpush1.msra.mxu0 0.0
        %3237 = vmatprep.subr.mxu0 0.0
        %3238 = vmatpush1.msra.mxu0 0.0
        %3239 = vmatprep.subr.mxu0 0.0
        %3240 = vmatpush1.msra.mxu0 0.0
        %3241 = vmatprep.subr.mxu0 0.0
        %3242 = vmatpush1.msra.mxu0 0.0
        %3243 = vmatprep.subr.mxu0 0.0
        %3244 = vmatpush1.msra.mxu0 0.0
        %3245 = vmatprep.subr.mxu0 0.0
        %3246 = vmatpush1.msra.mxu0 0.0
        %3247 = vmatprep.subr.mxu0 0.0
        %3248 = vmatpush1.msra.mxu0 0.0
        %3249 = vmatprep.subr.mxu0 0.0
        %3250 = vmatpush1.msra.mxu0 0.0
        %3251 = vmatprep.subr.mxu0 0.0
        %3252 = vmatpush1.msra.mxu0 0.0
        %3253 = vmatprep.subr.mxu0 0.0
        %3254 = vmatpush1.msra.mxu0 0.0
        %3255 = vmatprep.subr.mxu0 0.0
        %3256 = vmatpush1.msra.mxu0 0.0
        %3257 = vmatprep.subr.mxu0 0.0
        %3258 = vmatpush1.msra.mxu0 0.0
        %3259 = vmatprep.subr.mxu0 0.0
        %3260 = vmatpush1.msra.mxu0 0.0
        %3261 = vmatprep.subr.mxu0 0.0
        %3262 = vmatpush1.msra.mxu0 0.0
        %3263 = vmatprep.subr.mxu0 0.0
        %3264 = vmatpush1.msra.mxu0 0.0
        %3265 = vmatprep.subr.mxu0 0.0
        %3266 = vmatpush1.msra.mxu0 0.0
        %3267 = vmatprep.subr.mxu0 0.0
        %3268 = vmatpush1.msra.mxu0 0.0
        %3269 = vmatprep.subr.mxu0 0.0
        %3270 = vmatpush1.msra.mxu0 0.0
        %3271 = vmatprep.subr.mxu0 0.0
        %3272 = vmatpush1.msra.mxu0 0.0
        %3273 = vmatprep.subr.mxu0 0.0
        %3274 = vmatpush1.msra.mxu0 0.0
        %3275 = vmatprep.subr.mxu0 0.0
        %3276 = vmatpush1.msra.mxu0 0.0
        %3277 = vmatprep.subr.mxu0 0.0
        %3278 = vmatpush1.msra.mxu0 0.0
        %3279 = vmatprep.subr.mxu0 0.0
        %3280 = vmatpush1.msra.mxu0 0.0
        %3281 = vmatprep.subr.mxu0 0.0
        %3282 = vmatpush1.msra.mxu0 0.0
        %3283 = vmatprep.subr.mxu0 0.0
        %3284 = vmatpush1.msra.mxu0 0.0
        %3285 = vmatprep.subr.mxu0 0.0
        %3286 = vmatpush1.msra.mxu0 0.0
        %3287 = vmatprep.subr.mxu0 0.0
        %3288 = vmatpush1.msra.mxu0 0.0
        %3289 = vmatprep.subr.mxu0 0.0
        %3290 = vmatpush1.msra.mxu0 0.0
        %3291 = vmatprep.mubr.f32.mxu0 0.0
        %3292 = vmatmul.mubr.f32.gmra.mrb[0].mxu0 %v2238
        %v3293 = vpop.f32.mrb[0].mxu0
        %v3294 = vadd.f32 %v2091, %v3293
        %v3295 = vpop.f32.mrb[0].mxu0
        %v3296 = vadd.f32 %v2093, %v3295
        %3297 = vdwg.mxu0
        %3298 = vmatprep.subr.mxu0 %v2298
        %3299 = vmatpush1.msra.mxu0 %v2296
        %3300 = vmatprep.subr.mxu0 0.0
        %3301 = vmatpush1.msra.mxu0 0.0
        %3302 = vmatprep.subr.mxu0 0.0
        %3303 = vmatpush1.msra.mxu0 0.0
        %3304 = vmatprep.subr.mxu0 0.0
        %3305 = vmatpush1.msra.mxu0 0.0
        %3306 = vmatprep.subr.mxu0 0.0
        %3307 = vmatpush1.msra.mxu0 0.0
        %3308 = vmatprep.subr.mxu0 0.0
        %3309 = vmatpush1.msra.mxu0 0.0
        %3310 = vmatprep.subr.mxu0 0.0
        %3311 = vmatpush1.msra.mxu0 0.0
        %3312 = vmatprep.subr.mxu0 0.0
        %3313 = vmatpush1.msra.mxu0 0.0
        %3314 = vmatprep.subr.mxu0 0.0
        %3315 = vmatpush1.msra.mxu0 0.0
        %3316 = vmatprep.subr.mxu0 0.0
        %3317 = vmatpush1.msra.mxu0 0.0
        %3318 = vmatprep.subr.mxu0 0.0
        %3319 = vmatpush1.msra.mxu0 0.0
        %3320 = vmatprep.subr.mxu0 0.0
        %3321 = vmatpush1.msra.mxu0 0.0
        %3322 = vmatprep.subr.mxu0 0.0
        %3323 = vmatpush1.msra.mxu0 0.0
        %3324 = vmatprep.subr.mxu0 0.0
        %3325 = vmatpush1.msra.mxu0 0.0
        %3326 = vmatprep.subr.mxu0 0.0
        %3327 = vmatpush1.msra.mxu0 0.0
        %3328 = vmatprep.subr.mxu0 0.0
        %3329 = vmatpush1.msra.mxu0 0.0
        %3330 = vmatprep.subr.mxu0 0.0
        %3331 = vmatpush1.msra.mxu0 0.0
        %3332 = vmatprep.subr.mxu0 0.0
        %3333 = vmatpush1.msra.mxu0 0.0
        %3334 = vmatprep.subr.mxu0 0.0
        %3335 = vmatpush1.msra.mxu0 0.0
        %3336 = vmatprep.subr.mxu0 0.0
        %3337 = vmatpush1.msra.mxu0 0.0
        %3338 = vmatprep.subr.mxu0 0.0
        %3339 = vmatpush1.msra.mxu0 0.0
        %3340 = vmatprep.subr.mxu0 0.0
        %3341 = vmatpush1.msra.mxu0 0.0
        %3342 = vmatprep.subr.mxu0 0.0
        %3343 = vmatpush1.msra.mxu0 0.0
        %3344 = vmatprep.subr.mxu0 0.0
        %3345 = vmatpush1.msra.mxu0 0.0
        %3346 = vmatprep.subr.mxu0 0.0
        %3347 = vmatpush1.msra.mxu0 0.0
        %3348 = vmatprep.subr.mxu0 0.0
        %3349 = vmatpush1.msra.mxu0 0.0
        %3350 = vmatprep.subr.mxu0 0.0
        %3351 = vmatpush1.msra.mxu0 0.0
        %3352 = vmatprep.subr.mxu0 0.0
        %3353 = vmatpush1.msra.mxu0 0.0
        %3354 = vmatprep.subr.mxu0 0.0
        %3355 = vmatpush1.msra.mxu0 0.0
        %3356 = vmatprep.subr.mxu0 0.0
        %3357 = vmatpush1.msra.mxu0 0.0
        %3358 = vmatprep.subr.mxu0 0.0
        %3359 = vmatpush1.msra.mxu0 0.0
        %3360 = vmatprep.subr.mxu0 0.0
        %3361 = vmatpush1.msra.mxu0 0.0
        %3362 = vmatprep.mubr.f32.mxu0 0.0
        %3363 = vmatmul.mubr.f32.gmra.mrb[0].mxu0 %v2238
        %v3364 = vpop.f32.mrb[0].mxu0
        %v3365 = vadd.f32 %v2162, %v3364
        %v3366 = vpop.f32.mrb[0].mxu0
        %v3367 = vadd.f32 %v2164, %v3366
        %3368 = vdwg.mxu0
        %3369 = vmatprep.subr.mxu0 %v2302
        %3370 = vmatpush1.msra.mxu0 %v2300
        %3371 = vmatprep.subr.mxu0 0.0
        %3372 = vmatpush1.msra.mxu0 0.0
        %3373 = vmatprep.subr.mxu0 0.0
        %3374 = vmatpush1.msra.mxu0 0.0
        %3375 = vmatprep.subr.mxu0 0.0
        %3376 = vmatpush1.msra.mxu0 0.0
        %3377 = vmatprep.subr.mxu0 0.0
        %3378 = vmatpush1.msra.mxu0 0.0
        %3379 = vmatprep.subr.mxu0 0.0
        %3380 = vmatpush1.msra.mxu0 0.0
        %3381 = vmatprep.subr.mxu0 0.0
        %3382 = vmatpush1.msra.mxu0 0.0
        %3383 = vmatprep.subr.mxu0 0.0
        %3384 = vmatpush1.msra.mxu0 0.0
        %3385 = vmatprep.subr.mxu0 0.0
        %3386 = vmatpush1.msra.mxu0 0.0
        %3387 = vmatprep.subr.mxu0 0.0
        %3388 = vmatpush1.msra.mxu0 0.0
        %3389 = vmatprep.subr.mxu0 0.0
        %3390 = vmatpush1.msra.mxu0 0.0
        %3391 = vmatprep.subr.mxu0 0.0
        %3392 = vmatpush1.msra.mxu0 0.0
        %3393 = vmatprep.subr.mxu0 0.0
        %3394 = vmatpush1.msra.mxu0 0.0
        %3395 = vmatprep.subr.mxu0 0.0
        %3396 = vmatpush1.msra.mxu0 0.0
        %3397 = vmatprep.subr.mxu0 0.0
        %3398 = vmatpush1.msra.mxu0 0.0
        %3399 = vmatprep.subr.mxu0 0.0
        %3400 = vmatpush1.msra.mxu0 0.0
        %3401 = vmatprep.subr.mxu0 0.0
        %3402 = vmatpush1.msra.mxu0 0.0
        %3403 = vmatprep.subr.mxu0 0.0
        %3404 = vmatpush1.msra.mxu0 0.0
        %3405 = vmatprep.subr.mxu0 0.0
        %3406 = vmatpush1.msra.mxu0 0.0
        %3407 = vmatprep.subr.mxu0 0.0
        %3408 = vmatpush1.msra.mxu0 0.0
        %3409 = vmatprep.subr.mxu0 0.0
        %3410 = vmatpush1.msra.mxu0 0.0
        %3411 = vmatprep.subr.mxu0 0.0
        %3412 = vmatpush1.msra.mxu0 0.0
        %3413 = vmatprep.subr.mxu0 0.0
        %3414 = vmatpush1.msra.mxu0 0.0
        %3415 = vmatprep.subr.mxu0 0.0
        %3416 = vmatpush1.msra.mxu0 0.0
        %3417 = vmatprep.subr.mxu0 0.0
        %3418 = vmatpush1.msra.mxu0 0.0
        %3419 = vmatprep.subr.mxu0 0.0
        %3420 = vmatpush1.msra.mxu0 0.0
        %3421 = vmatprep.subr.mxu0 0.0
        %3422 = vmatpush1.msra.mxu0 0.0
        %3423 = vmatprep.subr.mxu0 0.0
        %3424 = vmatpush1.msra.mxu0 0.0
        %3425 = vmatprep.subr.mxu0 0.0
        %3426 = vmatpush1.msra.mxu0 0.0
        %3427 = vmatprep.subr.mxu0 0.0
        %3428 = vmatpush1.msra.mxu0 0.0
        %3429 = vmatprep.subr.mxu0 0.0
        %3430 = vmatpush1.msra.mxu0 0.0
        %3431 = vmatprep.subr.mxu0 0.0
        %3432 = vmatpush1.msra.mxu0 0.0
        %3433 = vmatprep.mubr.f32.mxu0 0.0
        %3434 = vmatmul.mubr.f32.gmra.mrb[0].mxu0 %v2238
        %v3435 = vpop.f32.mrb[0].mxu0
        %v3436 = vadd.f32 %v2233, %v3435
        %v3437 = vpop.f32.mrb[0].mxu0
        %v3438 = vadd.f32 %v2235, %v3437
        %3439 = vdwg.mxu0
        %vm3440 = vcmp.le.s32.totalorder %v676, 14
        %vm3441 = vcmp.le.s32.totalorder %v677, 14
        %vm3442 = vcmp.le.s32.totalorder %v678, 14
        %vm3443 = vcmp.le.s32.totalorder %v679, 14
        %vm3444 = vcmp.le.s32.totalorder %v680, 14
        %vm3445 = vcmp.le.s32.totalorder %v681, 14
        %vm3446 = vcmp.le.s32.totalorder %v682, 14
        %vm3447 = vcmp.le.s32.totalorder %v683, 14
        %vm3448 = vcmp.le.s32.totalorder %v684, 14
        %vm3449 = vcmp.le.s32.totalorder %v685, 14
        %vm3450 = vcmp.le.s32.totalorder %v686, 14
        %vm3451 = vcmp.le.s32.totalorder %v687, 14
        %vm3452 = vcmp.le.s32.totalorder %v688, 14
        %vm3453 = vcmp.le.s32.totalorder %v689, 14
        %vm3454 = vcmp.le.s32.totalorder %v690, 14
        %vm3455 = vcmp.le.s32.totalorder %v691, 14
        %vm3456 = vcmp.le.s32.totalorder %v692, 14
        %vm3457 = vcmp.le.s32.totalorder %v693, 14
        %vm3458 = vcmp.le.s32.totalorder %v694, 14
        %vm3459 = vcmp.le.s32.totalorder %v695, 14
        %vm3460 = vcmp.le.s32.totalorder %v696, 14
        %vm3461 = vcmp.le.s32.totalorder %v697, 14
        %vm3462 = vcmp.le.s32.totalorder %v698, 14
        %vm3463 = vcmp.le.s32.totalorder %v699, 14
        %vm3464 = vcmp.le.s32.totalorder %v700, 14
        %vm3465 = vcmp.le.s32.totalorder %v701, 14
        %vm3466 = vcmp.le.s32.totalorder %v702, 14
        %vm3467 = vcmp.le.s32.totalorder %v703, 14
        %vm3468 = vcmp.le.s32.totalorder %v704, 14
        %vm3469 = vcmp.le.s32.totalorder %v705, 14
        %vm3470 = vcmp.le.s32.totalorder %v706, 14
        %vm3471 = vcmp.le.s32.totalorder %v707, 14
        %3472 = vrot.lane.b32.xlu0 %v275, 127
        %v3473 = vpop.permute.xlu0 %3472
        %3474 = vrot.lane.b32.xlu0 %v758, 127
        %v3475 = vpop.permute.xlu0 %3474
        %3476 = vrot.lane.b32.xlu0 %v276, 127
        %v3477 = vpop.permute.xlu0 %3476
        %3478 = vrot.lane.b32.xlu0 %v759, 127
        %v3479 = vpop.permute.xlu0 %3478
        %3480 = vrot.lane.b32.xlu0 %v277, 127
        %v3481 = vpop.permute.xlu0 %3480
        %3482 = vrot.lane.b32.xlu0 %v760, 127
        %v3483 = vpop.permute.xlu0 %3482
        %3484 = vrot.lane.b32.xlu0 %v278, 127
        %v3485 = vpop.permute.xlu0 %3484
        %3486 = vrot.lane.b32.xlu0 %v761, 127
        %v3487 = vpop.permute.xlu0 %3486
        %3488 = vrot.lane.b32.xlu0 %v279, 127
        %v3489 = vpop.permute.xlu0 %3488
        %3490 = vrot.lane.b32.xlu0 %v762, 127
        %v3491 = vpop.permute.xlu0 %3490
        %3492 = vrot.lane.b32.xlu0 %v280, 127
        %v3493 = vpop.permute.xlu0 %3492
        %3494 = vrot.lane.b32.xlu0 %v763, 127
        %v3495 = vpop.permute.xlu0 %3494
        %3496 = vrot.lane.b32.xlu0 %v281, 127
        %v3497 = vpop.permute.xlu0 %3496
        %3498 = vrot.lane.b32.xlu0 %v764, 127
        %v3499 = vpop.permute.xlu0 %3498
        %3500 = vrot.lane.b32.xlu0 %v282, 127
        %v3501 = vpop.permute.xlu0 %3500
        %3502 = vrot.lane.b32.xlu0 %v765, 127
        %v3503 = vpop.permute.xlu0 %3502
        %3504 = vrot.lane.b32.xlu0 %v283, 127
        %v3505 = vpop.permute.xlu0 %3504
        %3506 = vrot.lane.b32.xlu0 %v766, 127
        %v3507 = vpop.permute.xlu0 %3506
        %3508 = vrot.lane.b32.xlu0 %v284, 127
        %v3509 = vpop.permute.xlu0 %3508
        %3510 = vrot.lane.b32.xlu0 %v767, 127
        %v3511 = vpop.permute.xlu0 %3510
        %3512 = vrot.lane.b32.xlu0 %v285, 127
        %v3513 = vpop.permute.xlu0 %3512
        %3514 = vrot.lane.b32.xlu0 %v768, 127
        %v3515 = vpop.permute.xlu0 %3514
        %3516 = vrot.lane.b32.xlu0 %v286, 127
        %v3517 = vpop.permute.xlu0 %3516
        %3518 = vrot.lane.b32.xlu0 %v769, 127
        %v3519 = vpop.permute.xlu0 %3518
        %3520 = vrot.lane.b32.xlu0 %v287, 127
        %v3521 = vpop.permute.xlu0 %3520
        %3522 = vrot.lane.b32.xlu0 %v770, 127
        %v3523 = vpop.permute.xlu0 %3522
        %3524 = vrot.lane.b32.xlu0 %v288, 127
        %v3525 = vpop.permute.xlu0 %3524
        %3526 = vrot.lane.b32.xlu0 %v771, 127
        %v3527 = vpop.permute.xlu0 %3526
        %3528 = vrot.lane.b32.xlu0 %v289, 127
        %v3529 = vpop.permute.xlu0 %3528
        %3530 = vrot.lane.b32.xlu0 %v772, 127
        %v3531 = vpop.permute.xlu0 %3530
        %3532 = vrot.lane.b32.xlu0 %v290, 127
        %v3533 = vpop.permute.xlu0 %3532
        %3534 = vrot.lane.b32.xlu0 %v773, 127
        %v3535 = vpop.permute.xlu0 %3534
        %vm3536 = vcmask 1039360
        %v3537 = vsel %vm3536, %v3473, %v3475
        %v3538 = vsel %vm3536, %v3475, %v3477
        %v3539 = vsel %vm3536, %v3477, %v3479
        %v3540 = vsel %vm3536, %v3479, %v3481
        %v3541 = vsel %vm3536, %v3481, %v3483
        %v3542 = vsel %vm3536, %v3483, %v3485
        %v3543 = vsel %vm3536, %v3485, %v3487
        %v3544 = vsel %vm3536, %v3487, %v3489
        %v3545 = vsel %vm3536, %v3489, %v3491
        %v3546 = vsel %vm3536, %v3491, %v3493
        %v3547 = vsel %vm3536, %v3493, %v3495
        %v3548 = vsel %vm3536, %v3495, %v3497
        %v3549 = vsel %vm3536, %v3497, %v3499
        %v3550 = vsel %vm3536, %v3499, %v3501
        %v3551 = vsel %vm3536, %v3501, %v3503
        %v3552 = vsel %vm3536, %v3503, %v3505
        %v3553 = vsel %vm3536, %v3505, %v3507
        %v3554 = vsel %vm3536, %v3507, %v3509
        %v3555 = vsel %vm3536, %v3509, %v3511
        %v3556 = vsel %vm3536, %v3511, %v3513
        %v3557 = vsel %vm3536, %v3513, %v3515
        %v3558 = vsel %vm3536, %v3515, %v3517
        %v3559 = vsel %vm3536, %v3517, %v3519
        %v3560 = vsel %vm3536, %v3519, %v3521
        %v3561 = vsel %vm3536, %v3521, %v3523
        %v3562 = vsel %vm3536, %v3523, %v3525
        %v3563 = vsel %vm3536, %v3525, %v3527
        %v3564 = vsel %vm3536, %v3527, %v3529
        %v3565 = vsel %vm3536, %v3529, %v3531
        %v3566 = vsel %vm3536, %v3531, %v3533
        %v3567 = vsel %vm3536, %v3533, %v3535
        %v3600 = vsel %vm3536, %v3535, 0.0
        %v3601 = vsel %vm3440, 1, 0
        %v3602 = vsel %vm3441, 1, 0
        %v3603 = vsel %vm3442, 1, 0
        %v3604 = vsel %vm3443, 1, 0
        %v3605 = vsel %vm3444, 1, 0
        %v3606 = vsel %vm3445, 1, 0
        %v3607 = vsel %vm3446, 1, 0
        %v3608 = vsel %vm3447, 1, 0
        %v3609 = vsel %vm3448, 1, 0
        %v3610 = vsel %vm3449, 1, 0
        %v3611 = vsel %vm3450, 1, 0
        %v3612 = vsel %vm3451, 1, 0
        %v3613 = vsel %vm3452, 1, 0
        %v3614 = vsel %vm3453, 1, 0
        %v3615 = vsel %vm3454, 1, 0
        %v3616 = vsel %vm3455, 1, 0
        %v3617 = vsel %vm3456, 1, 0
        %v3618 = vsel %vm3457, 1, 0
        %v3619 = vsel %vm3458, 1, 0
        %v3620 = vsel %vm3459, 1, 0
        %v3621 = vsel %vm3460, 1, 0
        %v3622 = vsel %vm3461, 1, 0
        %v3623 = vsel %vm3462, 1, 0
        %v3624 = vsel %vm3463, 1, 0
        %v3625 = vsel %vm3464, 1, 0
        %v3626 = vsel %vm3465, 1, 0
        %v3627 = vsel %vm3466, 1, 0
        %v3628 = vsel %vm3467, 1, 0
        %v3629 = vsel %vm3468, 1, 0
        %v3630 = vsel %vm3469, 1, 0
        %v3631 = vsel %vm3470, 1, 0
        %v3632 = vsel %vm3471, 1, 0
        %vm3633 = vcmp.eq.s32.totalorder %v3601, 1
        %vm3634 = vcmp.eq.s32.totalorder %v3602, 1
        %vm3635 = vcmp.eq.s32.totalorder %v3603, 1
        %vm3636 = vcmp.eq.s32.totalorder %v3604, 1
        %vm3637 = vcmp.eq.s32.totalorder %v3605, 1
        %vm3638 = vcmp.eq.s32.totalorder %v3606, 1
        %vm3639 = vcmp.eq.s32.totalorder %v3607, 1
        %vm3640 = vcmp.eq.s32.totalorder %v3608, 1
        %vm3641 = vcmp.eq.s32.totalorder %v3609, 1
        %vm3642 = vcmp.eq.s32.totalorder %v3610, 1
        %vm3643 = vcmp.eq.s32.totalorder %v3611, 1
        %vm3644 = vcmp.eq.s32.totalorder %v3612, 1
        %vm3645 = vcmp.eq.s32.totalorder %v3613, 1
        %vm3646 = vcmp.eq.s32.totalorder %v3614, 1
        %vm3647 = vcmp.eq.s32.totalorder %v3615, 1
        %vm3648 = vcmp.eq.s32.totalorder %v3616, 1
        %vm3649 = vcmp.eq.s32.totalorder %v3617, 1
        %vm3650 = vcmp.eq.s32.totalorder %v3618, 1
        %vm3651 = vcmp.eq.s32.totalorder %v3619, 1
        %vm3652 = vcmp.eq.s32.totalorder %v3620, 1
        %vm3653 = vcmp.eq.s32.totalorder %v3621, 1
        %vm3654 = vcmp.eq.s32.totalorder %v3622, 1
        %vm3655 = vcmp.eq.s32.totalorder %v3623, 1
        %vm3656 = vcmp.eq.s32.totalorder %v3624, 1
        %vm3657 = vcmp.eq.s32.totalorder %v3625, 1
        %vm3658 = vcmp.eq.s32.totalorder %v3626, 1
        %vm3659 = vcmp.eq.s32.totalorder %v3627, 1
        %vm3660 = vcmp.eq.s32.totalorder %v3628, 1
        %vm3661 = vcmp.eq.s32.totalorder %v3629, 1
        %vm3662 = vcmp.eq.s32.totalorder %v3630, 1
        %vm3663 = vcmp.eq.s32.totalorder %v3631, 1
        %vm3664 = vcmp.eq.s32.totalorder %v3632, 1
        %v3665 = vsel %vm3633, %v3537, 0.0
        %v3666 = vsel %vm3634, %v3538, 0.0
        %v3667 = vsel %vm3635, %v3539, 0.0
        %v3668 = vsel %vm3636, %v3540, 0.0
        %v3669 = vsel %vm3637, %v3541, 0.0
        %v3670 = vsel %vm3638, %v3542, 0.0
        %v3671 = vsel %vm3639, %v3543, 0.0
        %v3672 = vsel %vm3640, %v3544, 0.0
        %v3673 = vsel %vm3641, %v3545, 0.0
        %v3674 = vsel %vm3642, %v3546, 0.0
        %v3675 = vsel %vm3643, %v3547, 0.0
        %v3676 = vsel %vm3644, %v3548, 0.0
        %v3677 = vsel %vm3645, %v3549, 0.0
        %v3678 = vsel %vm3646, %v3550, 0.0
        %v3679 = vsel %vm3647, %v3551, 0.0
        %v3680 = vsel %vm3648, %v3552, 0.0
        %v3681 = vsel %vm3649, %v3553, 0.0
        %v3682 = vsel %vm3650, %v3554, 0.0
        %v3683 = vsel %vm3651, %v3555, 0.0
        %v3684 = vsel %vm3652, %v3556, 0.0
        %v3685 = vsel %vm3653, %v3557, 0.0
        %v3686 = vsel %vm3654, %v3558, 0.0
        %v3687 = vsel %vm3655, %v3559, 0.0
        %v3688 = vsel %vm3656, %v3560, 0.0
        %v3689 = vsel %vm3657, %v3561, 0.0
        %v3690 = vsel %vm3658, %v3562, 0.0
        %v3691 = vsel %vm3659, %v3563, 0.0
        %v3692 = vsel %vm3660, %v3564, 0.0
        %v3693 = vsel %vm3661, %v3565, 0.0
        %v3694 = vsel %vm3662, %v3566, 0.0
        %v3695 = vsel %vm3663, %v3567, 0.0
        %v3696 = vsel %vm3664, %v3600, 0.0
        %s3697 = scalar_lea.vmem %s1, 16
        %v3698 = vld [vmem:[%s3697] sm:$0xff]
        %v3700 = vsel %vm1000, %v3698, 0
        %v3703 = vsel %vm1004, %v3665, 0
        %v3706 = vsel %vm1004, %v3666, 0
        %v3709 = vsel %vm1004, %v3667, 0
        %v3712 = vsel %vm1004, %v3668, 0
        %v3715 = vsel %vm1004, %v3669, 0
        %v3718 = vsel %vm1004, %v3670, 0
        %v3721 = vsel %vm1004, %v3671, 0
        %v3724 = vsel %vm1004, %v3672, 0
        %v3727 = vsel %vm1004, %v3673, 0
        %v3730 = vsel %vm1004, %v3674, 0
        %v3733 = vsel %vm1004, %v3675, 0
        %v3736 = vsel %vm1004, %v3676, 0
        %v3739 = vsel %vm1004, %v3677, 0
        %v3742 = vsel %vm1004, %v3678, 0
        %v3745 = vsel %vm1004, %v3679, 0
        %v3748 = vsel %vm1004, %v3680, 0
        %v3751 = vsel %vm1004, %v3681, 0
        %v3754 = vsel %vm1004, %v3682, 0
        %v3757 = vsel %vm1004, %v3683, 0
        %v3760 = vsel %vm1004, %v3684, 0
        %v3763 = vsel %vm1004, %v3685, 0
        %v3766 = vsel %vm1004, %v3686, 0
        %v3769 = vsel %vm1004, %v3687, 0
        %v3772 = vsel %vm1004, %v3688, 0
        %v3775 = vsel %vm1004, %v3689, 0
        %v3778 = vsel %vm1004, %v3690, 0
        %v3781 = vsel %vm1004, %v3691, 0
        %v3784 = vsel %vm1004, %v3692, 0
        %v3787 = vsel %vm1004, %v3693, 0
        %v3790 = vsel %vm1004, %v3694, 0
        %v3793 = vsel %vm1004, %v3695, 0
        %v3796 = vsel %vm1004, %v3696, 0
        %3798 = vmatprep.subr.mxu0 %v3706
        %3799 = vmatpush1.msra.mxu0 %v3703
        %3800 = vmatprep.subr.mxu0 0.0
        %3801 = vmatpush1.msra.mxu0 0.0
        %3802 = vmatprep.subr.mxu0 0.0
        %3803 = vmatpush1.msra.mxu0 0.0
        %3804 = vmatprep.subr.mxu0 0.0
        %3805 = vmatpush1.msra.mxu0 0.0
        %3806 = vmatprep.subr.mxu0 0.0
        %3807 = vmatpush1.msra.mxu0 0.0
        %3808 = vmatprep.subr.mxu0 0.0
        %3809 = vmatpush1.msra.mxu0 0.0
        %3810 = vmatprep.subr.mxu0 0.0
        %3811 = vmatpush1.msra.mxu0 0.0
        %3812 = vmatprep.subr.mxu0 0.0
        %3813 = vmatpush1.msra.mxu0 0.0
        %3814 = vmatprep.subr.mxu0 0.0
        %3815 = vmatpush1.msra.mxu0 0.0
        %3816 = vmatprep.subr.mxu0 0.0
        %3817 = vmatpush1.msra.mxu0 0.0
        %3818 = vmatprep.subr.mxu0 0.0
        %3819 = vmatpush1.msra.mxu0 0.0
        %3820 = vmatprep.subr.mxu0 0.0
        %3821 = vmatpush1.msra.mxu0 0.0
        %3822 = vmatprep.subr.mxu0 0.0
        %3823 = vmatpush1.msra.mxu0 0.0
        %3824 = vmatprep.subr.mxu0 0.0
        %3825 = vmatpush1.msra.mxu0 0.0
        %3826 = vmatprep.subr.mxu0 0.0
        %3827 = vmatpush1.msra.mxu0 0.0
        %3828 = vmatprep.subr.mxu0 0.0
        %3829 = vmatpush1.msra.mxu0 0.0
        %3830 = vmatprep.subr.mxu0 0.0
        %3831 = vmatpush1.msra.mxu0 0.0
        %3832 = vmatprep.subr.mxu0 0.0
        %3833 = vmatpush1.msra.mxu0 0.0
        %3834 = vmatprep.subr.mxu0 0.0
        %3835 = vmatpush1.msra.mxu0 0.0
        %3836 = vmatprep.subr.mxu0 0.0
        %3837 = vmatpush1.msra.mxu0 0.0
        %3838 = vmatprep.subr.mxu0 0.0
        %3839 = vmatpush1.msra.mxu0 0.0
        %3840 = vmatprep.subr.mxu0 0.0
        %3841 = vmatpush1.msra.mxu0 0.0
        %3842 = vmatprep.subr.mxu0 0.0
        %3843 = vmatpush1.msra.mxu0 0.0
        %3844 = vmatprep.subr.mxu0 0.0
        %3845 = vmatpush1.msra.mxu0 0.0
        %3846 = vmatprep.subr.mxu0 0.0
        %3847 = vmatpush1.msra.mxu0 0.0
        %3848 = vmatprep.subr.mxu0 0.0
        %3849 = vmatpush1.msra.mxu0 0.0
        %3850 = vmatprep.subr.mxu0 0.0
        %3851 = vmatpush1.msra.mxu0 0.0
        %3852 = vmatprep.subr.mxu0 0.0
        %3853 = vmatpush1.msra.mxu0 0.0
        %3854 = vmatprep.subr.mxu0 0.0
        %3855 = vmatpush1.msra.mxu0 0.0
        %3856 = vmatprep.subr.mxu0 0.0
        %3857 = vmatpush1.msra.mxu0 0.0
        %3858 = vmatprep.subr.mxu0 0.0
        %3859 = vmatpush1.msra.mxu0 0.0
        %3860 = vmatprep.subr.mxu0 0.0
        %3861 = vmatpush1.msra.mxu0 0.0
        %3862 = vmatprep.mubr.f32.mxu0 0.0
        %3863 = vmatmul.mubr.f32.gmra.mrb[0].mxu0 %v3700
        %v3864 = vpop.f32.mrb[0].mxu0
        %v3865 = vadd.f32 0.0, %v3864
        %v3866 = vpop.f32.mrb[0].mxu0
        %v3867 = vadd.f32 0.0, %v3866
        %3868 = vdwg.mxu0
        %3869 = vmatprep.subr.mxu0 %v3712
        %3870 = vmatpush1.msra.mxu0 %v3709
        %3871 = vmatprep.subr.mxu0 0.0
        %3872 = vmatpush1.msra.mxu0 0.0
        %3873 = vmatprep.subr.mxu0 0.0
        %3874 = vmatpush1.msra.mxu0 0.0
        %3875 = vmatprep.subr.mxu0 0.0
        %3876 = vmatpush1.msra.mxu0 0.0
        %3877 = vmatprep.subr.mxu0 0.0
        %3878 = vmatpush1.msra.mxu0 0.0
        %3879 = vmatprep.subr.mxu0 0.0
        %3880 = vmatpush1.msra.mxu0 0.0
        %3881 = vmatprep.subr.mxu0 0.0
        %3882 = vmatpush1.msra.mxu0 0.0
        %3883 = vmatprep.subr.mxu0 0.0
        %3884 = vmatpush1.msra.mxu0 0.0
        %3885 = vmatprep.subr.mxu0 0.0
        %3886 = vmatpush1.msra.mxu0 0.0
        %3887 = vmatprep.subr.mxu0 0.0
        %3888 = vmatpush1.msra.mxu0 0.0
        %3889 = vmatprep.subr.mxu0 0.0
        %3890 = vmatpush1.msra.mxu0 0.0
        %3891 = vmatprep.subr.mxu0 0.0
        %3892 = vmatpush1.msra.mxu0 0.0
        %3893 = vmatprep.subr.mxu0 0.0
        %3894 = vmatpush1.msra.mxu0 0.0
        %3895 = vmatprep.subr.mxu0 0.0
        %3896 = vmatpush1.msra.mxu0 0.0
        %3897 = vmatprep.subr.mxu0 0.0
        %3898 = vmatpush1.msra.mxu0 0.0
        %3899 = vmatprep.subr.mxu0 0.0
        %3900 = vmatpush1.msra.mxu0 0.0
        %3901 = vmatprep.subr.mxu0 0.0
        %3902 = vmatpush1.msra.mxu0 0.0
        %3903 = vmatprep.subr.mxu0 0.0
        %3904 = vmatpush1.msra.mxu0 0.0
        %3905 = vmatprep.subr.mxu0 0.0
        %3906 = vmatpush1.msra.mxu0 0.0
        %3907 = vmatprep.subr.mxu0 0.0
        %3908 = vmatpush1.msra.mxu0 0.0
        %3909 = vmatprep.subr.mxu0 0.0
        %3910 = vmatpush1.msra.mxu0 0.0
        %3911 = vmatprep.subr.mxu0 0.0
        %3912 = vmatpush1.msra.mxu0 0.0
        %3913 = vmatprep.subr.mxu0 0.0
        %3914 = vmatpush1.msra.mxu0 0.0
        %3915 = vmatprep.subr.mxu0 0.0
        %3916 = vmatpush1.msra.mxu0 0.0
        %3917 = vmatprep.subr.mxu0 0.0
        %3918 = vmatpush1.msra.mxu0 0.0
        %3919 = vmatprep.subr.mxu0 0.0
        %3920 = vmatpush1.msra.mxu0 0.0
        %3921 = vmatprep.subr.mxu0 0.0
        %3922 = vmatpush1.msra.mxu0 0.0
        %3923 = vmatprep.subr.mxu0 0.0
        %3924 = vmatpush1.msra.mxu0 0.0
        %3925 = vmatprep.subr.mxu0 0.0
        %3926 = vmatpush1.msra.mxu0 0.0
        %3927 = vmatprep.subr.mxu0 0.0
        %3928 = vmatpush1.msra.mxu0 0.0
        %3929 = vmatprep.subr.mxu0 0.0
        %3930 = vmatpush1.msra.mxu0 0.0
        %3931 = vmatprep.subr.mxu0 0.0
        %3932 = vmatpush1.msra.mxu0 0.0
        %3933 = vmatprep.mubr.f32.mxu0 0.0
        %3934 = vmatmul.mubr.f32.gmra.mrb[0].mxu0 %v3700
        %v3935 = vpop.f32.mrb[0].mxu0
        %v3936 = vadd.f32 0.0, %v3935
        %v3937 = vpop.f32.mrb[0].mxu0
        %v3938 = vadd.f32 0.0, %v3937
        %3939 = vdwg.mxu0
        %3940 = vmatprep.subr.mxu0 %v3718
        %3941 = vmatpush1.msra.mxu0 %v3715
        %3942 = vmatprep.subr.mxu0 0.0
        %3943 = vmatpush1.msra.mxu0 0.0
        %3944 = vmatprep.subr.mxu0 0.0
        %3945 = vmatpush1.msra.mxu0 0.0
        %3946 = vmatprep.subr.mxu0 0.0
        %3947 = vmatpush1.msra.mxu0 0.0
        %3948 = vmatprep.subr.mxu0 0.0
        %3949 = vmatpush1.msra.mxu0 0.0
        %3950 = vmatprep.subr.mxu0 0.0
        %3951 = vmatpush1.msra.mxu0 0.0
        %3952 = vmatprep.subr.mxu0 0.0
        %3953 = vmatpush1.msra.mxu0 0.0
        %3954 = vmatprep.subr.mxu0 0.0
        %3955 = vmatpush1.msra.mxu0 0.0
        %3956 = vmatprep.subr.mxu0 0.0
        %3957 = vmatpush1.msra.mxu0 0.0
        %3958 = vmatprep.subr.mxu0 0.0
        %3959 = vmatpush1.msra.mxu0 0.0
        %3960 = vmatprep.subr.mxu0 0.0
        %3961 = vmatpush1.msra.mxu0 0.0
        %3962 = vmatprep.subr.mxu0 0.0
        %3963 = vmatpush1.msra.mxu0 0.0
        %3964 = vmatprep.subr.mxu0 0.0
        %3965 = vmatpush1.msra.mxu0 0.0
        %3966 = vmatprep.subr.mxu0 0.0
        %3967 = vmatpush1.msra.mxu0 0.0
        %3968 = vmatprep.subr.mxu0 0.0
        %3969 = vmatpush1.msra.mxu0 0.0
        %3970 = vmatprep.subr.mxu0 0.0
        %3971 = vmatpush1.msra.mxu0 0.0
        %3972 = vmatprep.subr.mxu0 0.0
        %3973 = vmatpush1.msra.mxu0 0.0
        %3974 = vmatprep.subr.mxu0 0.0
        %3975 = vmatpush1.msra.mxu0 0.0
        %3976 = vmatprep.subr.mxu0 0.0
        %3977 = vmatpush1.msra.mxu0 0.0
        %3978 = vmatprep.subr.mxu0 0.0
        %3979 = vmatpush1.msra.mxu0 0.0
        %3980 = vmatprep.subr.mxu0 0.0
        %3981 = vmatpush1.msra.mxu0 0.0
        %3982 = vmatprep.subr.mxu0 0.0
        %3983 = vmatpush1.msra.mxu0 0.0
        %3984 = vmatprep.subr.mxu0 0.0
        %3985 = vmatpush1.msra.mxu0 0.0
        %3986 = vmatprep.subr.mxu0 0.0
        %3987 = vmatpush1.msra.mxu0 0.0
        %3988 = vmatprep.subr.mxu0 0.0
        %3989 = vmatpush1.msra.mxu0 0.0
        %3990 = vmatprep.subr.mxu0 0.0
        %3991 = vmatpush1.msra.mxu0 0.0
        %3992 = vmatprep.subr.mxu0 0.0
        %3993 = vmatpush1.msra.mxu0 0.0
        %3994 = vmatprep.subr.mxu0 0.0
        %3995 = vmatpush1.msra.mxu0 0.0
        %3996 = vmatprep.subr.mxu0 0.0
        %3997 = vmatpush1.msra.mxu0 0.0
        %3998 = vmatprep.subr.mxu0 0.0
        %3999 = vmatpush1.msra.mxu0 0.0
        %4000 = vmatprep.subr.mxu0 0.0
        %4001 = vmatpush1.msra.mxu0 0.0
        %4002 = vmatprep.subr.mxu0 0.0
        %4003 = vmatpush1.msra.mxu0 0.0
        %4004 = vmatprep.mubr.f32.mxu0 0.0
        %4005 = vmatmul.mubr.f32.gmra.mrb[0].mxu0 %v3700
        %v4006 = vpop.f32.mrb[0].mxu0
        %v4007 = vadd.f32 0.0, %v4006
        %v4008 = vpop.f32.mrb[0].mxu0
        %v4009 = vadd.f32 0.0, %v4008
        %4010 = vdwg.mxu0
        %4011 = vmatprep.subr.mxu0 %v3724
        %4012 = vmatpush1.msra.mxu0 %v3721
        %4013 = vmatprep.subr.mxu0 0.0
        %4014 = vmatpush1.msra.mxu0 0.0
        %4015 = vmatprep.subr.mxu0 0.0
        %4016 = vmatpush1.msra.mxu0 0.0
        %4017 = vmatprep.subr.mxu0 0.0
        %4018 = vmatpush1.msra.mxu0 0.0
        %4019 = vmatprep.subr.mxu0 0.0
        %4020 = vmatpush1.msra.mxu0 0.0
        %4021 = vmatprep.subr.mxu0 0.0
        %4022 = vmatpush1.msra.mxu0 0.0
        %4023 = vmatprep.subr.mxu0 0.0
        %4024 = vmatpush1.msra.mxu0 0.0
        %4025 = vmatprep.subr.mxu0 0.0
        %4026 = vmatpush1.msra.mxu0 0.0
        %4027 = vmatprep.subr.mxu0 0.0
        %4028 = vmatpush1.msra.mxu0 0.0
        %4029 = vmatprep.subr.mxu0 0.0
        %4030 = vmatpush1.msra.mxu0 0.0
        %4031 = vmatprep.subr.mxu0 0.0
        %4032 = vmatpush1.msra.mxu0 0.0
        %4033 = vmatprep.subr.mxu0 0.0
        %4034 = vmatpush1.msra.mxu0 0.0
        %4035 = vmatprep.subr.mxu0 0.0
        %4036 = vmatpush1.msra.mxu0 0.0
        %4037 = vmatprep.subr.mxu0 0.0
        %4038 = vmatpush1.msra.mxu0 0.0
        %4039 = vmatprep.subr.mxu0 0.0
        %4040 = vmatpush1.msra.mxu0 0.0
        %4041 = vmatprep.subr.mxu0 0.0
        %4042 = vmatpush1.msra.mxu0 0.0
        %4043 = vmatprep.subr.mxu0 0.0
        %4044 = vmatpush1.msra.mxu0 0.0
        %4045 = vmatprep.subr.mxu0 0.0
        %4046 = vmatpush1.msra.mxu0 0.0
        %4047 = vmatprep.subr.mxu0 0.0
        %4048 = vmatpush1.msra.mxu0 0.0
        %4049 = vmatprep.subr.mxu0 0.0
        %4050 = vmatpush1.msra.mxu0 0.0
        %4051 = vmatprep.subr.mxu0 0.0
        %4052 = vmatpush1.msra.mxu0 0.0
        %4053 = vmatprep.subr.mxu0 0.0
        %4054 = vmatpush1.msra.mxu0 0.0
        %4055 = vmatprep.subr.mxu0 0.0
        %4056 = vmatpush1.msra.mxu0 0.0
        %4057 = vmatprep.subr.mxu0 0.0
        %4058 = vmatpush1.msra.mxu0 0.0
        %4059 = vmatprep.subr.mxu0 0.0
        %4060 = vmatpush1.msra.mxu0 0.0
        %4061 = vmatprep.subr.mxu0 0.0
        %4062 = vmatpush1.msra.mxu0 0.0
        %4063 = vmatprep.subr.mxu0 0.0
        %4064 = vmatpush1.msra.mxu0 0.0
        %4065 = vmatprep.subr.mxu0 0.0
        %4066 = vmatpush1.msra.mxu0 0.0
        %4067 = vmatprep.subr.mxu0 0.0
        %4068 = vmatpush1.msra.mxu0 0.0
        %4069 = vmatprep.subr.mxu0 0.0
        %4070 = vmatpush1.msra.mxu0 0.0
        %4071 = vmatprep.subr.mxu0 0.0
        %4072 = vmatpush1.msra.mxu0 0.0
        %4073 = vmatprep.subr.mxu0 0.0
        %4074 = vmatpush1.msra.mxu0 0.0
        %4075 = vmatprep.mubr.f32.mxu0 0.0
        %4076 = vmatmul.mubr.f32.gmra.mrb[0].mxu0 %v3700
        %v4077 = vpop.f32.mrb[0].mxu0
        %v4078 = vadd.f32 0.0, %v4077
        %v4079 = vpop.f32.mrb[0].mxu0
        %v4080 = vadd.f32 0.0, %v4079
        %4081 = vdwg.mxu0
        %4082 = vmatprep.subr.mxu0 %v3730
        %4083 = vmatpush1.msra.mxu0 %v3727
        %4084 = vmatprep.subr.mxu0 0.0
        %4085 = vmatpush1.msra.mxu0 0.0
        %4086 = vmatprep.subr.mxu0 0.0
        %4087 = vmatpush1.msra.mxu0 0.0
        %4088 = vmatprep.subr.mxu0 0.0
        %4089 = vmatpush1.msra.mxu0 0.0
        %4090 = vmatprep.subr.mxu0 0.0
        %4091 = vmatpush1.msra.mxu0 0.0
        %4092 = vmatprep.subr.mxu0 0.0
        %4093 = vmatpush1.msra.mxu0 0.0
        %4094 = vmatprep.subr.mxu0 0.0
        %4095 = vmatpush1.msra.mxu0 0.0
        %4096 = vmatprep.subr.mxu0 0.0
        %4097 = vmatpush1.msra.mxu0 0.0
        %4098 = vmatprep.subr.mxu0 0.0
        %4099 = vmatpush1.msra.mxu0 0.0
        %4100 = vmatprep.subr.mxu0 0.0
        %4101 = vmatpush1.msra.mxu0 0.0
        %4102 = vmatprep.subr.mxu0 0.0
        %4103 = vmatpush1.msra.mxu0 0.0
        %4104 = vmatprep.subr.mxu0 0.0
        %4105 = vmatpush1.msra.mxu0 0.0
        %4106 = vmatprep.subr.mxu0 0.0
        %4107 = vmatpush1.msra.mxu0 0.0
        %4108 = vmatprep.subr.mxu0 0.0
        %4109 = vmatpush1.msra.mxu0 0.0
        %4110 = vmatprep.subr.mxu0 0.0
        %4111 = vmatpush1.msra.mxu0 0.0
        %4112 = vmatprep.subr.mxu0 0.0
        %4113 = vmatpush1.msra.mxu0 0.0
        %4114 = vmatprep.subr.mxu0 0.0
        %4115 = vmatpush1.msra.mxu0 0.0
        %4116 = vmatprep.subr.mxu0 0.0
        %4117 = vmatpush1.msra.mxu0 0.0
        %4118 = vmatprep.subr.mxu0 0.0
        %4119 = vmatpush1.msra.mxu0 0.0
        %4120 = vmatprep.subr.mxu0 0.0
        %4121 = vmatpush1.msra.mxu0 0.0
        %4122 = vmatprep.subr.mxu0 0.0
        %4123 = vmatpush1.msra.mxu0 0.0
        %4124 = vmatprep.subr.mxu0 0.0
        %4125 = vmatpush1.msra.mxu0 0.0
        %4126 = vmatprep.subr.mxu0 0.0
        %4127 = vmatpush1.msra.mxu0 0.0
        %4128 = vmatprep.subr.mxu0 0.0
        %4129 = vmatpush1.msra.mxu0 0.0
        %4130 = vmatprep.subr.mxu0 0.0
        %4131 = vmatpush1.msra.mxu0 0.0
        %4132 = vmatprep.subr.mxu0 0.0
        %4133 = vmatpush1.msra.mxu0 0.0
        %4134 = vmatprep.subr.mxu0 0.0
        %4135 = vmatpush1.msra.mxu0 0.0
        %4136 = vmatprep.subr.mxu0 0.0
        %4137 = vmatpush1.msra.mxu0 0.0
        %4138 = vmatprep.subr.mxu0 0.0
        %4139 = vmatpush1.msra.mxu0 0.0
        %4140 = vmatprep.subr.mxu0 0.0
        %4141 = vmatpush1.msra.mxu0 0.0
        %4142 = vmatprep.subr.mxu0 0.0
        %4143 = vmatpush1.msra.mxu0 0.0
        %4144 = vmatprep.subr.mxu0 0.0
        %4145 = vmatpush1.msra.mxu0 0.0
        %4146 = vmatprep.mubr.f32.mxu0 0.0
        %4147 = vmatmul.mubr.f32.gmra.mrb[0].mxu0 %v3700
        %v4148 = vpop.f32.mrb[0].mxu0
        %v4149 = vadd.f32 0.0, %v4148
        %v4150 = vpop.f32.mrb[0].mxu0
        %v4151 = vadd.f32 0.0, %v4150
        %4152 = vdwg.mxu0
        %4153 = vmatprep.subr.mxu0 %v3736
        %4154 = vmatpush1.msra.mxu0 %v3733
        %4155 = vmatprep.subr.mxu0 0.0
        %4156 = vmatpush1.msra.mxu0 0.0
        %4157 = vmatprep.subr.mxu0 0.0
        %4158 = vmatpush1.msra.mxu0 0.0
        %4159 = vmatprep.subr.mxu0 0.0
        %4160 = vmatpush1.msra.mxu0 0.0
        %4161 = vmatprep.subr.mxu0 0.0
        %4162 = vmatpush1.msra.mxu0 0.0
        %4163 = vmatprep.subr.mxu0 0.0
        %4164 = vmatpush1.msra.mxu0 0.0
        %4165 = vmatprep.subr.mxu0 0.0
        %4166 = vmatpush1.msra.mxu0 0.0
        %4167 = vmatprep.subr.mxu0 0.0
        %4168 = vmatpush1.msra.mxu0 0.0
        %4169 = vmatprep.subr.mxu0 0.0
        %4170 = vmatpush1.msra.mxu0 0.0
        %4171 = vmatprep.subr.mxu0 0.0
        %4172 = vmatpush1.msra.mxu0 0.0
        %4173 = vmatprep.subr.mxu0 0.0
        %4174 = vmatpush1.msra.mxu0 0.0
        %4175 = vmatprep.subr.mxu0 0.0
        %4176 = vmatpush1.msra.mxu0 0.0
        %4177 = vmatprep.subr.mxu0 0.0
        %4178 = vmatpush1.msra.mxu0 0.0
        %4179 = vmatprep.subr.mxu0 0.0
        %4180 = vmatpush1.msra.mxu0 0.0
        %4181 = vmatprep.subr.mxu0 0.0
        %4182 = vmatpush1.msra.mxu0 0.0
        %4183 = vmatprep.subr.mxu0 0.0
        %4184 = vmatpush1.msra.mxu0 0.0
        %4185 = vmatprep.subr.mxu0 0.0
        %4186 = vmatpush1.msra.mxu0 0.0
        %4187 = vmatprep.subr.mxu0 0.0
        %4188 = vmatpush1.msra.mxu0 0.0
        %4189 = vmatprep.subr.mxu0 0.0
        %4190 = vmatpush1.msra.mxu0 0.0
        %4191 = vmatprep.subr.mxu0 0.0
        %4192 = vmatpush1.msra.mxu0 0.0
        %4193 = vmatprep.subr.mxu0 0.0
        %4194 = vmatpush1.msra.mxu0 0.0
        %4195 = vmatprep.subr.mxu0 0.0
        %4196 = vmatpush1.msra.mxu0 0.0
        %4197 = vmatprep.subr.mxu0 0.0
        %4198 = vmatpush1.msra.mxu0 0.0
        %4199 = vmatprep.subr.mxu0 0.0
        %4200 = vmatpush1.msra.mxu0 0.0
        %4201 = vmatprep.subr.mxu0 0.0
        %4202 = vmatpush1.msra.mxu0 0.0
        %4203 = vmatprep.subr.mxu0 0.0
        %4204 = vmatpush1.msra.mxu0 0.0
        %4205 = vmatprep.subr.mxu0 0.0
        %4206 = vmatpush1.msra.mxu0 0.0
        %4207 = vmatprep.subr.mxu0 0.0
        %4208 = vmatpush1.msra.mxu0 0.0
        %4209 = vmatprep.subr.mxu0 0.0
        %4210 = vmatpush1.msra.mxu0 0.0
        %4211 = vmatprep.subr.mxu0 0.0
        %4212 = vmatpush1.msra.mxu0 0.0
        %4213 = vmatprep.subr.mxu0 0.0
        %4214 = vmatpush1.msra.mxu0 0.0
        %4215 = vmatprep.subr.mxu0 0.0
        %4216 = vmatpush1.msra.mxu0 0.0
        %4217 = vmatprep.mubr.f32.mxu0 0.0
        %4218 = vmatmul.mubr.f32.gmra.mrb[0].mxu0 %v3700
        %v4219 = vpop.f32.mrb[0].mxu0
        %v4220 = vadd.f32 0.0, %v4219
        %v4221 = vpop.f32.mrb[0].mxu0
        %v4222 = vadd.f32 0.0, %v4221
        %4223 = vdwg.mxu0
        %4224 = vmatprep.subr.mxu0 %v3742
        %4225 = vmatpush1.msra.mxu0 %v3739
        %4226 = vmatprep.subr.mxu0 0.0
        %4227 = vmatpush1.msra.mxu0 0.0
        %4228 = vmatprep.subr.mxu0 0.0
        %4229 = vmatpush1.msra.mxu0 0.0
        %4230 = vmatprep.subr.mxu0 0.0
        %4231 = vmatpush1.msra.mxu0 0.0
        %4232 = vmatprep.subr.mxu0 0.0
        %4233 = vmatpush1.msra.mxu0 0.0
        %4234 = vmatprep.subr.mxu0 0.0
        %4235 = vmatpush1.msra.mxu0 0.0
        %4236 = vmatprep.subr.mxu0 0.0
        %4237 = vmatpush1.msra.mxu0 0.0
        %4238 = vmatprep.subr.mxu0 0.0
        %4239 = vmatpush1.msra.mxu0 0.0
        %4240 = vmatprep.subr.mxu0 0.0
        %4241 = vmatpush1.msra.mxu0 0.0
        %4242 = vmatprep.subr.mxu0 0.0
        %4243 = vmatpush1.msra.mxu0 0.0
        %4244 = vmatprep.subr.mxu0 0.0
        %4245 = vmatpush1.msra.mxu0 0.0
        %4246 = vmatprep.subr.mxu0 0.0
        %4247 = vmatpush1.msra.mxu0 0.0
        %4248 = vmatprep.subr.mxu0 0.0
        %4249 = vmatpush1.msra.mxu0 0.0
        %4250 = vmatprep.subr.mxu0 0.0
        %4251 = vmatpush1.msra.mxu0 0.0
        %4252 = vmatprep.subr.mxu0 0.0
        %4253 = vmatpush1.msra.mxu0 0.0
        %4254 = vmatprep.subr.mxu0 0.0
        %4255 = vmatpush1.msra.mxu0 0.0
        %4256 = vmatprep.subr.mxu0 0.0
        %4257 = vmatpush1.msra.mxu0 0.0
        %4258 = vmatprep.subr.mxu0 0.0
        %4259 = vmatpush1.msra.mxu0 0.0
        %4260 = vmatprep.subr.mxu0 0.0
        %4261 = vmatpush1.msra.mxu0 0.0
        %4262 = vmatprep.subr.mxu0 0.0
        %4263 = vmatpush1.msra.mxu0 0.0
        %4264 = vmatprep.subr.mxu0 0.0
        %4265 = vmatpush1.msra.mxu0 0.0
        %4266 = vmatprep.subr.mxu0 0.0
        %4267 = vmatpush1.msra.mxu0 0.0
        %4268 = vmatprep.subr.mxu0 0.0
        %4269 = vmatpush1.msra.mxu0 0.0
        %4270 = vmatprep.subr.mxu0 0.0
        %4271 = vmatpush1.msra.mxu0 0.0
        %4272 = vmatprep.subr.mxu0 0.0
        %4273 = vmatpush1.msra.mxu0 0.0
        %4274 = vmatprep.subr.mxu0 0.0
        %4275 = vmatpush1.msra.mxu0 0.0
        %4276 = vmatprep.subr.mxu0 0.0
        %4277 = vmatpush1.msra.mxu0 0.0
        %4278 = vmatprep.subr.mxu0 0.0
        %4279 = vmatpush1.msra.mxu0 0.0
        %4280 = vmatprep.subr.mxu0 0.0
        %4281 = vmatpush1.msra.mxu0 0.0
        %4282 = vmatprep.subr.mxu0 0.0
        %4283 = vmatpush1.msra.mxu0 0.0
        %4284 = vmatprep.subr.mxu0 0.0
        %4285 = vmatpush1.msra.mxu0 0.0
        %4286 = vmatprep.subr.mxu0 0.0
        %4287 = vmatpush1.msra.mxu0 0.0
        %4288 = vmatprep.mubr.f32.mxu0 0.0
        %4289 = vmatmul.mubr.f32.gmra.mrb[0].mxu0 %v3700
        %v4290 = vpop.f32.mrb[0].mxu0
        %v4291 = vadd.f32 0.0, %v4290
        %v4292 = vpop.f32.mrb[0].mxu0
        %v4293 = vadd.f32 0.0, %v4292
        %4294 = vdwg.mxu0
        %4295 = vmatprep.subr.mxu0 %v3748
        %4296 = vmatpush1.msra.mxu0 %v3745
        %4297 = vmatprep.subr.mxu0 0.0
        %4298 = vmatpush1.msra.mxu0 0.0
        %4299 = vmatprep.subr.mxu0 0.0
        %4300 = vmatpush1.msra.mxu0 0.0
        %4301 = vmatprep.subr.mxu0 0.0
        %4302 = vmatpush1.msra.mxu0 0.0
        %4303 = vmatprep.subr.mxu0 0.0
        %4304 = vmatpush1.msra.mxu0 0.0
        %4305 = vmatprep.subr.mxu0 0.0
        %4306 = vmatpush1.msra.mxu0 0.0
        %4307 = vmatprep.subr.mxu0 0.0
        %4308 = vmatpush1.msra.mxu0 0.0
        %4309 = vmatprep.subr.mxu0 0.0
        %4310 = vmatpush1.msra.mxu0 0.0
        %4311 = vmatprep.subr.mxu0 0.0
        %4312 = vmatpush1.msra.mxu0 0.0
        %4313 = vmatprep.subr.mxu0 0.0
        %4314 = vmatpush1.msra.mxu0 0.0
        %4315 = vmatprep.subr.mxu0 0.0
        %4316 = vmatpush1.msra.mxu0 0.0
        %4317 = vmatprep.subr.mxu0 0.0
        %4318 = vmatpush1.msra.mxu0 0.0
        %4319 = vmatprep.subr.mxu0 0.0
        %4320 = vmatpush1.msra.mxu0 0.0
        %4321 = vmatprep.subr.mxu0 0.0
        %4322 = vmatpush1.msra.mxu0 0.0
        %4323 = vmatprep.subr.mxu0 0.0
        %4324 = vmatpush1.msra.mxu0 0.0
        %4325 = vmatprep.subr.mxu0 0.0
        %4326 = vmatpush1.msra.mxu0 0.0
        %4327 = vmatprep.subr.mxu0 0.0
        %4328 = vmatpush1.msra.mxu0 0.0
        %4329 = vmatprep.subr.mxu0 0.0
        %4330 = vmatpush1.msra.mxu0 0.0
        %4331 = vmatprep.subr.mxu0 0.0
        %4332 = vmatpush1.msra.mxu0 0.0
        %4333 = vmatprep.subr.mxu0 0.0
        %4334 = vmatpush1.msra.mxu0 0.0
        %4335 = vmatprep.subr.mxu0 0.0
        %4336 = vmatpush1.msra.mxu0 0.0
        %4337 = vmatprep.subr.mxu0 0.0
        %4338 = vmatpush1.msra.mxu0 0.0
        %4339 = vmatprep.subr.mxu0 0.0
        %4340 = vmatpush1.msra.mxu0 0.0
        %4341 = vmatprep.subr.mxu0 0.0
        %4342 = vmatpush1.msra.mxu0 0.0
        %4343 = vmatprep.subr.mxu0 0.0
        %4344 = vmatpush1.msra.mxu0 0.0
        %4345 = vmatprep.subr.mxu0 0.0
        %4346 = vmatpush1.msra.mxu0 0.0
        %4347 = vmatprep.subr.mxu0 0.0
        %4348 = vmatpush1.msra.mxu0 0.0
        %4349 = vmatprep.subr.mxu0 0.0
        %4350 = vmatpush1.msra.mxu0 0.0
        %4351 = vmatprep.subr.mxu0 0.0
        %4352 = vmatpush1.msra.mxu0 0.0
        %4353 = vmatprep.subr.mxu0 0.0
        %4354 = vmatpush1.msra.mxu0 0.0
        %4355 = vmatprep.subr.mxu0 0.0
        %4356 = vmatpush1.msra.mxu0 0.0
        %4357 = vmatprep.subr.mxu0 0.0
        %4358 = vmatpush1.msra.mxu0 0.0
        %4359 = vmatprep.mubr.f32.mxu0 0.0
        %4360 = vmatmul.mubr.f32.gmra.mrb[0].mxu0 %v3700
        %v4361 = vpop.f32.mrb[0].mxu0
        %v4362 = vadd.f32 0.0, %v4361
        %v4363 = vpop.f32.mrb[0].mxu0
        %v4364 = vadd.f32 0.0, %v4363
        %4365 = vdwg.mxu0
        %4366 = vmatprep.subr.mxu0 %v3754
        %4367 = vmatpush1.msra.mxu0 %v3751
        %4368 = vmatprep.subr.mxu0 0.0
        %4369 = vmatpush1.msra.mxu0 0.0
        %4370 = vmatprep.subr.mxu0 0.0
        %4371 = vmatpush1.msra.mxu0 0.0
        %4372 = vmatprep.subr.mxu0 0.0
        %4373 = vmatpush1.msra.mxu0 0.0
        %4374 = vmatprep.subr.mxu0 0.0
        %4375 = vmatpush1.msra.mxu0 0.0
        %4376 = vmatprep.subr.mxu0 0.0
        %4377 = vmatpush1.msra.mxu0 0.0
        %4378 = vmatprep.subr.mxu0 0.0
        %4379 = vmatpush1.msra.mxu0 0.0
        %4380 = vmatprep.subr.mxu0 0.0
        %4381 = vmatpush1.msra.mxu0 0.0
        %4382 = vmatprep.subr.mxu0 0.0
        %4383 = vmatpush1.msra.mxu0 0.0
        %4384 = vmatprep.subr.mxu0 0.0
        %4385 = vmatpush1.msra.mxu0 0.0
        %4386 = vmatprep.subr.mxu0 0.0
        %4387 = vmatpush1.msra.mxu0 0.0
        %4388 = vmatprep.subr.mxu0 0.0
        %4389 = vmatpush1.msra.mxu0 0.0
        %4390 = vmatprep.subr.mxu0 0.0
        %4391 = vmatpush1.msra.mxu0 0.0
        %4392 = vmatprep.subr.mxu0 0.0
        %4393 = vmatpush1.msra.mxu0 0.0
        %4394 = vmatprep.subr.mxu0 0.0
        %4395 = vmatpush1.msra.mxu0 0.0
        %4396 = vmatprep.subr.mxu0 0.0
        %4397 = vmatpush1.msra.mxu0 0.0
        %4398 = vmatprep.subr.mxu0 0.0
        %4399 = vmatpush1.msra.mxu0 0.0
        %4400 = vmatprep.subr.mxu0 0.0
        %4401 = vmatpush1.msra.mxu0 0.0
        %4402 = vmatprep.subr.mxu0 0.0
        %4403 = vmatpush1.msra.mxu0 0.0
        %4404 = vmatprep.subr.mxu0 0.0
        %4405 = vmatpush1.msra.mxu0 0.0
        %4406 = vmatprep.subr.mxu0 0.0
        %4407 = vmatpush1.msra.mxu0 0.0
        %4408 = vmatprep.subr.mxu0 0.0
        %4409 = vmatpush1.msra.mxu0 0.0
        %4410 = vmatprep.subr.mxu0 0.0
        %4411 = vmatpush1.msra.mxu0 0.0
        %4412 = vmatprep.subr.mxu0 0.0
        %4413 = vmatpush1.msra.mxu0 0.0
        %4414 = vmatprep.subr.mxu0 0.0
        %4415 = vmatpush1.msra.mxu0 0.0
        %4416 = vmatprep.subr.mxu0 0.0
        %4417 = vmatpush1.msra.mxu0 0.0
        %4418 = vmatprep.subr.mxu0 0.0
        %4419 = vmatpush1.msra.mxu0 0.0
        %4420 = vmatprep.subr.mxu0 0.0
        %4421 = vmatpush1.msra.mxu0 0.0
        %4422 = vmatprep.subr.mxu0 0.0
        %4423 = vmatpush1.msra.mxu0 0.0
        %4424 = vmatprep.subr.mxu0 0.0
        %4425 = vmatpush1.msra.mxu0 0.0
        %4426 = vmatprep.subr.mxu0 0.0
        %4427 = vmatpush1.msra.mxu0 0.0
        %4428 = vmatprep.subr.mxu0 0.0
        %4429 = vmatpush1.msra.mxu0 0.0
        %4430 = vmatprep.mubr.f32.mxu0 0.0
        %4431 = vmatmul.mubr.f32.gmra.mrb[0].mxu0 %v3700
        %v4432 = vpop.f32.mrb[0].mxu0
        %v4433 = vadd.f32 0.0, %v4432
        %v4434 = vpop.f32.mrb[0].mxu0
        %v4435 = vadd.f32 0.0, %v4434
        %4436 = vdwg.mxu0
        %4437 = vmatprep.subr.mxu0 %v3760
        %4438 = vmatpush1.msra.mxu0 %v3757
        %4439 = vmatprep.subr.mxu0 0.0
        %4440 = vmatpush1.msra.mxu0 0.0
        %4441 = vmatprep.subr.mxu0 0.0
        %4442 = vmatpush1.msra.mxu0 0.0
        %4443 = vmatprep.subr.mxu0 0.0
        %4444 = vmatpush1.msra.mxu0 0.0
        %4445 = vmatprep.subr.mxu0 0.0
        %4446 = vmatpush1.msra.mxu0 0.0
        %4447 = vmatprep.subr.mxu0 0.0
        %4448 = vmatpush1.msra.mxu0 0.0
        %4449 = vmatprep.subr.mxu0 0.0
        %4450 = vmatpush1.msra.mxu0 0.0
        %4451 = vmatprep.subr.mxu0 0.0
        %4452 = vmatpush1.msra.mxu0 0.0
        %4453 = vmatprep.subr.mxu0 0.0
        %4454 = vmatpush1.msra.mxu0 0.0
        %4455 = vmatprep.subr.mxu0 0.0
        %4456 = vmatpush1.msra.mxu0 0.0
        %4457 = vmatprep.subr.mxu0 0.0
        %4458 = vmatpush1.msra.mxu0 0.0
        %4459 = vmatprep.subr.mxu0 0.0
        %4460 = vmatpush1.msra.mxu0 0.0
        %4461 = vmatprep.subr.mxu0 0.0
        %4462 = vmatpush1.msra.mxu0 0.0
        %4463 = vmatprep.subr.mxu0 0.0
        %4464 = vmatpush1.msra.mxu0 0.0
        %4465 = vmatprep.subr.mxu0 0.0
        %4466 = vmatpush1.msra.mxu0 0.0
        %4467 = vmatprep.subr.mxu0 0.0
        %4468 = vmatpush1.msra.mxu0 0.0
        %4469 = vmatprep.subr.mxu0 0.0
        %4470 = vmatpush1.msra.mxu0 0.0
        %4471 = vmatprep.subr.mxu0 0.0
        %4472 = vmatpush1.msra.mxu0 0.0
        %4473 = vmatprep.subr.mxu0 0.0
        %4474 = vmatpush1.msra.mxu0 0.0
        %4475 = vmatprep.subr.mxu0 0.0
        %4476 = vmatpush1.msra.mxu0 0.0
        %4477 = vmatprep.subr.mxu0 0.0
        %4478 = vmatpush1.msra.mxu0 0.0
        %4479 = vmatprep.subr.mxu0 0.0
        %4480 = vmatpush1.msra.mxu0 0.0
        %4481 = vmatprep.subr.mxu0 0.0
        %4482 = vmatpush1.msra.mxu0 0.0
        %4483 = vmatprep.subr.mxu0 0.0
        %4484 = vmatpush1.msra.mxu0 0.0
        %4485 = vmatprep.subr.mxu0 0.0
        %4486 = vmatpush1.msra.mxu0 0.0
        %4487 = vmatprep.subr.mxu0 0.0
        %4488 = vmatpush1.msra.mxu0 0.0
        %4489 = vmatprep.subr.mxu0 0.0
        %4490 = vmatpush1.msra.mxu0 0.0
        %4491 = vmatprep.subr.mxu0 0.0
        %4492 = vmatpush1.msra.mxu0 0.0
        %4493 = vmatprep.subr.mxu0 0.0
        %4494 = vmatpush1.msra.mxu0 0.0
        %4495 = vmatprep.subr.mxu0 0.0
        %4496 = vmatpush1.msra.mxu0 0.0
        %4497 = vmatprep.subr.mxu0 0.0
        %4498 = vmatpush1.msra.mxu0 0.0
        %4499 = vmatprep.subr.mxu0 0.0
        %4500 = vmatpush1.msra.mxu0 0.0
        %4501 = vmatprep.mubr.f32.mxu0 0.0
        %4502 = vmatmul.mubr.f32.gmra.mrb[0].mxu0 %v3700
        %v4503 = vpop.f32.mrb[0].mxu0
        %v4504 = vadd.f32 0.0, %v4503
        %v4505 = vpop.f32.mrb[0].mxu0
        %v4506 = vadd.f32 0.0, %v4505
        %4507 = vdwg.mxu0
        %4508 = vmatprep.subr.mxu0 %v3766
        %4509 = vmatpush1.msra.mxu0 %v3763
        %4510 = vmatprep.subr.mxu0 0.0
        %4511 = vmatpush1.msra.mxu0 0.0
        %4512 = vmatprep.subr.mxu0 0.0
        %4513 = vmatpush1.msra.mxu0 0.0
        %4514 = vmatprep.subr.mxu0 0.0
        %4515 = vmatpush1.msra.mxu0 0.0
        %4516 = vmatprep.subr.mxu0 0.0
        %4517 = vmatpush1.msra.mxu0 0.0
        %4518 = vmatprep.subr.mxu0 0.0
        %4519 = vmatpush1.msra.mxu0 0.0
        %4520 = vmatprep.subr.mxu0 0.0
        %4521 = vmatpush1.msra.mxu0 0.0
        %4522 = vmatprep.subr.mxu0 0.0
        %4523 = vmatpush1.msra.mxu0 0.0
        %4524 = vmatprep.subr.mxu0 0.0
        %4525 = vmatpush1.msra.mxu0 0.0
        %4526 = vmatprep.subr.mxu0 0.0
        %4527 = vmatpush1.msra.mxu0 0.0
        %4528 = vmatprep.subr.mxu0 0.0
        %4529 = vmatpush1.msra.mxu0 0.0
        %4530 = vmatprep.subr.mxu0 0.0
        %4531 = vmatpush1.msra.mxu0 0.0
        %4532 = vmatprep.subr.mxu0 0.0
        %4533 = vmatpush1.msra.mxu0 0.0
        %4534 = vmatprep.subr.mxu0 0.0
        %4535 = vmatpush1.msra.mxu0 0.0
        %4536 = vmatprep.subr.mxu0 0.0
        %4537 = vmatpush1.msra.mxu0 0.0
        %4538 = vmatprep.subr.mxu0 0.0
        %4539 = vmatpush1.msra.mxu0 0.0
        %4540 = vmatprep.subr.mxu0 0.0
        %4541 = vmatpush1.msra.mxu0 0.0
        %4542 = vmatprep.subr.mxu0 0.0
        %4543 = vmatpush1.msra.mxu0 0.0
        %4544 = vmatprep.subr.mxu0 0.0
        %4545 = vmatpush1.msra.mxu0 0.0
        %4546 = vmatprep.subr.mxu0 0.0
        %4547 = vmatpush1.msra.mxu0 0.0
        %4548 = vmatprep.subr.mxu0 0.0
        %4549 = vmatpush1.msra.mxu0 0.0
        %4550 = vmatprep.subr.mxu0 0.0
        %4551 = vmatpush1.msra.mxu0 0.0
        %4552 = vmatprep.subr.mxu0 0.0
        %4553 = vmatpush1.msra.mxu0 0.0
        %4554 = vmatprep.subr.mxu0 0.0
        %4555 = vmatpush1.msra.mxu0 0.0
        %4556 = vmatprep.subr.mxu0 0.0
        %4557 = vmatpush1.msra.mxu0 0.0
        %4558 = vmatprep.subr.mxu0 0.0
        %4559 = vmatpush1.msra.mxu0 0.0
        %4560 = vmatprep.subr.mxu0 0.0
        %4561 = vmatpush1.msra.mxu0 0.0
        %4562 = vmatprep.subr.mxu0 0.0
        %4563 = vmatpush1.msra.mxu0 0.0
        %4564 = vmatprep.subr.mxu0 0.0
        %4565 = vmatpush1.msra.mxu0 0.0
        %4566 = vmatprep.subr.mxu0 0.0
        %4567 = vmatpush1.msra.mxu0 0.0
        %4568 = vmatprep.subr.mxu0 0.0
        %4569 = vmatpush1.msra.mxu0 0.0
        %4570 = vmatprep.subr.mxu0 0.0
        %4571 = vmatpush1.msra.mxu0 0.0
        %4572 = vmatprep.mubr.f32.mxu0 0.0
        %4573 = vmatmul.mubr.f32.gmra.mrb[0].mxu0 %v3700
        %v4574 = vpop.f32.mrb[0].mxu0
        %v4575 = vadd.f32 0.0, %v4574
        %v4576 = vpop.f32.mrb[0].mxu0
        %v4577 = vadd.f32 0.0, %v4576
        %4578 = vdwg.mxu0
        %4579 = vmatprep.subr.mxu0 %v3772
        %4580 = vmatpush1.msra.mxu0 %v3769
        %4581 = vmatprep.subr.mxu0 0.0
        %4582 = vmatpush1.msra.mxu0 0.0
        %4583 = vmatprep.subr.mxu0 0.0
        %4584 = vmatpush1.msra.mxu0 0.0
        %4585 = vmatprep.subr.mxu0 0.0
        %4586 = vmatpush1.msra.mxu0 0.0
        %4587 = vmatprep.subr.mxu0 0.0
        %4588 = vmatpush1.msra.mxu0 0.0
        %4589 = vmatprep.subr.mxu0 0.0
        %4590 = vmatpush1.msra.mxu0 0.0
        %4591 = vmatprep.subr.mxu0 0.0
        %4592 = vmatpush1.msra.mxu0 0.0
        %4593 = vmatprep.subr.mxu0 0.0
        %4594 = vmatpush1.msra.mxu0 0.0
        %4595 = vmatprep.subr.mxu0 0.0
        %4596 = vmatpush1.msra.mxu0 0.0
        %4597 = vmatprep.subr.mxu0 0.0
        %4598 = vmatpush1.msra.mxu0 0.0
        %4599 = vmatprep.subr.mxu0 0.0
        %4600 = vmatpush1.msra.mxu0 0.0
        %4601 = vmatprep.subr.mxu0 0.0
        %4602 = vmatpush1.msra.mxu0 0.0
        %4603 = vmatprep.subr.mxu0 0.0
        %4604 = vmatpush1.msra.mxu0 0.0
        %4605 = vmatprep.subr.mxu0 0.0
        %4606 = vmatpush1.msra.mxu0 0.0
        %4607 = vmatprep.subr.mxu0 0.0
        %4608 = vmatpush1.msra.mxu0 0.0
        %4609 = vmatprep.subr.mxu0 0.0
        %4610 = vmatpush1.msra.mxu0 0.0
        %4611 = vmatprep.subr.mxu0 0.0
        %4612 = vmatpush1.msra.mxu0 0.0
        %4613 = vmatprep.subr.mxu0 0.0
        %4614 = vmatpush1.msra.mxu0 0.0
        %4615 = vmatprep.subr.mxu0 0.0
        %4616 = vmatpush1.msra.mxu0 0.0
        %4617 = vmatprep.subr.mxu0 0.0
        %4618 = vmatpush1.msra.mxu0 0.0
        %4619 = vmatprep.subr.mxu0 0.0
        %4620 = vmatpush1.msra.mxu0 0.0
        %4621 = vmatprep.subr.mxu0 0.0
        %4622 = vmatpush1.msra.mxu0 0.0
        %4623 = vmatprep.subr.mxu0 0.0
        %4624 = vmatpush1.msra.mxu0 0.0
        %4625 = vmatprep.subr.mxu0 0.0
        %4626 = vmatpush1.msra.mxu0 0.0
        %4627 = vmatprep.subr.mxu0 0.0
        %4628 = vmatpush1.msra.mxu0 0.0
        %4629 = vmatprep.subr.mxu0 0.0
        %4630 = vmatpush1.msra.mxu0 0.0
        %4631 = vmatprep.subr.mxu0 0.0
        %4632 = vmatpush1.msra.mxu0 0.0
        %4633 = vmatprep.subr.mxu0 0.0
        %4634 = vmatpush1.msra.mxu0 0.0
        %4635 = vmatprep.subr.mxu0 0.0
        %4636 = vmatpush1.msra.mxu0 0.0
        %4637 = vmatprep.subr.mxu0 0.0
        %4638 = vmatpush1.msra.mxu0 0.0
        %4639 = vmatprep.subr.mxu0 0.0
        %4640 = vmatpush1.msra.mxu0 0.0
        %4641 = vmatprep.subr.mxu0 0.0
        %4642 = vmatpush1.msra.mxu0 0.0
        %4643 = vmatprep.mubr.f32.mxu0 0.0
        %4644 = vmatmul.mubr.f32.gmra.mrb[0].mxu0 %v3700
        %v4645 = vpop.f32.mrb[0].mxu0
        %v4646 = vadd.f32 0.0, %v4645
        %v4647 = vpop.f32.mrb[0].mxu0
        %v4648 = vadd.f32 0.0, %v4647
        %4649 = vdwg.mxu0
        %4650 = vmatprep.subr.mxu0 %v3778
        %4651 = vmatpush1.msra.mxu0 %v3775
        %4652 = vmatprep.subr.mxu0 0.0
        %4653 = vmatpush1.msra.mxu0 0.0
        %4654 = vmatprep.subr.mxu0 0.0
        %4655 = vmatpush1.msra.mxu0 0.0
        %4656 = vmatprep.subr.mxu0 0.0
        %4657 = vmatpush1.msra.mxu0 0.0
        %4658 = vmatprep.subr.mxu0 0.0
        %4659 = vmatpush1.msra.mxu0 0.0
        %4660 = vmatprep.subr.mxu0 0.0
        %4661 = vmatpush1.msra.mxu0 0.0
        %4662 = vmatprep.subr.mxu0 0.0
        %4663 = vmatpush1.msra.mxu0 0.0
        %4664 = vmatprep.subr.mxu0 0.0
        %4665 = vmatpush1.msra.mxu0 0.0
        %4666 = vmatprep.subr.mxu0 0.0
        %4667 = vmatpush1.msra.mxu0 0.0
        %4668 = vmatprep.subr.mxu0 0.0
        %4669 = vmatpush1.msra.mxu0 0.0
        %4670 = vmatprep.subr.mxu0 0.0
        %4671 = vmatpush1.msra.mxu0 0.0
        %4672 = vmatprep.subr.mxu0 0.0
        %4673 = vmatpush1.msra.mxu0 0.0
        %4674 = vmatprep.subr.mxu0 0.0
        %4675 = vmatpush1.msra.mxu0 0.0
        %4676 = vmatprep.subr.mxu0 0.0
        %4677 = vmatpush1.msra.mxu0 0.0
        %4678 = vmatprep.subr.mxu0 0.0
        %4679 = vmatpush1.msra.mxu0 0.0
        %4680 = vmatprep.subr.mxu0 0.0
        %4681 = vmatpush1.msra.mxu0 0.0
        %4682 = vmatprep.subr.mxu0 0.0
        %4683 = vmatpush1.msra.mxu0 0.0
        %4684 = vmatprep.subr.mxu0 0.0
        %4685 = vmatpush1.msra.mxu0 0.0
        %4686 = vmatprep.subr.mxu0 0.0
        %4687 = vmatpush1.msra.mxu0 0.0
        %4688 = vmatprep.subr.mxu0 0.0
        %4689 = vmatpush1.msra.mxu0 0.0
        %4690 = vmatprep.subr.mxu0 0.0
        %4691 = vmatpush1.msra.mxu0 0.0
        %4692 = vmatprep.subr.mxu0 0.0
        %4693 = vmatpush1.msra.mxu0 0.0
        %4694 = vmatprep.subr.mxu0 0.0
        %4695 = vmatpush1.msra.mxu0 0.0
        %4696 = vmatprep.subr.mxu0 0.0
        %4697 = vmatpush1.msra.mxu0 0.0
        %4698 = vmatprep.subr.mxu0 0.0
        %4699 = vmatpush1.msra.mxu0 0.0
        %4700 = vmatprep.subr.mxu0 0.0
        %4701 = vmatpush1.msra.mxu0 0.0
        %4702 = vmatprep.subr.mxu0 0.0
        %4703 = vmatpush1.msra.mxu0 0.0
        %4704 = vmatprep.subr.mxu0 0.0
        %4705 = vmatpush1.msra.mxu0 0.0
        %4706 = vmatprep.subr.mxu0 0.0
        %4707 = vmatpush1.msra.mxu0 0.0
        %4708 = vmatprep.subr.mxu0 0.0
        %4709 = vmatpush1.msra.mxu0 0.0
        %4710 = vmatprep.subr.mxu0 0.0
        %4711 = vmatpush1.msra.mxu0 0.0
        %4712 = vmatprep.subr.mxu0 0.0
        %4713 = vmatpush1.msra.mxu0 0.0
        %4714 = vmatprep.mubr.f32.mxu0 0.0
        %4715 = vmatmul.mubr.f32.gmra.mrb[0].mxu0 %v3700
        %v4716 = vpop.f32.mrb[0].mxu0
        %v4717 = vadd.f32 0.0, %v4716
        %v4718 = vpop.f32.mrb[0].mxu0
        %v4719 = vadd.f32 0.0, %v4718
        %4720 = vdwg.mxu0
        %4721 = vmatprep.subr.mxu0 %v3784
        %4722 = vmatpush1.msra.mxu0 %v3781
        %4723 = vmatprep.subr.mxu0 0.0
        %4724 = vmatpush1.msra.mxu0 0.0
        %4725 = vmatprep.subr.mxu0 0.0
        %4726 = vmatpush1.msra.mxu0 0.0
        %4727 = vmatprep.subr.mxu0 0.0
        %4728 = vmatpush1.msra.mxu0 0.0
        %4729 = vmatprep.subr.mxu0 0.0
        %4730 = vmatpush1.msra.mxu0 0.0
        %4731 = vmatprep.subr.mxu0 0.0
        %4732 = vmatpush1.msra.mxu0 0.0
        %4733 = vmatprep.subr.mxu0 0.0
        %4734 = vmatpush1.msra.mxu0 0.0
        %4735 = vmatprep.subr.mxu0 0.0
        %4736 = vmatpush1.msra.mxu0 0.0
        %4737 = vmatprep.subr.mxu0 0.0
        %4738 = vmatpush1.msra.mxu0 0.0
        %4739 = vmatprep.subr.mxu0 0.0
        %4740 = vmatpush1.msra.mxu0 0.0
        %4741 = vmatprep.subr.mxu0 0.0
        %4742 = vmatpush1.msra.mxu0 0.0
        %4743 = vmatprep.subr.mxu0 0.0
        %4744 = vmatpush1.msra.mxu0 0.0
        %4745 = vmatprep.subr.mxu0 0.0
        %4746 = vmatpush1.msra.mxu0 0.0
        %4747 = vmatprep.subr.mxu0 0.0
        %4748 = vmatpush1.msra.mxu0 0.0
        %4749 = vmatprep.subr.mxu0 0.0
        %4750 = vmatpush1.msra.mxu0 0.0
        %4751 = vmatprep.subr.mxu0 0.0
        %4752 = vmatpush1.msra.mxu0 0.0
        %4753 = vmatprep.subr.mxu0 0.0
        %4754 = vmatpush1.msra.mxu0 0.0
        %4755 = vmatprep.subr.mxu0 0.0
        %4756 = vmatpush1.msra.mxu0 0.0
        %4757 = vmatprep.subr.mxu0 0.0
        %4758 = vmatpush1.msra.mxu0 0.0
        %4759 = vmatprep.subr.mxu0 0.0
        %4760 = vmatpush1.msra.mxu0 0.0
        %4761 = vmatprep.subr.mxu0 0.0
        %4762 = vmatpush1.msra.mxu0 0.0
        %4763 = vmatprep.subr.mxu0 0.0
        %4764 = vmatpush1.msra.mxu0 0.0
        %4765 = vmatprep.subr.mxu0 0.0
        %4766 = vmatpush1.msra.mxu0 0.0
        %4767 = vmatprep.subr.mxu0 0.0
        %4768 = vmatpush1.msra.mxu0 0.0
        %4769 = vmatprep.subr.mxu0 0.0
        %4770 = vmatpush1.msra.mxu0 0.0
        %4771 = vmatprep.subr.mxu0 0.0
        %4772 = vmatpush1.msra.mxu0 0.0
        %4773 = vmatprep.subr.mxu0 0.0
        %4774 = vmatpush1.msra.mxu0 0.0
        %4775 = vmatprep.subr.mxu0 0.0
        %4776 = vmatpush1.msra.mxu0 0.0
        %4777 = vmatprep.subr.mxu0 0.0
        %4778 = vmatpush1.msra.mxu0 0.0
        %4779 = vmatprep.subr.mxu0 0.0
        %4780 = vmatpush1.msra.mxu0 0.0
        %4781 = vmatprep.subr.mxu0 0.0
        %4782 = vmatpush1.msra.mxu0 0.0
        %4783 = vmatprep.subr.mxu0 0.0
        %4784 = vmatpush1.msra.mxu0 0.0
        %4785 = vmatprep.mubr.f32.mxu0 0.0
        %4786 = vmatmul.mubr.f32.gmra.mrb[0].mxu0 %v3700
        %v4787 = vpop.f32.mrb[0].mxu0
        %v4788 = vadd.f32 0.0, %v4787
        %v4789 = vpop.f32.mrb[0].mxu0
        %v4790 = vadd.f32 0.0, %v4789
        %4791 = vdwg.mxu0
        %4792 = vmatprep.subr.mxu0 %v3790
        %4793 = vmatpush1.msra.mxu0 %v3787
        %4794 = vmatprep.subr.mxu0 0.0
        %4795 = vmatpush1.msra.mxu0 0.0
        %4796 = vmatprep.subr.mxu0 0.0
        %4797 = vmatpush1.msra.mxu0 0.0
        %4798 = vmatprep.subr.mxu0 0.0
        %4799 = vmatpush1.msra.mxu0 0.0
        %4800 = vmatprep.subr.mxu0 0.0
        %4801 = vmatpush1.msra.mxu0 0.0
        %4802 = vmatprep.subr.mxu0 0.0
        %4803 = vmatpush1.msra.mxu0 0.0
        %4804 = vmatprep.subr.mxu0 0.0
        %4805 = vmatpush1.msra.mxu0 0.0
        %4806 = vmatprep.subr.mxu0 0.0
        %4807 = vmatpush1.msra.mxu0 0.0
        %4808 = vmatprep.subr.mxu0 0.0
        %4809 = vmatpush1.msra.mxu0 0.0
        %4810 = vmatprep.subr.mxu0 0.0
        %4811 = vmatpush1.msra.mxu0 0.0
        %4812 = vmatprep.subr.mxu0 0.0
        %4813 = vmatpush1.msra.mxu0 0.0
        %4814 = vmatprep.subr.mxu0 0.0
        %4815 = vmatpush1.msra.mxu0 0.0
        %4816 = vmatprep.subr.mxu0 0.0
        %4817 = vmatpush1.msra.mxu0 0.0
        %4818 = vmatprep.subr.mxu0 0.0
        %4819 = vmatpush1.msra.mxu0 0.0
        %4820 = vmatprep.subr.mxu0 0.0
        %4821 = vmatpush1.msra.mxu0 0.0
        %4822 = vmatprep.subr.mxu0 0.0
        %4823 = vmatpush1.msra.mxu0 0.0
        %4824 = vmatprep.subr.mxu0 0.0
        %4825 = vmatpush1.msra.mxu0 0.0
        %4826 = vmatprep.subr.mxu0 0.0
        %4827 = vmatpush1.msra.mxu0 0.0
        %4828 = vmatprep.subr.mxu0 0.0
        %4829 = vmatpush1.msra.mxu0 0.0
        %4830 = vmatprep.subr.mxu0 0.0
        %4831 = vmatpush1.msra.mxu0 0.0
        %4832 = vmatprep.subr.mxu0 0.0
        %4833 = vmatpush1.msra.mxu0 0.0
        %4834 = vmatprep.subr.mxu0 0.0
        %4835 = vmatpush1.msra.mxu0 0.0
        %4836 = vmatprep.subr.mxu0 0.0
        %4837 = vmatpush1.msra.mxu0 0.0
        %4838 = vmatprep.subr.mxu0 0.0
        %4839 = vmatpush1.msra.mxu0 0.0
        %4840 = vmatprep.subr.mxu0 0.0
        %4841 = vmatpush1.msra.mxu0 0.0
        %4842 = vmatprep.subr.mxu0 0.0
        %4843 = vmatpush1.msra.mxu0 0.0
        %4844 = vmatprep.subr.mxu0 0.0
        %4845 = vmatpush1.msra.mxu0 0.0
        %4846 = vmatprep.subr.mxu0 0.0
        %4847 = vmatpush1.msra.mxu0 0.0
        %4848 = vmatprep.subr.mxu0 0.0
        %4849 = vmatpush1.msra.mxu0 0.0
        %4850 = vmatprep.subr.mxu0 0.0
        %4851 = vmatpush1.msra.mxu0 0.0
        %4852 = vmatprep.subr.mxu0 0.0
        %4853 = vmatpush1.msra.mxu0 0.0
        %4854 = vmatprep.subr.mxu0 0.0
        %4855 = vmatpush1.msra.mxu0 0.0
        %4856 = vmatprep.mubr.f32.mxu0 0.0
        %4857 = vmatmul.mubr.f32.gmra.mrb[0].mxu0 %v3700
        %v4858 = vpop.f32.mrb[0].mxu0
        %v4859 = vadd.f32 0.0, %v4858
        %v4860 = vpop.f32.mrb[0].mxu0
        %v4861 = vadd.f32 0.0, %v4860
        %4862 = vdwg.mxu0
        %4863 = vmatprep.subr.mxu0 %v3796
        %4864 = vmatpush1.msra.mxu0 %v3793
        %4865 = vmatprep.subr.mxu0 0.0
        %4866 = vmatpush1.msra.mxu0 0.0
        %4867 = vmatprep.subr.mxu0 0.0
        %4868 = vmatpush1.msra.mxu0 0.0
        %4869 = vmatprep.subr.mxu0 0.0
        %4870 = vmatpush1.msra.mxu0 0.0
        %4871 = vmatprep.subr.mxu0 0.0
        %4872 = vmatpush1.msra.mxu0 0.0
        %4873 = vmatprep.subr.mxu0 0.0
        %4874 = vmatpush1.msra.mxu0 0.0
        %4875 = vmatprep.subr.mxu0 0.0
        %4876 = vmatpush1.msra.mxu0 0.0
        %4877 = vmatprep.subr.mxu0 0.0
        %4878 = vmatpush1.msra.mxu0 0.0
        %4879 = vmatprep.subr.mxu0 0.0
        %4880 = vmatpush1.msra.mxu0 0.0
        %4881 = vmatprep.subr.mxu0 0.0
        %4882 = vmatpush1.msra.mxu0 0.0
        %4883 = vmatprep.subr.mxu0 0.0
        %4884 = vmatpush1.msra.mxu0 0.0
        %4885 = vmatprep.subr.mxu0 0.0
        %4886 = vmatpush1.msra.mxu0 0.0
        %4887 = vmatprep.subr.mxu0 0.0
        %4888 = vmatpush1.msra.mxu0 0.0
        %4889 = vmatprep.subr.mxu0 0.0
        %4890 = vmatpush1.msra.mxu0 0.0
        %4891 = vmatprep.subr.mxu0 0.0
        %4892 = vmatpush1.msra.mxu0 0.0
        %4893 = vmatprep.subr.mxu0 0.0
        %4894 = vmatpush1.msra.mxu0 0.0
        %4895 = vmatprep.subr.mxu0 0.0
        %4896 = vmatpush1.msra.mxu0 0.0
        %4897 = vmatprep.subr.mxu0 0.0
        %4898 = vmatpush1.msra.mxu0 0.0
        %4899 = vmatprep.subr.mxu0 0.0
        %4900 = vmatpush1.msra.mxu0 0.0
        %4901 = vmatprep.subr.mxu0 0.0
        %4902 = vmatpush1.msra.mxu0 0.0
        %4903 = vmatprep.subr.mxu0 0.0
        %4904 = vmatpush1.msra.mxu0 0.0
        %4905 = vmatprep.subr.mxu0 0.0
        %4906 = vmatpush1.msra.mxu0 0.0
        %4907 = vmatprep.subr.mxu0 0.0
        %4908 = vmatpush1.msra.mxu0 0.0
        %4909 = vmatprep.subr.mxu0 0.0
        %4910 = vmatpush1.msra.mxu0 0.0
        %4911 = vmatprep.subr.mxu0 0.0
        %4912 = vmatpush1.msra.mxu0 0.0
        %4913 = vmatprep.subr.mxu0 0.0
        %4914 = vmatpush1.msra.mxu0 0.0
        %4915 = vmatprep.subr.mxu0 0.0
        %4916 = vmatpush1.msra.mxu0 0.0
        %4917 = vmatprep.subr.mxu0 0.0
        %4918 = vmatpush1.msra.mxu0 0.0
        %4919 = vmatprep.subr.mxu0 0.0
        %4920 = vmatpush1.msra.mxu0 0.0
        %4921 = vmatprep.subr.mxu0 0.0
        %4922 = vmatpush1.msra.mxu0 0.0
        %4923 = vmatprep.subr.mxu0 0.0
        %4924 = vmatpush1.msra.mxu0 0.0
        %4925 = vmatprep.subr.mxu0 0.0
        %4926 = vmatpush1.msra.mxu0 0.0
        %4927 = vmatprep.mubr.f32.mxu0 0.0
        %4928 = vmatmul.mubr.f32.gmra.mrb[0].mxu0 %v3700
        %v4929 = vpop.f32.mrb[0].mxu0
        %v4930 = vadd.f32 0.0, %v4929
        %v4931 = vpop.f32.mrb[0].mxu0
        %v4932 = vadd.f32 0.0, %v4931
        %4933 = vdwg.mxu0
        %v4934 = vadd.f32 %v2371, %v3865
        %v4935 = vadd.f32 %v2373, %v3867
        %v4936 = vadd.f32 %v2442, %v3936
        %v4937 = vadd.f32 %v2444, %v3938
        %v4938 = vadd.f32 %v2513, %v4007
        %v4939 = vadd.f32 %v2515, %v4009
        %v4940 = vadd.f32 %v2584, %v4078
        %v4941 = vadd.f32 %v2586, %v4080
        %v4942 = vadd.f32 %v2655, %v4149
        %v4943 = vadd.f32 %v2657, %v4151
        %v4944 = vadd.f32 %v2726, %v4220
        %v4945 = vadd.f32 %v2728, %v4222
        %v4946 = vadd.f32 %v2797, %v4291
        %v4947 = vadd.f32 %v2799, %v4293
        %v4948 = vadd.f32 %v2868, %v4362
        %v4949 = vadd.f32 %v2870, %v4364
        %v4950 = vadd.f32 %v2939, %v4433
        %v4951 = vadd.f32 %v2941, %v4435
        %v4952 = vadd.f32 %v3010, %v4504
        %v4953 = vadd.f32 %v3012, %v4506
        %v4954 = vadd.f32 %v3081, %v4575
        %v4955 = vadd.f32 %v3083, %v4577
        %v4956 = vadd.f32 %v3152, %v4646
        %v4957 = vadd.f32 %v3154, %v4648
        %v4958 = vadd.f32 %v3223, %v4717
        %v4959 = vadd.f32 %v3225, %v4719
        %v4960 = vadd.f32 %v3294, %v4788
        %v4961 = vadd.f32 %v3296, %v4790
        %v4962 = vadd.f32 %v3365, %v4859
        %v4963 = vadd.f32 %v3367, %v4861
        %v4964 = vadd.f32 %v3436, %v4930
        %v4965 = vadd.f32 %v3438, %v4932
        %v4966 = vld [vmem:[%s2] sm:$0xff]
        %4968 = vset.pattern.permute.xlu0 0
        %4969 = vperm.xlu0 %4968, %v4966
        %v4970 = vpop.permute.xlu0 %4969
        %v4972 = vadd.f32 %v4934, %v4970
        %v4973 = vadd.f32 %v4935, %v4970
        %v4974 = vadd.f32 %v4936, %v4970
        %v4975 = vadd.f32 %v4937, %v4970
        %v4976 = vadd.f32 %v4938, %v4970
        %v4977 = vadd.f32 %v4939, %v4970
        %v4978 = vadd.f32 %v4940, %v4970
        %v4979 = vadd.f32 %v4941, %v4970
        %v4980 = vadd.f32 %v4942, %v4970
        %v4981 = vadd.f32 %v4943, %v4970
        %v4982 = vadd.f32 %v4944, %v4970
        %v4983 = vadd.f32 %v4945, %v4970
        %v4984 = vadd.f32 %v4946, %v4970
        %v4985 = vadd.f32 %v4947, %v4970
        %v4986 = vadd.f32 %v4948, %v4970
        %v4987 = vadd.f32 %v4949, %v4970
        %v4988 = vadd.f32 %v4950, %v4970
        %v4989 = vadd.f32 %v4951, %v4970
        %v4990 = vadd.f32 %v4952, %v4970
        %v4991 = vadd.f32 %v4953, %v4970
        %v4992 = vadd.f32 %v4954, %v4970
        %v4993 = vadd.f32 %v4955, %v4970
        %v4994 = vadd.f32 %v4956, %v4970
        %v4995 = vadd.f32 %v4957, %v4970
        %v4996 = vadd.f32 %v4958, %v4970
        %v4997 = vadd.f32 %v4959, %v4970
        %v4998 = vadd.f32 %v4960, %v4970
        %v4999 = vadd.f32 %v4961, %v4970
        %v5000 = vadd.f32 %v4962, %v4970
        %v5001 = vadd.f32 %v4963, %v4970
        %v5002 = vadd.f32 %v4964, %v4970
        %v5003 = vadd.f32 %v4965, %v4970
        %v5004 = vmax.f32 %v4972, 0.0
        %v5005 = vmax.f32 %v4973, 0.0
        %v5006 = vmax.f32 %v4974, 0.0
        %v5007 = vmax.f32 %v4975, 0.0
        %v5008 = vmax.f32 %v4976, 0.0
        %v5009 = vmax.f32 %v4977, 0.0
        %v5010 = vmax.f32 %v4978, 0.0
        %v5011 = vmax.f32 %v4979, 0.0
        %v5012 = vmax.f32 %v4980, 0.0
        %v5013 = vmax.f32 %v4981, 0.0
        %v5014 = vmax.f32 %v4982, 0.0
        %v5015 = vmax.f32 %v4983, 0.0
        %v5016 = vmax.f32 %v4984, 0.0
        %v5017 = vmax.f32 %v4985, 0.0
        %v5018 = vmax.f32 %v4986, 0.0
        %v5019 = vmax.f32 %v4987, 0.0
        %v5020 = vmax.f32 %v4988, 0.0
        %v5021 = vmax.f32 %v4989, 0.0
        %v5022 = vmax.f32 %v4990, 0.0
        %v5023 = vmax.f32 %v4991, 0.0
        %v5024 = vmax.f32 %v4992, 0.0
        %v5025 = vmax.f32 %v4993, 0.0
        %v5026 = vmax.f32 %v4994, 0.0
        %v5027 = vmax.f32 %v4995, 0.0
        %v5028 = vmax.f32 %v4996, 0.0
        %v5029 = vmax.f32 %v4997, 0.0
        %v5030 = vmax.f32 %v4998, 0.0
        %v5031 = vmax.f32 %v4999, 0.0
        %v5032 = vmax.f32 %v5000, 0.0
        %v5033 = vmax.f32 %v5001, 0.0
        %v5034 = vmax.f32 %v5002, 0.0
        %v5035 = vmax.f32 %v5003, 0.0
        %v5036 = vmin.f32 %v5004, 6.0
        %v5037 = vmin.f32 %v5005, 6.0
        %v5038 = vmin.f32 %v5006, 6.0
        %v5039 = vmin.f32 %v5007, 6.0
        %v5040 = vmin.f32 %v5008, 6.0
        %v5041 = vmin.f32 %v5009, 6.0
        %v5042 = vmin.f32 %v5010, 6.0
        %v5043 = vmin.f32 %v5011, 6.0
        %v5044 = vmin.f32 %v5012, 6.0
        %v5045 = vmin.f32 %v5013, 6.0
        %v5046 = vmin.f32 %v5014, 6.0
        %v5047 = vmin.f32 %v5015, 6.0
        %v5048 = vmin.f32 %v5016, 6.0
        %v5049 = vmin.f32 %v5017, 6.0
        %v5050 = vmin.f32 %v5018, 6.0
        %v5051 = vmin.f32 %v5019, 6.0
        %v5052 = vmin.f32 %v5020, 6.0
        %v5053 = vmin.f32 %v5021, 6.0
        %v5054 = vmin.f32 %v5022, 6.0
        %v5055 = vmin.f32 %v5023, 6.0
        %v5056 = vmin.f32 %v5024, 6.0
        %v5057 = vmin.f32 %v5025, 6.0
        %v5058 = vmin.f32 %v5026, 6.0
        %v5059 = vmin.f32 %v5027, 6.0
        %v5060 = vmin.f32 %v5028, 6.0
        %v5061 = vmin.f32 %v5029, 6.0
        %v5062 = vmin.f32 %v5030, 6.0
        %v5063 = vmin.f32 %v5031, 6.0
        %v5064 = vmin.f32 %v5032, 6.0
        %v5065 = vmin.f32 %v5033, 6.0
        %v5066 = vmin.f32 %v5034, 6.0
        %v5067 = vmin.f32 %v5035, 6.0
        %5068 = vst [vmem:[%s264] sm:$0xff] %v5036
        %5069 = vst [vmem:[%s264 + $0x8] sm:$0xff] %v5037
        %5070 = vst [vmem:[%s264 + $0x10] sm:$0xff] %v5038
        %5071 = vst [vmem:[%s264 + $0x18] sm:$0xff] %v5039
        %5072 = vst [vmem:[%s264 + $0x20] sm:$0xff] %v5040
        %5073 = vst [vmem:[%s264 + $0x28] sm:$0xff] %v5041
        %5074 = vst [vmem:[%s264 + $0x30] sm:$0xff] %v5042
        %5075 = vst [vmem:[%s264 + $0x38] sm:$0xff] %v5043
        %5076 = vst [vmem:[%s264 + $0x40] sm:$0xff] %v5044
        %5077 = vst [vmem:[%s264 + $0x48] sm:$0xff] %v5045
        %5078 = vst [vmem:[%s264 + $0x50] sm:$0xff] %v5046
        %5079 = vst [vmem:[%s264 + $0x58] sm:$0xff] %v5047
        %5080 = vst [vmem:[%s264 + $0x60] sm:$0xff] %v5048
        %5081 = vst [vmem:[%s264 + $0x68] sm:$0xff] %v5049
        %5082 = vst [vmem:[%s264 + $0x70] sm:$0xff] %v5050
        %5083 = vst [vmem:[%s264 + $0x78] sm:$0xff] %v5051
        %5084 = vst [vmem:[%s264 + $0x80] sm:$0xff] %v5052
        %5085 = vst [vmem:[%s264 + $0x88] sm:$0xff] %v5053
        %5086 = vst [vmem:[%s264 + $0x90] sm:$0xff] %v5054
        %5087 = vst [vmem:[%s264 + $0x98] sm:$0xff] %v5055
        %5088 = vst [vmem:[%s264 + $0xa0] sm:$0xff] %v5056
        %5089 = vst [vmem:[%s264 + $0xa8] sm:$0xff] %v5057
        %5090 = vst [vmem:[%s264 + $0xb0] sm:$0xff] %v5058
        %5091 = vst [vmem:[%s264 + $0xb8] sm:$0xff] %v5059
        %5092 = vst [vmem:[%s264 + $0xc0] sm:$0xff] %v5060
        %5093 = vst [vmem:[%s264 + $0xc8] sm:$0xff] %v5061
        %5094 = vst [vmem:[%s264 + $0xd0] sm:$0xff] %v5062
        %5095 = vst [vmem:[%s264 + $0xd8] sm:$0xff] %v5063
        %5096 = vst [vmem:[%s264 + $0xe0] sm:$0xff] %v5064
        %5097 = vst [vmem:[%s264 + $0xe8] sm:$0xff] %v5065
        %5098 = vst [vmem:[%s264 + $0xf0] sm:$0xff] %v5066
        %5099 = vst [vmem:[%s264 + $0xf8] sm:$0xff] %v5067
        %v5100 = vld [vmem:[%s3] sm:$0xff]
        %vm5101 = vcmask 64512
        %v5103 = vsel %vm5101, %v5100, 0
        %5105 = vmatprep.subr.mxu0 %v5037
        %5106 = vmatpush1.msra.mxu0 %v5036
        %5107 = vmatprep.subr.mxu0 0.0
        %5108 = vmatpush1.msra.mxu0 0.0
        %5109 = vmatprep.subr.mxu0 0.0
        %5110 = vmatpush1.msra.mxu0 0.0
        %5111 = vmatprep.subr.mxu0 0.0
        %5112 = vmatpush1.msra.mxu0 0.0
        %5113 = vmatprep.subr.mxu0 0.0
        %5114 = vmatpush1.msra.mxu0 0.0
        %5115 = vmatprep.subr.mxu0 0.0
        %5116 = vmatpush1.msra.mxu0 0.0
        %5117 = vmatprep.subr.mxu0 0.0
        %5118 = vmatpush1.msra.mxu0 0.0
        %5119 = vmatprep.subr.mxu0 0.0
        %5120 = vmatpush1.msra.mxu0 0.0
        %5121 = vmatprep.subr.mxu0 0.0
        %5122 = vmatpush1.msra.mxu0 0.0
        %5123 = vmatprep.subr.mxu0 0.0
        %5124 = vmatpush1.msra.mxu0 0.0
        %5125 = vmatprep.subr.mxu0 0.0
        %5126 = vmatpush1.msra.mxu0 0.0
        %5127 = vmatprep.subr.mxu0 0.0
        %5128 = vmatpush1.msra.mxu0 0.0
        %5129 = vmatprep.subr.mxu0 0.0
        %5130 = vmatpush1.msra.mxu0 0.0
        %5131 = vmatprep.subr.mxu0 0.0
        %5132 = vmatpush1.msra.mxu0 0.0
        %5133 = vmatprep.subr.mxu0 0.0
        %5134 = vmatpush1.msra.mxu0 0.0
        %5135 = vmatprep.subr.mxu0 0.0
        %5136 = vmatpush1.msra.mxu0 0.0
        %5137 = vmatprep.subr.mxu0 0.0
        %5138 = vmatpush1.msra.mxu0 0.0
        %5139 = vmatprep.subr.mxu0 0.0
        %5140 = vmatpush1.msra.mxu0 0.0
        %5141 = vmatprep.subr.mxu0 0.0
        %5142 = vmatpush1.msra.mxu0 0.0
        %5143 = vmatprep.subr.mxu0 0.0
        %5144 = vmatpush1.msra.mxu0 0.0
        %5145 = vmatprep.subr.mxu0 0.0
        %5146 = vmatpush1.msra.mxu0 0.0
        %5147 = vmatprep.subr.mxu0 0.0
        %5148 = vmatpush1.msra.mxu0 0.0
        %5149 = vmatprep.subr.mxu0 0.0
        %5150 = vmatpush1.msra.mxu0 0.0
        %5151 = vmatprep.subr.mxu0 0.0
        %5152 = vmatpush1.msra.mxu0 0.0
        %5153 = vmatprep.subr.mxu0 0.0
        %5154 = vmatpush1.msra.mxu0 0.0
        %5155 = vmatprep.subr.mxu0 0.0
        %5156 = vmatpush1.msra.mxu0 0.0
        %5157 = vmatprep.subr.mxu0 0.0
        %5158 = vmatpush1.msra.mxu0 0.0
        %5159 = vmatprep.subr.mxu0 0.0
        %5160 = vmatpush1.msra.mxu0 0.0
        %5161 = vmatprep.subr.mxu0 0.0
        %5162 = vmatpush1.msra.mxu0 0.0
        %5163 = vmatprep.subr.mxu0 0.0
        %5164 = vmatpush1.msra.mxu0 0.0
        %5165 = vmatprep.subr.mxu0 0.0
        %5166 = vmatpush1.msra.mxu0 0.0
        %5167 = vmatprep.subr.mxu0 0.0
        %5168 = vmatpush1.msra.mxu0 0.0
        %5169 = vmatprep.mubr.f32.mxu0 0.0
        %5170 = vmatmul.mubr.f32.gmra.mrb[0].mxu0 %v5103
        %v5171 = vpop.f32.mrb[0].mxu0
        %v5172 = vadd.f32 0.0, %v5171
        %v5173 = vpop.f32.mrb[0].mxu0
        %v5174 = vadd.f32 0.0, %v5173
        %5175 = vdwg.mxu0
        %5176 = vmatprep.subr.mxu0 %v5039
        %5177 = vmatpush1.msra.mxu0 %v5038
        %5178 = vmatprep.subr.mxu0 0.0
        %5179 = vmatpush1.msra.mxu0 0.0
        %5180 = vmatprep.subr.mxu0 0.0
        %5181 = vmatpush1.msra.mxu0 0.0
        %5182 = vmatprep.subr.mxu0 0.0
        %5183 = vmatpush1.msra.mxu0 0.0
        %5184 = vmatprep.subr.mxu0 0.0
        %5185 = vmatpush1.msra.mxu0 0.0
        %5186 = vmatprep.subr.mxu0 0.0
        %5187 = vmatpush1.msra.mxu0 0.0
        %5188 = vmatprep.subr.mxu0 0.0
        %5189 = vmatpush1.msra.mxu0 0.0
        %5190 = vmatprep.subr.mxu0 0.0
        %5191 = vmatpush1.msra.mxu0 0.0
        %5192 = vmatprep.subr.mxu0 0.0
        %5193 = vmatpush1.msra.mxu0 0.0
        %5194 = vmatprep.subr.mxu0 0.0
        %5195 = vmatpush1.msra.mxu0 0.0
        %5196 = vmatprep.subr.mxu0 0.0
        %5197 = vmatpush1.msra.mxu0 0.0
        %5198 = vmatprep.subr.mxu0 0.0
        %5199 = vmatpush1.msra.mxu0 0.0
        %5200 = vmatprep.subr.mxu0 0.0
        %5201 = vmatpush1.msra.mxu0 0.0
        %5202 = vmatprep.subr.mxu0 0.0
        %5203 = vmatpush1.msra.mxu0 0.0
        %5204 = vmatprep.subr.mxu0 0.0
        %5205 = vmatpush1.msra.mxu0 0.0
        %5206 = vmatprep.subr.mxu0 0.0
        %5207 = vmatpush1.msra.mxu0 0.0
        %5208 = vmatprep.subr.mxu0 0.0
        %5209 = vmatpush1.msra.mxu0 0.0
        %5210 = vmatprep.subr.mxu0 0.0
        %5211 = vmatpush1.msra.mxu0 0.0
        %5212 = vmatprep.subr.mxu0 0.0
        %5213 = vmatpush1.msra.mxu0 0.0
        %5214 = vmatprep.subr.mxu0 0.0
        %5215 = vmatpush1.msra.mxu0 0.0
        %5216 = vmatprep.subr.mxu0 0.0
        %5217 = vmatpush1.msra.mxu0 0.0
        %5218 = vmatprep.subr.mxu0 0.0
        %5219 = vmatpush1.msra.mxu0 0.0
        %5220 = vmatprep.subr.mxu0 0.0
        %5221 = vmatpush1.msra.mxu0 0.0
        %5222 = vmatprep.subr.mxu0 0.0
        %5223 = vmatpush1.msra.mxu0 0.0
        %5224 = vmatprep.subr.mxu0 0.0
        %5225 = vmatpush1.msra.mxu0 0.0
        %5226 = vmatprep.subr.mxu0 0.0
        %5227 = vmatpush1.msra.mxu0 0.0
        %5228 = vmatprep.subr.mxu0 0.0
        %5229 = vmatpush1.msra.mxu0 0.0
        %5230 = vmatprep.subr.mxu0 0.0
        %5231 = vmatpush1.msra.mxu0 0.0
        %5232 = vmatprep.subr.mxu0 0.0
        %5233 = vmatpush1.msra.mxu0 0.0
        %5234 = vmatprep.subr.mxu0 0.0
        %5235 = vmatpush1.msra.mxu0 0.0
        %5236 = vmatprep.subr.mxu0 0.0
        %5237 = vmatpush1.msra.mxu0 0.0
        %5238 = vmatprep.subr.mxu0 0.0
        %5239 = vmatpush1.msra.mxu0 0.0
        %5240 = vmatprep.mubr.f32.mxu0 0.0
        %5241 = vmatmul.mubr.f32.gmra.mrb[0].mxu0 %v5103
        %v5242 = vpop.f32.mrb[0].mxu0
        %v5243 = vadd.f32 0.0, %v5242
        %v5244 = vpop.f32.mrb[0].mxu0
        %v5245 = vadd.f32 0.0, %v5244
        %5246 = vdwg.mxu0
        %5247 = vmatprep.subr.mxu0 %v5041
        %5248 = vmatpush1.msra.mxu0 %v5040
        %5249 = vmatprep.subr.mxu0 0.0
        %5250 = vmatpush1.msra.mxu0 0.0
        %5251 = vmatprep.subr.mxu0 0.0
        %5252 = vmatpush1.msra.mxu0 0.0
        %5253 = vmatprep.subr.mxu0 0.0
        %5254 = vmatpush1.msra.mxu0 0.0
        %5255 = vmatprep.subr.mxu0 0.0
        %5256 = vmatpush1.msra.mxu0 0.0
        %5257 = vmatprep.subr.mxu0 0.0
        %5258 = vmatpush1.msra.mxu0 0.0
        %5259 = vmatprep.subr.mxu0 0.0
        %5260 = vmatpush1.msra.mxu0 0.0
        %5261 = vmatprep.subr.mxu0 0.0
        %5262 = vmatpush1.msra.mxu0 0.0
        %5263 = vmatprep.subr.mxu0 0.0
        %5264 = vmatpush1.msra.mxu0 0.0
        %5265 = vmatprep.subr.mxu0 0.0
        %5266 = vmatpush1.msra.mxu0 0.0
        %5267 = vmatprep.subr.mxu0 0.0
        %5268 = vmatpush1.msra.mxu0 0.0
        %5269 = vmatprep.subr.mxu0 0.0
        %5270 = vmatpush1.msra.mxu0 0.0
        %5271 = vmatprep.subr.mxu0 0.0
        %5272 = vmatpush1.msra.mxu0 0.0
        %5273 = vmatprep.subr.mxu0 0.0
        %5274 = vmatpush1.msra.mxu0 0.0
        %5275 = vmatprep.subr.mxu0 0.0
        %5276 = vmatpush1.msra.mxu0 0.0
        %5277 = vmatprep.subr.mxu0 0.0
        %5278 = vmatpush1.msra.mxu0 0.0
        %5279 = vmatprep.subr.mxu0 0.0
        %5280 = vmatpush1.msra.mxu0 0.0
        %5281 = vmatprep.subr.mxu0 0.0
        %5282 = vmatpush1.msra.mxu0 0.0
        %5283 = vmatprep.subr.mxu0 0.0
        %5284 = vmatpush1.msra.mxu0 0.0
        %5285 = vmatprep.subr.mxu0 0.0
        %5286 = vmatpush1.msra.mxu0 0.0
        %5287 = vmatprep.subr.mxu0 0.0
        %5288 = vmatpush1.msra.mxu0 0.0
        %5289 = vmatprep.subr.mxu0 0.0
        %5290 = vmatpush1.msra.mxu0 0.0
        %5291 = vmatprep.subr.mxu0 0.0
        %5292 = vmatpush1.msra.mxu0 0.0
        %5293 = vmatprep.subr.mxu0 0.0
        %5294 = vmatpush1.msra.mxu0 0.0
        %5295 = vmatprep.subr.mxu0 0.0
        %5296 = vmatpush1.msra.mxu0 0.0
        %5297 = vmatprep.subr.mxu0 0.0
        %5298 = vmatpush1.msra.mxu0 0.0
        %5299 = vmatprep.subr.mxu0 0.0
        %5300 = vmatpush1.msra.mxu0 0.0
        %5301 = vmatprep.subr.mxu0 0.0
        %5302 = vmatpush1.msra.mxu0 0.0
        %5303 = vmatprep.subr.mxu0 0.0
        %5304 = vmatpush1.msra.mxu0 0.0
        %5305 = vmatprep.subr.mxu0 0.0
        %5306 = vmatpush1.msra.mxu0 0.0
        %5307 = vmatprep.subr.mxu0 0.0
        %5308 = vmatpush1.msra.mxu0 0.0
        %5309 = vmatprep.subr.mxu0 0.0
        %5310 = vmatpush1.msra.mxu0 0.0
        %5311 = vmatprep.mubr.f32.mxu0 0.0
        %5312 = vmatmul.mubr.f32.gmra.mrb[0].mxu0 %v5103
        %v5313 = vpop.f32.mrb[0].mxu0
        %v5314 = vadd.f32 0.0, %v5313
        %v5315 = vpop.f32.mrb[0].mxu0
        %v5316 = vadd.f32 0.0, %v5315
        %5317 = vdwg.mxu0
        %5318 = vmatprep.subr.mxu0 %v5043
        %5319 = vmatpush1.msra.mxu0 %v5042
        %5320 = vmatprep.subr.mxu0 0.0
        %5321 = vmatpush1.msra.mxu0 0.0
        %5322 = vmatprep.subr.mxu0 0.0
        %5323 = vmatpush1.msra.mxu0 0.0
        %5324 = vmatprep.subr.mxu0 0.0
        %5325 = vmatpush1.msra.mxu0 0.0
        %5326 = vmatprep.subr.mxu0 0.0
        %5327 = vmatpush1.msra.mxu0 0.0
        %5328 = vmatprep.subr.mxu0 0.0
        %5329 = vmatpush1.msra.mxu0 0.0
        %5330 = vmatprep.subr.mxu0 0.0
        %5331 = vmatpush1.msra.mxu0 0.0
        %5332 = vmatprep.subr.mxu0 0.0
        %5333 = vmatpush1.msra.mxu0 0.0
        %5334 = vmatprep.subr.mxu0 0.0
        %5335 = vmatpush1.msra.mxu0 0.0
        %5336 = vmatprep.subr.mxu0 0.0
        %5337 = vmatpush1.msra.mxu0 0.0
        %5338 = vmatprep.subr.mxu0 0.0
        %5339 = vmatpush1.msra.mxu0 0.0
        %5340 = vmatprep.subr.mxu0 0.0
        %5341 = vmatpush1.msra.mxu0 0.0
        %5342 = vmatprep.subr.mxu0 0.0
        %5343 = vmatpush1.msra.mxu0 0.0
        %5344 = vmatprep.subr.mxu0 0.0
        %5345 = vmatpush1.msra.mxu0 0.0
        %5346 = vmatprep.subr.mxu0 0.0
        %5347 = vmatpush1.msra.mxu0 0.0
        %5348 = vmatprep.subr.mxu0 0.0
        %5349 = vmatpush1.msra.mxu0 0.0
        %5350 = vmatprep.subr.mxu0 0.0
        %5351 = vmatpush1.msra.mxu0 0.0
        %5352 = vmatprep.subr.mxu0 0.0
        %5353 = vmatpush1.msra.mxu0 0.0
        %5354 = vmatprep.subr.mxu0 0.0
        %5355 = vmatpush1.msra.mxu0 0.0
        %5356 = vmatprep.subr.mxu0 0.0
        %5357 = vmatpush1.msra.mxu0 0.0
        %5358 = vmatprep.subr.mxu0 0.0
        %5359 = vmatpush1.msra.mxu0 0.0
        %5360 = vmatprep.subr.mxu0 0.0
        %5361 = vmatpush1.msra.mxu0 0.0
        %5362 = vmatprep.subr.mxu0 0.0
        %5363 = vmatpush1.msra.mxu0 0.0
        %5364 = vmatprep.subr.mxu0 0.0
        %5365 = vmatpush1.msra.mxu0 0.0
        %5366 = vmatprep.subr.mxu0 0.0
        %5367 = vmatpush1.msra.mxu0 0.0
        %5368 = vmatprep.subr.mxu0 0.0
        %5369 = vmatpush1.msra.mxu0 0.0
        %5370 = vmatprep.subr.mxu0 0.0
        %5371 = vmatpush1.msra.mxu0 0.0
        %5372 = vmatprep.subr.mxu0 0.0
        %5373 = vmatpush1.msra.mxu0 0.0
        %5374 = vmatprep.subr.mxu0 0.0
        %5375 = vmatpush1.msra.mxu0 0.0
        %5376 = vmatprep.subr.mxu0 0.0
        %5377 = vmatpush1.msra.mxu0 0.0
        %5378 = vmatprep.subr.mxu0 0.0
        %5379 = vmatpush1.msra.mxu0 0.0
        %5380 = vmatprep.subr.mxu0 0.0
        %5381 = vmatpush1.msra.mxu0 0.0
        %5382 = vmatprep.mubr.f32.mxu0 0.0
        %5383 = vmatmul.mubr.f32.gmra.mrb[0].mxu0 %v5103
        %v5384 = vpop.f32.mrb[0].mxu0
        %v5385 = vadd.f32 0.0, %v5384
        %v5386 = vpop.f32.mrb[0].mxu0
        %v5387 = vadd.f32 0.0, %v5386
        %5388 = vdwg.mxu0
        %5389 = vmatprep.subr.mxu0 %v5045
        %5390 = vmatpush1.msra.mxu0 %v5044
        %5391 = vmatprep.subr.mxu0 0.0
        %5392 = vmatpush1.msra.mxu0 0.0
        %5393 = vmatprep.subr.mxu0 0.0
        %5394 = vmatpush1.msra.mxu0 0.0
        %5395 = vmatprep.subr.mxu0 0.0
        %5396 = vmatpush1.msra.mxu0 0.0
        %5397 = vmatprep.subr.mxu0 0.0
        %5398 = vmatpush1.msra.mxu0 0.0
        %5399 = vmatprep.subr.mxu0 0.0
        %5400 = vmatpush1.msra.mxu0 0.0
        %5401 = vmatprep.subr.mxu0 0.0
        %5402 = vmatpush1.msra.mxu0 0.0
        %5403 = vmatprep.subr.mxu0 0.0
        %5404 = vmatpush1.msra.mxu0 0.0
        %5405 = vmatprep.subr.mxu0 0.0
        %5406 = vmatpush1.msra.mxu0 0.0
        %5407 = vmatprep.subr.mxu0 0.0
        %5408 = vmatpush1.msra.mxu0 0.0
        %5409 = vmatprep.subr.mxu0 0.0
        %5410 = vmatpush1.msra.mxu0 0.0
        %5411 = vmatprep.subr.mxu0 0.0
        %5412 = vmatpush1.msra.mxu0 0.0
        %5413 = vmatprep.subr.mxu0 0.0
        %5414 = vmatpush1.msra.mxu0 0.0
        %5415 = vmatprep.subr.mxu0 0.0
        %5416 = vmatpush1.msra.mxu0 0.0
        %5417 = vmatprep.subr.mxu0 0.0
        %5418 = vmatpush1.msra.mxu0 0.0
        %5419 = vmatprep.subr.mxu0 0.0
        %5420 = vmatpush1.msra.mxu0 0.0
        %5421 = vmatprep.subr.mxu0 0.0
        %5422 = vmatpush1.msra.mxu0 0.0
        %5423 = vmatprep.subr.mxu0 0.0
        %5424 = vmatpush1.msra.mxu0 0.0
        %5425 = vmatprep.subr.mxu0 0.0
        %5426 = vmatpush1.msra.mxu0 0.0
        %5427 = vmatprep.subr.mxu0 0.0
        %5428 = vmatpush1.msra.mxu0 0.0
        %5429 = vmatprep.subr.mxu0 0.0
        %5430 = vmatpush1.msra.mxu0 0.0
        %5431 = vmatprep.subr.mxu0 0.0
        %5432 = vmatpush1.msra.mxu0 0.0
        %5433 = vmatprep.subr.mxu0 0.0
        %5434 = vmatpush1.msra.mxu0 0.0
        %5435 = vmatprep.subr.mxu0 0.0
        %5436 = vmatpush1.msra.mxu0 0.0
        %5437 = vmatprep.subr.mxu0 0.0
        %5438 = vmatpush1.msra.mxu0 0.0
        %5439 = vmatprep.subr.mxu0 0.0
        %5440 = vmatpush1.msra.mxu0 0.0
        %5441 = vmatprep.subr.mxu0 0.0
        %5442 = vmatpush1.msra.mxu0 0.0
        %5443 = vmatprep.subr.mxu0 0.0
        %5444 = vmatpush1.msra.mxu0 0.0
        %5445 = vmatprep.subr.mxu0 0.0
        %5446 = vmatpush1.msra.mxu0 0.0
        %5447 = vmatprep.subr.mxu0 0.0
        %5448 = vmatpush1.msra.mxu0 0.0
        %5449 = vmatprep.subr.mxu0 0.0
        %5450 = vmatpush1.msra.mxu0 0.0
        %5451 = vmatprep.subr.mxu0 0.0
        %5452 = vmatpush1.msra.mxu0 0.0
        %5453 = vmatprep.mubr.f32.mxu0 0.0
        %5454 = vmatmul.mubr.f32.gmra.mrb[0].mxu0 %v5103
        %v5455 = vpop.f32.mrb[0].mxu0
        %v5456 = vadd.f32 0.0, %v5455
        %v5457 = vpop.f32.mrb[0].mxu0
        %v5458 = vadd.f32 0.0, %v5457
        %5459 = vdwg.mxu0
        %5460 = vmatprep.subr.mxu0 %v5047
        %5461 = vmatpush1.msra.mxu0 %v5046
        %5462 = vmatprep.subr.mxu0 0.0
        %5463 = vmatpush1.msra.mxu0 0.0
        %5464 = vmatprep.subr.mxu0 0.0
        %5465 = vmatpush1.msra.mxu0 0.0
        %5466 = vmatprep.subr.mxu0 0.0
        %5467 = vmatpush1.msra.mxu0 0.0
        %5468 = vmatprep.subr.mxu0 0.0
        %5469 = vmatpush1.msra.mxu0 0.0
        %5470 = vmatprep.subr.mxu0 0.0
        %5471 = vmatpush1.msra.mxu0 0.0
        %5472 = vmatprep.subr.mxu0 0.0
        %5473 = vmatpush1.msra.mxu0 0.0
        %5474 = vmatprep.subr.mxu0 0.0
        %5475 = vmatpush1.msra.mxu0 0.0
        %5476 = vmatprep.subr.mxu0 0.0
        %5477 = vmatpush1.msra.mxu0 0.0
        %5478 = vmatprep.subr.mxu0 0.0
        %5479 = vmatpush1.msra.mxu0 0.0
        %5480 = vmatprep.subr.mxu0 0.0
        %5481 = vmatpush1.msra.mxu0 0.0
        %5482 = vmatprep.subr.mxu0 0.0
        %5483 = vmatpush1.msra.mxu0 0.0
        %5484 = vmatprep.subr.mxu0 0.0
        %5485 = vmatpush1.msra.mxu0 0.0
        %5486 = vmatprep.subr.mxu0 0.0
        %5487 = vmatpush1.msra.mxu0 0.0
        %5488 = vmatprep.subr.mxu0 0.0
        %5489 = vmatpush1.msra.mxu0 0.0
        %5490 = vmatprep.subr.mxu0 0.0
        %5491 = vmatpush1.msra.mxu0 0.0
        %5492 = vmatprep.subr.mxu0 0.0
        %5493 = vmatpush1.msra.mxu0 0.0
        %5494 = vmatprep.subr.mxu0 0.0
        %5495 = vmatpush1.msra.mxu0 0.0
        %5496 = vmatprep.subr.mxu0 0.0
        %5497 = vmatpush1.msra.mxu0 0.0
        %5498 = vmatprep.subr.mxu0 0.0
        %5499 = vmatpush1.msra.mxu0 0.0
        %5500 = vmatprep.subr.mxu0 0.0
        %5501 = vmatpush1.msra.mxu0 0.0
        %5502 = vmatprep.subr.mxu0 0.0
        %5503 = vmatpush1.msra.mxu0 0.0
        %5504 = vmatprep.subr.mxu0 0.0
        %5505 = vmatpush1.msra.mxu0 0.0
        %5506 = vmatprep.subr.mxu0 0.0
        %5507 = vmatpush1.msra.mxu0 0.0
        %5508 = vmatprep.subr.mxu0 0.0
        %5509 = vmatpush1.msra.mxu0 0.0
        %5510 = vmatprep.subr.mxu0 0.0
        %5511 = vmatpush1.msra.mxu0 0.0
        %5512 = vmatprep.subr.mxu0 0.0
        %5513 = vmatpush1.msra.mxu0 0.0
        %5514 = vmatprep.subr.mxu0 0.0
        %5515 = vmatpush1.msra.mxu0 0.0
        %5516 = vmatprep.subr.mxu0 0.0
        %5517 = vmatpush1.msra.mxu0 0.0
        %5518 = vmatprep.subr.mxu0 0.0
        %5519 = vmatpush1.msra.mxu0 0.0
        %5520 = vmatprep.subr.mxu0 0.0
        %5521 = vmatpush1.msra.mxu0 0.0
        %5522 = vmatprep.subr.mxu0 0.0
        %5523 = vmatpush1.msra.mxu0 0.0
        %5524 = vmatprep.mubr.f32.mxu0 0.0
        %5525 = vmatmul.mubr.f32.gmra.mrb[0].mxu0 %v5103
        %v5526 = vpop.f32.mrb[0].mxu0
        %v5527 = vadd.f32 0.0, %v5526
        %v5528 = vpop.f32.mrb[0].mxu0
        %v5529 = vadd.f32 0.0, %v5528
        %5530 = vdwg.mxu0
        %5531 = vmatprep.subr.mxu0 %v5049
        %5532 = vmatpush1.msra.mxu0 %v5048
        %5533 = vmatprep.subr.mxu0 0.0
        %5534 = vmatpush1.msra.mxu0 0.0
        %5535 = vmatprep.subr.mxu0 0.0
        %5536 = vmatpush1.msra.mxu0 0.0
        %5537 = vmatprep.subr.mxu0 0.0
        %5538 = vmatpush1.msra.mxu0 0.0
        %5539 = vmatprep.subr.mxu0 0.0
        %5540 = vmatpush1.msra.mxu0 0.0
        %5541 = vmatprep.subr.mxu0 0.0
        %5542 = vmatpush1.msra.mxu0 0.0
        %5543 = vmatprep.subr.mxu0 0.0
        %5544 = vmatpush1.msra.mxu0 0.0
        %5545 = vmatprep.subr.mxu0 0.0
        %5546 = vmatpush1.msra.mxu0 0.0
        %5547 = vmatprep.subr.mxu0 0.0
        %5548 = vmatpush1.msra.mxu0 0.0
        %5549 = vmatprep.subr.mxu0 0.0
        %5550 = vmatpush1.msra.mxu0 0.0
        %5551 = vmatprep.subr.mxu0 0.0
        %5552 = vmatpush1.msra.mxu0 0.0
        %5553 = vmatprep.subr.mxu0 0.0
        %5554 = vmatpush1.msra.mxu0 0.0
        %5555 = vmatprep.subr.mxu0 0.0
        %5556 = vmatpush1.msra.mxu0 0.0
        %5557 = vmatprep.subr.mxu0 0.0
        %5558 = vmatpush1.msra.mxu0 0.0
        %5559 = vmatprep.subr.mxu0 0.0
        %5560 = vmatpush1.msra.mxu0 0.0
        %5561 = vmatprep.subr.mxu0 0.0
        %5562 = vmatpush1.msra.mxu0 0.0
        %5563 = vmatprep.subr.mxu0 0.0
        %5564 = vmatpush1.msra.mxu0 0.0
        %5565 = vmatprep.subr.mxu0 0.0
        %5566 = vmatpush1.msra.mxu0 0.0
        %5567 = vmatprep.subr.mxu0 0.0
        %5568 = vmatpush1.msra.mxu0 0.0
        %5569 = vmatprep.subr.mxu0 0.0
        %5570 = vmatpush1.msra.mxu0 0.0
        %5571 = vmatprep.subr.mxu0 0.0
        %5572 = vmatpush1.msra.mxu0 0.0
        %5573 = vmatprep.subr.mxu0 0.0
        %5574 = vmatpush1.msra.mxu0 0.0
        %5575 = vmatprep.subr.mxu0 0.0
        %5576 = vmatpush1.msra.mxu0 0.0
        %5577 = vmatprep.subr.mxu0 0.0
        %5578 = vmatpush1.msra.mxu0 0.0
        %5579 = vmatprep.subr.mxu0 0.0
        %5580 = vmatpush1.msra.mxu0 0.0
        %5581 = vmatprep.subr.mxu0 0.0
        %5582 = vmatpush1.msra.mxu0 0.0
        %5583 = vmatprep.subr.mxu0 0.0
        %5584 = vmatpush1.msra.mxu0 0.0
        %5585 = vmatprep.subr.mxu0 0.0
        %5586 = vmatpush1.msra.mxu0 0.0
        %5587 = vmatprep.subr.mxu0 0.0
        %5588 = vmatpush1.msra.mxu0 0.0
        %5589 = vmatprep.subr.mxu0 0.0
        %5590 = vmatpush1.msra.mxu0 0.0
        %5591 = vmatprep.subr.mxu0 0.0
        %5592 = vmatpush1.msra.mxu0 0.0
        %5593 = vmatprep.subr.mxu0 0.0
        %5594 = vmatpush1.msra.mxu0 0.0
        %5595 = vmatprep.mubr.f32.mxu0 0.0
        %5596 = vmatmul.mubr.f32.gmra.mrb[0].mxu0 %v5103
        %v5597 = vpop.f32.mrb[0].mxu0
        %v5598 = vadd.f32 0.0, %v5597
        %v5599 = vpop.f32.mrb[0].mxu0
        %v5600 = vadd.f32 0.0, %v5599
        %5601 = vdwg.mxu0
        %5602 = vmatprep.subr.mxu0 %v5051
        %5603 = vmatpush1.msra.mxu0 %v5050
        %5604 = vmatprep.subr.mxu0 0.0
        %5605 = vmatpush1.msra.mxu0 0.0
        %5606 = vmatprep.subr.mxu0 0.0
        %5607 = vmatpush1.msra.mxu0 0.0
        %5608 = vmatprep.subr.mxu0 0.0
        %5609 = vmatpush1.msra.mxu0 0.0
        %5610 = vmatprep.subr.mxu0 0.0
        %5611 = vmatpush1.msra.mxu0 0.0
        %5612 = vmatprep.subr.mxu0 0.0
        %5613 = vmatpush1.msra.mxu0 0.0
        %5614 = vmatprep.subr.mxu0 0.0
        %5615 = vmatpush1.msra.mxu0 0.0
        %5616 = vmatprep.subr.mxu0 0.0
        %5617 = vmatpush1.msra.mxu0 0.0
        %5618 = vmatprep.subr.mxu0 0.0
        %5619 = vmatpush1.msra.mxu0 0.0
        %5620 = vmatprep.subr.mxu0 0.0
        %5621 = vmatpush1.msra.mxu0 0.0
        %5622 = vmatprep.subr.mxu0 0.0
        %5623 = vmatpush1.msra.mxu0 0.0
        %5624 = vmatprep.subr.mxu0 0.0
        %5625 = vmatpush1.msra.mxu0 0.0
        %5626 = vmatprep.subr.mxu0 0.0
        %5627 = vmatpush1.msra.mxu0 0.0
        %5628 = vmatprep.subr.mxu0 0.0
        %5629 = vmatpush1.msra.mxu0 0.0
        %5630 = vmatprep.subr.mxu0 0.0
        %5631 = vmatpush1.msra.mxu0 0.0
        %5632 = vmatprep.subr.mxu0 0.0
        %5633 = vmatpush1.msra.mxu0 0.0
        %5634 = vmatprep.subr.mxu0 0.0
        %5635 = vmatpush1.msra.mxu0 0.0
        %5636 = vmatprep.subr.mxu0 0.0
        %5637 = vmatpush1.msra.mxu0 0.0
        %5638 = vmatprep.subr.mxu0 0.0
        %5639 = vmatpush1.msra.mxu0 0.0
        %5640 = vmatprep.subr.mxu0 0.0
        %5641 = vmatpush1.msra.mxu0 0.0
        %5642 = vmatprep.subr.mxu0 0.0
        %5643 = vmatpush1.msra.mxu0 0.0
        %5644 = vmatprep.subr.mxu0 0.0
        %5645 = vmatpush1.msra.mxu0 0.0
        %5646 = vmatprep.subr.mxu0 0.0
        %5647 = vmatpush1.msra.mxu0 0.0
        %5648 = vmatprep.subr.mxu0 0.0
        %5649 = vmatpush1.msra.mxu0 0.0
        %5650 = vmatprep.subr.mxu0 0.0
        %5651 = vmatpush1.msra.mxu0 0.0
        %5652 = vmatprep.subr.mxu0 0.0
        %5653 = vmatpush1.msra.mxu0 0.0
        %5654 = vmatprep.subr.mxu0 0.0
        %5655 = vmatpush1.msra.mxu0 0.0
        %5656 = vmatprep.subr.mxu0 0.0
        %5657 = vmatpush1.msra.mxu0 0.0
        %5658 = vmatprep.subr.mxu0 0.0
        %5659 = vmatpush1.msra.mxu0 0.0
        %5660 = vmatprep.subr.mxu0 0.0
        %5661 = vmatpush1.msra.mxu0 0.0
        %5662 = vmatprep.subr.mxu0 0.0
        %5663 = vmatpush1.msra.mxu0 0.0
        %5664 = vmatprep.subr.mxu0 0.0
        %5665 = vmatpush1.msra.mxu0 0.0
        %5666 = vmatprep.mubr.f32.mxu0 0.0
        %5667 = vmatmul.mubr.f32.gmra.mrb[0].mxu0 %v5103
        %v5668 = vpop.f32.mrb[0].mxu0
        %v5669 = vadd.f32 0.0, %v5668
        %v5670 = vpop.f32.mrb[0].mxu0
        %v5671 = vadd.f32 0.0, %v5670
        %5672 = vdwg.mxu0
        %5673 = vmatprep.subr.mxu0 %v5053
        %5674 = vmatpush1.msra.mxu0 %v5052
        %5675 = vmatprep.subr.mxu0 0.0
        %5676 = vmatpush1.msra.mxu0 0.0
        %5677 = vmatprep.subr.mxu0 0.0
        %5678 = vmatpush1.msra.mxu0 0.0
        %5679 = vmatprep.subr.mxu0 0.0
        %5680 = vmatpush1.msra.mxu0 0.0
        %5681 = vmatprep.subr.mxu0 0.0
        %5682 = vmatpush1.msra.mxu0 0.0
        %5683 = vmatprep.subr.mxu0 0.0
        %5684 = vmatpush1.msra.mxu0 0.0
        %5685 = vmatprep.subr.mxu0 0.0
        %5686 = vmatpush1.msra.mxu0 0.0
        %5687 = vmatprep.subr.mxu0 0.0
        %5688 = vmatpush1.msra.mxu0 0.0
        %5689 = vmatprep.subr.mxu0 0.0
        %5690 = vmatpush1.msra.mxu0 0.0
        %5691 = vmatprep.subr.mxu0 0.0
        %5692 = vmatpush1.msra.mxu0 0.0
        %5693 = vmatprep.subr.mxu0 0.0
        %5694 = vmatpush1.msra.mxu0 0.0
        %5695 = vmatprep.subr.mxu0 0.0
        %5696 = vmatpush1.msra.mxu0 0.0
        %5697 = vmatprep.subr.mxu0 0.0
        %5698 = vmatpush1.msra.mxu0 0.0
        %5699 = vmatprep.subr.mxu0 0.0
        %5700 = vmatpush1.msra.mxu0 0.0
        %5701 = vmatprep.subr.mxu0 0.0
        %5702 = vmatpush1.msra.mxu0 0.0
        %5703 = vmatprep.subr.mxu0 0.0
        %5704 = vmatpush1.msra.mxu0 0.0
        %5705 = vmatprep.subr.mxu0 0.0
        %5706 = vmatpush1.msra.mxu0 0.0
        %5707 = vmatprep.subr.mxu0 0.0
        %5708 = vmatpush1.msra.mxu0 0.0
        %5709 = vmatprep.subr.mxu0 0.0
        %5710 = vmatpush1.msra.mxu0 0.0
        %5711 = vmatprep.subr.mxu0 0.0
        %5712 = vmatpush1.msra.mxu0 0.0
        %5713 = vmatprep.subr.mxu0 0.0
        %5714 = vmatpush1.msra.mxu0 0.0
        %5715 = vmatprep.subr.mxu0 0.0
        %5716 = vmatpush1.msra.mxu0 0.0
        %5717 = vmatprep.subr.mxu0 0.0
        %5718 = vmatpush1.msra.mxu0 0.0
        %5719 = vmatprep.subr.mxu0 0.0
        %5720 = vmatpush1.msra.mxu0 0.0
        %5721 = vmatprep.subr.mxu0 0.0
        %5722 = vmatpush1.msra.mxu0 0.0
        %5723 = vmatprep.subr.mxu0 0.0
        %5724 = vmatpush1.msra.mxu0 0.0
        %5725 = vmatprep.subr.mxu0 0.0
        %5726 = vmatpush1.msra.mxu0 0.0
        %5727 = vmatprep.subr.mxu0 0.0
        %5728 = vmatpush1.msra.mxu0 0.0
        %5729 = vmatprep.subr.mxu0 0.0
        %5730 = vmatpush1.msra.mxu0 0.0
        %5731 = vmatprep.subr.mxu0 0.0
        %5732 = vmatpush1.msra.mxu0 0.0
        %5733 = vmatprep.subr.mxu0 0.0
        %5734 = vmatpush1.msra.mxu0 0.0
        %5735 = vmatprep.subr.mxu0 0.0
        %5736 = vmatpush1.msra.mxu0 0.0
        %5737 = vmatprep.mubr.f32.mxu0 0.0
        %5738 = vmatmul.mubr.f32.gmra.mrb[0].mxu0 %v5103
        %v5739 = vpop.f32.mrb[0].mxu0
        %v5740 = vadd.f32 0.0, %v5739
        %v5741 = vpop.f32.mrb[0].mxu0
        %v5742 = vadd.f32 0.0, %v5741
        %5743 = vdwg.mxu0
        %5744 = vmatprep.subr.mxu0 %v5055
        %5745 = vmatpush1.msra.mxu0 %v5054
        %5746 = vmatprep.subr.mxu0 0.0
        %5747 = vmatpush1.msra.mxu0 0.0
        %5748 = vmatprep.subr.mxu0 0.0
        %5749 = vmatpush1.msra.mxu0 0.0
        %5750 = vmatprep.subr.mxu0 0.0
        %5751 = vmatpush1.msra.mxu0 0.0
        %5752 = vmatprep.subr.mxu0 0.0
        %5753 = vmatpush1.msra.mxu0 0.0
        %5754 = vmatprep.subr.mxu0 0.0
        %5755 = vmatpush1.msra.mxu0 0.0
        %5756 = vmatprep.subr.mxu0 0.0
        %5757 = vmatpush1.msra.mxu0 0.0
        %5758 = vmatprep.subr.mxu0 0.0
        %5759 = vmatpush1.msra.mxu0 0.0
        %5760 = vmatprep.subr.mxu0 0.0
        %5761 = vmatpush1.msra.mxu0 0.0
        %5762 = vmatprep.subr.mxu0 0.0
        %5763 = vmatpush1.msra.mxu0 0.0
        %5764 = vmatprep.subr.mxu0 0.0
        %5765 = vmatpush1.msra.mxu0 0.0
        %5766 = vmatprep.subr.mxu0 0.0
        %5767 = vmatpush1.msra.mxu0 0.0
        %5768 = vmatprep.subr.mxu0 0.0
        %5769 = vmatpush1.msra.mxu0 0.0
        %5770 = vmatprep.subr.mxu0 0.0
        %5771 = vmatpush1.msra.mxu0 0.0
        %5772 = vmatprep.subr.mxu0 0.0
        %5773 = vmatpush1.msra.mxu0 0.0
        %5774 = vmatprep.subr.mxu0 0.0
        %5775 = vmatpush1.msra.mxu0 0.0
        %5776 = vmatprep.subr.mxu0 0.0
        %5777 = vmatpush1.msra.mxu0 0.0
        %5778 = vmatprep.subr.mxu0 0.0
        %5779 = vmatpush1.msra.mxu0 0.0
        %5780 = vmatprep.subr.mxu0 0.0
        %5781 = vmatpush1.msra.mxu0 0.0
        %5782 = vmatprep.subr.mxu0 0.0
        %5783 = vmatpush1.msra.mxu0 0.0
        %5784 = vmatprep.subr.mxu0 0.0
        %5785 = vmatpush1.msra.mxu0 0.0
        %5786 = vmatprep.subr.mxu0 0.0
        %5787 = vmatpush1.msra.mxu0 0.0
        %5788 = vmatprep.subr.mxu0 0.0
        %5789 = vmatpush1.msra.mxu0 0.0
        %5790 = vmatprep.subr.mxu0 0.0
        %5791 = vmatpush1.msra.mxu0 0.0
        %5792 = vmatprep.subr.mxu0 0.0
        %5793 = vmatpush1.msra.mxu0 0.0
        %5794 = vmatprep.subr.mxu0 0.0
        %5795 = vmatpush1.msra.mxu0 0.0
        %5796 = vmatprep.subr.mxu0 0.0
        %5797 = vmatpush1.msra.mxu0 0.0
        %5798 = vmatprep.subr.mxu0 0.0
        %5799 = vmatpush1.msra.mxu0 0.0
        %5800 = vmatprep.subr.mxu0 0.0
        %5801 = vmatpush1.msra.mxu0 0.0
        %5802 = vmatprep.subr.mxu0 0.0
        %5803 = vmatpush1.msra.mxu0 0.0
        %5804 = vmatprep.subr.mxu0 0.0
        %5805 = vmatpush1.msra.mxu0 0.0
        %5806 = vmatprep.subr.mxu0 0.0
        %5807 = vmatpush1.msra.mxu0 0.0
        %5808 = vmatprep.mubr.f32.mxu0 0.0
        %5809 = vmatmul.mubr.f32.gmra.mrb[0].mxu0 %v5103
        %v5810 = vpop.f32.mrb[0].mxu0
        %v5811 = vadd.f32 0.0, %v5810
        %v5812 = vpop.f32.mrb[0].mxu0
        %v5813 = vadd.f32 0.0, %v5812
        %5814 = vdwg.mxu0
        %5815 = vmatprep.subr.mxu0 %v5057
        %5816 = vmatpush1.msra.mxu0 %v5056
        %5817 = vmatprep.subr.mxu0 0.0
        %5818 = vmatpush1.msra.mxu0 0.0
        %5819 = vmatprep.subr.mxu0 0.0
        %5820 = vmatpush1.msra.mxu0 0.0
        %5821 = vmatprep.subr.mxu0 0.0
        %5822 = vmatpush1.msra.mxu0 0.0
        %5823 = vmatprep.subr.mxu0 0.0
        %5824 = vmatpush1.msra.mxu0 0.0
        %5825 = vmatprep.subr.mxu0 0.0
        %5826 = vmatpush1.msra.mxu0 0.0
        %5827 = vmatprep.subr.mxu0 0.0
        %5828 = vmatpush1.msra.mxu0 0.0
        %5829 = vmatprep.subr.mxu0 0.0
        %5830 = vmatpush1.msra.mxu0 0.0
        %5831 = vmatprep.subr.mxu0 0.0
        %5832 = vmatpush1.msra.mxu0 0.0
        %5833 = vmatprep.subr.mxu0 0.0
        %5834 = vmatpush1.msra.mxu0 0.0
        %5835 = vmatprep.subr.mxu0 0.0
        %5836 = vmatpush1.msra.mxu0 0.0
        %5837 = vmatprep.subr.mxu0 0.0
        %5838 = vmatpush1.msra.mxu0 0.0
        %5839 = vmatprep.subr.mxu0 0.0
        %5840 = vmatpush1.msra.mxu0 0.0
        %5841 = vmatprep.subr.mxu0 0.0
        %5842 = vmatpush1.msra.mxu0 0.0
        %5843 = vmatprep.subr.mxu0 0.0
        %5844 = vmatpush1.msra.mxu0 0.0
        %5845 = vmatprep.subr.mxu0 0.0
        %5846 = vmatpush1.msra.mxu0 0.0
        %5847 = vmatprep.subr.mxu0 0.0
        %5848 = vmatpush1.msra.mxu0 0.0
        %5849 = vmatprep.subr.mxu0 0.0
        %5850 = vmatpush1.msra.mxu0 0.0
        %5851 = vmatprep.subr.mxu0 0.0
        %5852 = vmatpush1.msra.mxu0 0.0
        %5853 = vmatprep.subr.mxu0 0.0
        %5854 = vmatpush1.msra.mxu0 0.0
        %5855 = vmatprep.subr.mxu0 0.0
        %5856 = vmatpush1.msra.mxu0 0.0
        %5857 = vmatprep.subr.mxu0 0.0
        %5858 = vmatpush1.msra.mxu0 0.0
        %5859 = vmatprep.subr.mxu0 0.0
        %5860 = vmatpush1.msra.mxu0 0.0
        %5861 = vmatprep.subr.mxu0 0.0
        %5862 = vmatpush1.msra.mxu0 0.0
        %5863 = vmatprep.subr.mxu0 0.0
        %5864 = vmatpush1.msra.mxu0 0.0
        %5865 = vmatprep.subr.mxu0 0.0
        %5866 = vmatpush1.msra.mxu0 0.0
        %5867 = vmatprep.subr.mxu0 0.0
        %5868 = vmatpush1.msra.mxu0 0.0
        %5869 = vmatprep.subr.mxu0 0.0
        %5870 = vmatpush1.msra.mxu0 0.0
        %5871 = vmatprep.subr.mxu0 0.0
        %5872 = vmatpush1.msra.mxu0 0.0
        %5873 = vmatprep.subr.mxu0 0.0
        %5874 = vmatpush1.msra.mxu0 0.0
        %5875 = vmatprep.subr.mxu0 0.0
        %5876 = vmatpush1.msra.mxu0 0.0
        %5877 = vmatprep.subr.mxu0 0.0
        %5878 = vmatpush1.msra.mxu0 0.0
        %5879 = vmatprep.mubr.f32.mxu0 0.0
        %5880 = vmatmul.mubr.f32.gmra.mrb[0].mxu0 %v5103
        %v5881 = vpop.f32.mrb[0].mxu0
        %v5882 = vadd.f32 0.0, %v5881
        %v5883 = vpop.f32.mrb[0].mxu0
        %v5884 = vadd.f32 0.0, %v5883
        %5885 = vdwg.mxu0
        %5886 = vmatprep.subr.mxu0 %v5059
        %5887 = vmatpush1.msra.mxu0 %v5058
        %5888 = vmatprep.subr.mxu0 0.0
        %5889 = vmatpush1.msra.mxu0 0.0
        %5890 = vmatprep.subr.mxu0 0.0
        %5891 = vmatpush1.msra.mxu0 0.0
        %5892 = vmatprep.subr.mxu0 0.0
        %5893 = vmatpush1.msra.mxu0 0.0
        %5894 = vmatprep.subr.mxu0 0.0
        %5895 = vmatpush1.msra.mxu0 0.0
        %5896 = vmatprep.subr.mxu0 0.0
        %5897 = vmatpush1.msra.mxu0 0.0
        %5898 = vmatprep.subr.mxu0 0.0
        %5899 = vmatpush1.msra.mxu0 0.0
        %5900 = vmatprep.subr.mxu0 0.0
        %5901 = vmatpush1.msra.mxu0 0.0
        %5902 = vmatprep.subr.mxu0 0.0
        %5903 = vmatpush1.msra.mxu0 0.0
        %5904 = vmatprep.subr.mxu0 0.0
        %5905 = vmatpush1.msra.mxu0 0.0
        %5906 = vmatprep.subr.mxu0 0.0
        %5907 = vmatpush1.msra.mxu0 0.0
        %5908 = vmatprep.subr.mxu0 0.0
        %5909 = vmatpush1.msra.mxu0 0.0
        %5910 = vmatprep.subr.mxu0 0.0
        %5911 = vmatpush1.msra.mxu0 0.0
        %5912 = vmatprep.subr.mxu0 0.0
        %5913 = vmatpush1.msra.mxu0 0.0
        %5914 = vmatprep.subr.mxu0 0.0
        %5915 = vmatpush1.msra.mxu0 0.0
        %5916 = vmatprep.subr.mxu0 0.0
        %5917 = vmatpush1.msra.mxu0 0.0
        %5918 = vmatprep.subr.mxu0 0.0
        %5919 = vmatpush1.msra.mxu0 0.0
        %5920 = vmatprep.subr.mxu0 0.0
        %5921 = vmatpush1.msra.mxu0 0.0
        %5922 = vmatprep.subr.mxu0 0.0
        %5923 = vmatpush1.msra.mxu0 0.0
        %5924 = vmatprep.subr.mxu0 0.0
        %5925 = vmatpush1.msra.mxu0 0.0
        %5926 = vmatprep.subr.mxu0 0.0
        %5927 = vmatpush1.msra.mxu0 0.0
        %5928 = vmatprep.subr.mxu0 0.0
        %5929 = vmatpush1.msra.mxu0 0.0
        %5930 = vmatprep.subr.mxu0 0.0
        %5931 = vmatpush1.msra.mxu0 0.0
        %5932 = vmatprep.subr.mxu0 0.0
        %5933 = vmatpush1.msra.mxu0 0.0
        %5934 = vmatprep.subr.mxu0 0.0
        %5935 = vmatpush1.msra.mxu0 0.0
        %5936 = vmatprep.subr.mxu0 0.0
        %5937 = vmatpush1.msra.mxu0 0.0
        %5938 = vmatprep.subr.mxu0 0.0
        %5939 = vmatpush1.msra.mxu0 0.0
        %5940 = vmatprep.subr.mxu0 0.0
        %5941 = vmatpush1.msra.mxu0 0.0
        %5942 = vmatprep.subr.mxu0 0.0
        %5943 = vmatpush1.msra.mxu0 0.0
        %5944 = vmatprep.subr.mxu0 0.0
        %5945 = vmatpush1.msra.mxu0 0.0
        %5946 = vmatprep.subr.mxu0 0.0
        %5947 = vmatpush1.msra.mxu0 0.0
        %5948 = vmatprep.subr.mxu0 0.0
        %5949 = vmatpush1.msra.mxu0 0.0
        %5950 = vmatprep.mubr.f32.mxu0 0.0
        %5951 = vmatmul.mubr.f32.gmra.mrb[0].mxu0 %v5103
        %v5952 = vpop.f32.mrb[0].mxu0
        %v5953 = vadd.f32 0.0, %v5952
        %v5954 = vpop.f32.mrb[0].mxu0
        %v5955 = vadd.f32 0.0, %v5954
        %5956 = vdwg.mxu0
        %5957 = vmatprep.subr.mxu0 %v5061
        %5958 = vmatpush1.msra.mxu0 %v5060
        %5959 = vmatprep.subr.mxu0 0.0
        %5960 = vmatpush1.msra.mxu0 0.0
        %5961 = vmatprep.subr.mxu0 0.0
        %5962 = vmatpush1.msra.mxu0 0.0
        %5963 = vmatprep.subr.mxu0 0.0
        %5964 = vmatpush1.msra.mxu0 0.0
        %5965 = vmatprep.subr.mxu0 0.0
        %5966 = vmatpush1.msra.mxu0 0.0
        %5967 = vmatprep.subr.mxu0 0.0
        %5968 = vmatpush1.msra.mxu0 0.0
        %5969 = vmatprep.subr.mxu0 0.0
        %5970 = vmatpush1.msra.mxu0 0.0
        %5971 = vmatprep.subr.mxu0 0.0
        %5972 = vmatpush1.msra.mxu0 0.0
        %5973 = vmatprep.subr.mxu0 0.0
        %5974 = vmatpush1.msra.mxu0 0.0
        %5975 = vmatprep.subr.mxu0 0.0
        %5976 = vmatpush1.msra.mxu0 0.0
        %5977 = vmatprep.subr.mxu0 0.0
        %5978 = vmatpush1.msra.mxu0 0.0
        %5979 = vmatprep.subr.mxu0 0.0
        %5980 = vmatpush1.msra.mxu0 0.0
        %5981 = vmatprep.subr.mxu0 0.0
        %5982 = vmatpush1.msra.mxu0 0.0
        %5983 = vmatprep.subr.mxu0 0.0
        %5984 = vmatpush1.msra.mxu0 0.0
        %5985 = vmatprep.subr.mxu0 0.0
        %5986 = vmatpush1.msra.mxu0 0.0
        %5987 = vmatprep.subr.mxu0 0.0
        %5988 = vmatpush1.msra.mxu0 0.0
        %5989 = vmatprep.subr.mxu0 0.0
        %5990 = vmatpush1.msra.mxu0 0.0
        %5991 = vmatprep.subr.mxu0 0.0
        %5992 = vmatpush1.msra.mxu0 0.0
        %5993 = vmatprep.subr.mxu0 0.0
        %5994 = vmatpush1.msra.mxu0 0.0
        %5995 = vmatprep.subr.mxu0 0.0
        %5996 = vmatpush1.msra.mxu0 0.0
        %5997 = vmatprep.subr.mxu0 0.0
        %5998 = vmatpush1.msra.mxu0 0.0
        %5999 = vmatprep.subr.mxu0 0.0
        %6000 = vmatpush1.msra.mxu0 0.0
        %6001 = vmatprep.subr.mxu0 0.0
        %6002 = vmatpush1.msra.mxu0 0.0
        %6003 = vmatprep.subr.mxu0 0.0
        %6004 = vmatpush1.msra.mxu0 0.0
        %6005 = vmatprep.subr.mxu0 0.0
        %6006 = vmatpush1.msra.mxu0 0.0
        %6007 = vmatprep.subr.mxu0 0.0
        %6008 = vmatpush1.msra.mxu0 0.0
        %6009 = vmatprep.subr.mxu0 0.0
        %6010 = vmatpush1.msra.mxu0 0.0
        %6011 = vmatprep.subr.mxu0 0.0
        %6012 = vmatpush1.msra.mxu0 0.0
        %6013 = vmatprep.subr.mxu0 0.0
        %6014 = vmatpush1.msra.mxu0 0.0
        %6015 = vmatprep.subr.mxu0 0.0
        %6016 = vmatpush1.msra.mxu0 0.0
        %6017 = vmatprep.subr.mxu0 0.0
        %6018 = vmatpush1.msra.mxu0 0.0
        %6019 = vmatprep.subr.mxu0 0.0
        %6020 = vmatpush1.msra.mxu0 0.0
        %6021 = vmatprep.mubr.f32.mxu0 0.0
        %6022 = vmatmul.mubr.f32.gmra.mrb[0].mxu0 %v5103
        %v6023 = vpop.f32.mrb[0].mxu0
        %v6024 = vadd.f32 0.0, %v6023
        %v6025 = vpop.f32.mrb[0].mxu0
        %v6026 = vadd.f32 0.0, %v6025
        %6027 = vdwg.mxu0
        %6028 = vmatprep.subr.mxu0 %v5063
        %6029 = vmatpush1.msra.mxu0 %v5062
        %6030 = vmatprep.subr.mxu0 0.0
        %6031 = vmatpush1.msra.mxu0 0.0
        %6032 = vmatprep.subr.mxu0 0.0
        %6033 = vmatpush1.msra.mxu0 0.0
        %6034 = vmatprep.subr.mxu0 0.0
        %6035 = vmatpush1.msra.mxu0 0.0
        %6036 = vmatprep.subr.mxu0 0.0
        %6037 = vmatpush1.msra.mxu0 0.0
        %6038 = vmatprep.subr.mxu0 0.0
        %6039 = vmatpush1.msra.mxu0 0.0
        %6040 = vmatprep.subr.mxu0 0.0
        %6041 = vmatpush1.msra.mxu0 0.0
        %6042 = vmatprep.subr.mxu0 0.0
        %6043 = vmatpush1.msra.mxu0 0.0
        %6044 = vmatprep.subr.mxu0 0.0
        %6045 = vmatpush1.msra.mxu0 0.0
        %6046 = vmatprep.subr.mxu0 0.0
        %6047 = vmatpush1.msra.mxu0 0.0
        %6048 = vmatprep.subr.mxu0 0.0
        %6049 = vmatpush1.msra.mxu0 0.0
        %6050 = vmatprep.subr.mxu0 0.0
        %6051 = vmatpush1.msra.mxu0 0.0
        %6052 = vmatprep.subr.mxu0 0.0
        %6053 = vmatpush1.msra.mxu0 0.0
        %6054 = vmatprep.subr.mxu0 0.0
        %6055 = vmatpush1.msra.mxu0 0.0
        %6056 = vmatprep.subr.mxu0 0.0
        %6057 = vmatpush1.msra.mxu0 0.0
        %6058 = vmatprep.subr.mxu0 0.0
        %6059 = vmatpush1.msra.mxu0 0.0
        %6060 = vmatprep.subr.mxu0 0.0
        %6061 = vmatpush1.msra.mxu0 0.0
        %6062 = vmatprep.subr.mxu0 0.0
        %6063 = vmatpush1.msra.mxu0 0.0
        %6064 = vmatprep.subr.mxu0 0.0
        %6065 = vmatpush1.msra.mxu0 0.0
        %6066 = vmatprep.subr.mxu0 0.0
        %6067 = vmatpush1.msra.mxu0 0.0
        %6068 = vmatprep.subr.mxu0 0.0
        %6069 = vmatpush1.msra.mxu0 0.0
        %6070 = vmatprep.subr.mxu0 0.0
        %6071 = vmatpush1.msra.mxu0 0.0
        %6072 = vmatprep.subr.mxu0 0.0
        %6073 = vmatpush1.msra.mxu0 0.0
        %6074 = vmatprep.subr.mxu0 0.0
        %6075 = vmatpush1.msra.mxu0 0.0
        %6076 = vmatprep.subr.mxu0 0.0
        %6077 = vmatpush1.msra.mxu0 0.0
        %6078 = vmatprep.subr.mxu0 0.0
        %6079 = vmatpush1.msra.mxu0 0.0
        %6080 = vmatprep.subr.mxu0 0.0
        %6081 = vmatpush1.msra.mxu0 0.0
        %6082 = vmatprep.subr.mxu0 0.0
        %6083 = vmatpush1.msra.mxu0 0.0
        %6084 = vmatprep.subr.mxu0 0.0
        %6085 = vmatpush1.msra.mxu0 0.0
        %6086 = vmatprep.subr.mxu0 0.0
        %6087 = vmatpush1.msra.mxu0 0.0
        %6088 = vmatprep.subr.mxu0 0.0
        %6089 = vmatpush1.msra.mxu0 0.0
        %6090 = vmatprep.subr.mxu0 0.0
        %6091 = vmatpush1.msra.mxu0 0.0
        %6092 = vmatprep.mubr.f32.mxu0 0.0
        %6093 = vmatmul.mubr.f32.gmra.mrb[0].mxu0 %v5103
        %v6094 = vpop.f32.mrb[0].mxu0
        %v6095 = vadd.f32 0.0, %v6094
        %v6096 = vpop.f32.mrb[0].mxu0
        %v6097 = vadd.f32 0.0, %v6096
        %6098 = vdwg.mxu0
        %6099 = vmatprep.subr.mxu0 %v5065
        %6100 = vmatpush1.msra.mxu0 %v5064
        %6101 = vmatprep.subr.mxu0 0.0
        %6102 = vmatpush1.msra.mxu0 0.0
        %6103 = vmatprep.subr.mxu0 0.0
        %6104 = vmatpush1.msra.mxu0 0.0
        %6105 = vmatprep.subr.mxu0 0.0
        %6106 = vmatpush1.msra.mxu0 0.0
        %6107 = vmatprep.subr.mxu0 0.0
        %6108 = vmatpush1.msra.mxu0 0.0
        %6109 = vmatprep.subr.mxu0 0.0
        %6110 = vmatpush1.msra.mxu0 0.0
        %6111 = vmatprep.subr.mxu0 0.0
        %6112 = vmatpush1.msra.mxu0 0.0
        %6113 = vmatprep.subr.mxu0 0.0
        %6114 = vmatpush1.msra.mxu0 0.0
        %6115 = vmatprep.subr.mxu0 0.0
        %6116 = vmatpush1.msra.mxu0 0.0
        %6117 = vmatprep.subr.mxu0 0.0
        %6118 = vmatpush1.msra.mxu0 0.0
        %6119 = vmatprep.subr.mxu0 0.0
        %6120 = vmatpush1.msra.mxu0 0.0
        %6121 = vmatprep.subr.mxu0 0.0
        %6122 = vmatpush1.msra.mxu0 0.0
        %6123 = vmatprep.subr.mxu0 0.0
        %6124 = vmatpush1.msra.mxu0 0.0
        %6125 = vmatprep.subr.mxu0 0.0
        %6126 = vmatpush1.msra.mxu0 0.0
        %6127 = vmatprep.subr.mxu0 0.0
        %6128 = vmatpush1.msra.mxu0 0.0
        %6129 = vmatprep.subr.mxu0 0.0
        %6130 = vmatpush1.msra.mxu0 0.0
        %6131 = vmatprep.subr.mxu0 0.0
        %6132 = vmatpush1.msra.mxu0 0.0
        %6133 = vmatprep.subr.mxu0 0.0
        %6134 = vmatpush1.msra.mxu0 0.0
        %6135 = vmatprep.subr.mxu0 0.0
        %6136 = vmatpush1.msra.mxu0 0.0
        %6137 = vmatprep.subr.mxu0 0.0
        %6138 = vmatpush1.msra.mxu0 0.0
        %6139 = vmatprep.subr.mxu0 0.0
        %6140 = vmatpush1.msra.mxu0 0.0
        %6141 = vmatprep.subr.mxu0 0.0
        %6142 = vmatpush1.msra.mxu0 0.0
        %6143 = vmatprep.subr.mxu0 0.0
        %6144 = vmatpush1.msra.mxu0 0.0
        %6145 = vmatprep.subr.mxu0 0.0
        %6146 = vmatpush1.msra.mxu0 0.0
        %6147 = vmatprep.subr.mxu0 0.0
        %6148 = vmatpush1.msra.mxu0 0.0
        %6149 = vmatprep.subr.mxu0 0.0
        %6150 = vmatpush1.msra.mxu0 0.0
        %6151 = vmatprep.subr.mxu0 0.0
        %6152 = vmatpush1.msra.mxu0 0.0
        %6153 = vmatprep.subr.mxu0 0.0
        %6154 = vmatpush1.msra.mxu0 0.0
        %6155 = vmatprep.subr.mxu0 0.0
        %6156 = vmatpush1.msra.mxu0 0.0
        %6157 = vmatprep.subr.mxu0 0.0
        %6158 = vmatpush1.msra.mxu0 0.0
        %6159 = vmatprep.subr.mxu0 0.0
        %6160 = vmatpush1.msra.mxu0 0.0
        %6161 = vmatprep.subr.mxu0 0.0
        %6162 = vmatpush1.msra.mxu0 0.0
        %6163 = vmatprep.mubr.f32.mxu0 0.0
        %6164 = vmatmul.mubr.f32.gmra.mrb[0].mxu0 %v5103
        %v6165 = vpop.f32.mrb[0].mxu0
        %v6166 = vadd.f32 0.0, %v6165
        %v6167 = vpop.f32.mrb[0].mxu0
        %v6168 = vadd.f32 0.0, %v6167
        %6169 = vdwg.mxu0
        %6170 = vmatprep.subr.mxu0 %v5067
        %6171 = vmatpush1.msra.mxu0 %v5066
        %6172 = vmatprep.subr.mxu0 0.0
        %6173 = vmatpush1.msra.mxu0 0.0
        %6174 = vmatprep.subr.mxu0 0.0
        %6175 = vmatpush1.msra.mxu0 0.0
        %6176 = vmatprep.subr.mxu0 0.0
        %6177 = vmatpush1.msra.mxu0 0.0
        %6178 = vmatprep.subr.mxu0 0.0
        %6179 = vmatpush1.msra.mxu0 0.0
        %6180 = vmatprep.subr.mxu0 0.0
        %6181 = vmatpush1.msra.mxu0 0.0
        %6182 = vmatprep.subr.mxu0 0.0
        %6183 = vmatpush1.msra.mxu0 0.0
        %6184 = vmatprep.subr.mxu0 0.0
        %6185 = vmatpush1.msra.mxu0 0.0
        %6186 = vmatprep.subr.mxu0 0.0
        %6187 = vmatpush1.msra.mxu0 0.0
        %6188 = vmatprep.subr.mxu0 0.0
        %6189 = vmatpush1.msra.mxu0 0.0
        %6190 = vmatprep.subr.mxu0 0.0
        %6191 = vmatpush1.msra.mxu0 0.0
        %6192 = vmatprep.subr.mxu0 0.0
        %6193 = vmatpush1.msra.mxu0 0.0
        %6194 = vmatprep.subr.mxu0 0.0
        %6195 = vmatpush1.msra.mxu0 0.0
        %6196 = vmatprep.subr.mxu0 0.0
        %6197 = vmatpush1.msra.mxu0 0.0
        %6198 = vmatprep.subr.mxu0 0.0
        %6199 = vmatpush1.msra.mxu0 0.0
        %6200 = vmatprep.subr.mxu0 0.0
        %6201 = vmatpush1.msra.mxu0 0.0
        %6202 = vmatprep.subr.mxu0 0.0
        %6203 = vmatpush1.msra.mxu0 0.0
        %6204 = vmatprep.subr.mxu0 0.0
        %6205 = vmatpush1.msra.mxu0 0.0
        %6206 = vmatprep.subr.mxu0 0.0
        %6207 = vmatpush1.msra.mxu0 0.0
        %6208 = vmatprep.subr.mxu0 0.0
        %6209 = vmatpush1.msra.mxu0 0.0
        %6210 = vmatprep.subr.mxu0 0.0
        %6211 = vmatpush1.msra.mxu0 0.0
        %6212 = vmatprep.subr.mxu0 0.0
        %6213 = vmatpush1.msra.mxu0 0.0
        %6214 = vmatprep.subr.mxu0 0.0
        %6215 = vmatpush1.msra.mxu0 0.0
        %6216 = vmatprep.subr.mxu0 0.0
        %6217 = vmatpush1.msra.mxu0 0.0
        %6218 = vmatprep.subr.mxu0 0.0
        %6219 = vmatpush1.msra.mxu0 0.0
        %6220 = vmatprep.subr.mxu0 0.0
        %6221 = vmatpush1.msra.mxu0 0.0
        %6222 = vmatprep.subr.mxu0 0.0
        %6223 = vmatpush1.msra.mxu0 0.0
        %6224 = vmatprep.subr.mxu0 0.0
        %6225 = vmatpush1.msra.mxu0 0.0
        %6226 = vmatprep.subr.mxu0 0.0
        %6227 = vmatpush1.msra.mxu0 0.0
        %6228 = vmatprep.subr.mxu0 0.0
        %6229 = vmatpush1.msra.mxu0 0.0
        %6230 = vmatprep.subr.mxu0 0.0
        %6231 = vmatpush1.msra.mxu0 0.0
        %6232 = vmatprep.subr.mxu0 0.0
        %6233 = vmatpush1.msra.mxu0 0.0
        %6234 = vmatprep.mubr.f32.mxu0 0.0
        %6235 = vmatmul.mubr.f32.gmra.mrb[0].mxu0 %v5103
        %v6236 = vpop.f32.mrb[0].mxu0
        %v6237 = vadd.f32 0.0, %v6236
        %v6238 = vpop.f32.mrb[0].mxu0
        %v6239 = vadd.f32 0.0, %v6238
        %6240 = vdwg.mxu0
        %6241 = vst [vmem:[%s271] sm:$0xff] %v5172
        %6242 = vst [vmem:[%s271 + $0x8] sm:$0xff] %v5174
        %6243 = vst [vmem:[%s271 + $0x10] sm:$0xff] %v5243
        %6244 = vst [vmem:[%s271 + $0x18] sm:$0xff] %v5245
        %6245 = vst [vmem:[%s271 + $0x20] sm:$0xff] %v5314
        %6246 = vst [vmem:[%s271 + $0x28] sm:$0xff] %v5316
        %6247 = vst [vmem:[%s271 + $0x30] sm:$0xff] %v5385
        %6248 = vst [vmem:[%s271 + $0x38] sm:$0xff] %v5387
        %6249 = vst [vmem:[%s271 + $0x40] sm:$0xff] %v5456
        %6250 = vst [vmem:[%s271 + $0x48] sm:$0xff] %v5458
        %6251 = vst [vmem:[%s271 + $0x50] sm:$0xff] %v5527
        %6252 = vst [vmem:[%s271 + $0x58] sm:$0xff] %v5529
        %6253 = vst [vmem:[%s271 + $0x60] sm:$0xff] %v5598
        %6254 = vst [vmem:[%s271 + $0x68] sm:$0xff] %v5600
        %6255 = vst [vmem:[%s271 + $0x70] sm:$0xff] %v5669
        %6256 = vst [vmem:[%s271 + $0x78] sm:$0xff] %v5671
        %6257 = vst [vmem:[%s271 + $0x80] sm:$0xff] %v5740
        %6258 = vst [vmem:[%s271 + $0x88] sm:$0xff] %v5742
        %6259 = vst [vmem:[%s271 + $0x90] sm:$0xff] %v5811
        %6260 = vst [vmem:[%s271 + $0x98] sm:$0xff] %v5813
        %6261 = vst [vmem:[%s271 + $0xa0] sm:$0xff] %v5882
        %6262 = vst [vmem:[%s271 + $0xa8] sm:$0xff] %v5884
        %6263 = vst [vmem:[%s271 + $0xb0] sm:$0xff] %v5953
        %6264 = vst [vmem:[%s271 + $0xb8] sm:$0xff] %v5955
        %6265 = vst [vmem:[%s271 + $0xc0] sm:$0xff] %v6024
        %6266 = vst [vmem:[%s271 + $0xc8] sm:$0xff] %v6026
        %6267 = vst [vmem:[%s271 + $0xd0] sm:$0xff] %v6095
        %6268 = vst [vmem:[%s271 + $0xd8] sm:$0xff] %v6097
        %6269 = vst [vmem:[%s271 + $0xe0] sm:$0xff] %v6166
        %6270 = vst [vmem:[%s271 + $0xe8] sm:$0xff] %v6168
        %6271 = vst [vmem:[%s271 + $0xf0] sm:$0xff] %v6237
        %6272 = vst [vmem:[%s271 + $0xf8] sm:$0xff] %v6239
        %s6273 = sand.u32 %s139, 1
        %s6274 = scalar_lea.sflag [#allocation4], %s6273
        %s6275 = sand.u32 %s139, 1
        %s6276 = smul.addr %s6275, 256
        %s6277 = scalar_lea.vmem [#allocation5], %s6276
        %s6278 = sand.u32 %s167, 1
        %s6279 = scalar_lea.sflag [#allocation7], %s6278
        %s6280 = sand.u32 %s167, 1
        %s6281 = smul.addr %s6280, 256
        %s6282 = scalar_lea.vmem [#allocation6], %s6281
        // Predicated region
        $region41: #{tpu_custom_call.1} parent=35 // pred_check
          %p6283 = pneg %p149
        $region42: #{tpu_custom_call.1} parent=35 // pred_check_branch
          %6285 = sbr.rel (%p6283) target = $region44
        $region43: #{tpu_custom_call.1} parent=35 // pred_region
          %s6286 = smul.u32 32, %s31
          %s6288 = ssub.s32 4096, 4096
          %6289 = vsyncadd %s6274, %s6288
          %s6290 = smul.addr %s30, 32
          %s6291 = sadd.s32 %s6286, %s6290
          %s6292 = smul.addr %s6291, 128
          %s6293 = scalar_lea.hbm %s4, %s6292
          %s6295 = sshll.u32 %s6277, 4
          %s6296 = int_to_ptr.vmem [resolvable:$true] %s6295
          %6298 = dma.vmem_to_hbm [thread:$0]  %s6296, 4096, %s6293, %s6274
        $region44: #{tpu_custom_call.1} parent=35 // pred_fallthru
          _
        // Predicated region
        $region45: #{tpu_custom_call.1} parent=35 // pred_check
          %p6299 = pneg %p177
        $region46: #{tpu_custom_call.1} parent=35 // pred_check_branch
          %6301 = sbr.rel (%p6299) target = $region48
        $region47: #{tpu_custom_call.1} parent=35 // pred_region
          %s6302 = smul.u32 32, %s31
          %s6304 = ssub.s32 4096, 4096
          %6305 = vsyncadd %s6279, %s6304
          %s6306 = smul.addr %s30, 32
          %s6307 = sadd.s32 %s6302, %s6306
          %s6308 = smul.addr %s6307, 128
          %s6309 = scalar_lea.hbm %s5, %s6308
          %s6311 = sshll.u32 %s6282, 4
          %s6312 = int_to_ptr.vmem [resolvable:$true] %s6311
          %6314 = dma.vmem_to_hbm [thread:$0]  %s6312, 4096, %s6309, %s6279
        $region48: #{tpu_custom_call.1} parent=35 // pred_fallthru
          _
      $region36: #{tpu_custom_call.1} parent=5 // pred_fallthru
        _
      %p6315 = scmp.le.s32.totalorder 2, %s21
      // Predicated region
      $region49: #{tpu_custom_call.1} parent=5 // pred_check
        %p6316 = pneg %p6315
      $region50: #{tpu_custom_call.1} parent=5 // pred_check_branch
        %6318 = sbr.rel (%p6316) target = $region52
      $region51: #{tpu_custom_call.1} parent=5 // pred_region
        %s6319 = ssub.s32 %s21, 2
        // Predicated region
        $region53: #{tpu_custom_call.1} parent=51 // pred_check
          %p6320 = pneg %p155
        $region54: #{tpu_custom_call.1} parent=51 // pred_check_branch
          %6322 = sbr.rel (%p6320) target = $region56
        $region55: #{tpu_custom_call.1} parent=51 // pred_region
          %s6323 = sand.u32 %s140, 1
          %s6324 = scalar_lea.sflag [#allocation4], %s6323
          %s6325 = sand.u32 %s140, 1
          %s6326 = smul.addr %s6325, 256
          %s6327 = scalar_lea.vmem [#allocation5], %s6326
          %6328 = dma.done %s6324, 4096
        $region56: #{tpu_custom_call.1} parent=51 // pred_fallthru
          _
        // Predicated region
        $region57: #{tpu_custom_call.1} parent=51 // pred_check
          %p6329 = pneg %p183
        $region58: #{tpu_custom_call.1} parent=51 // pred_check_branch
          %6331 = sbr.rel (%p6329) target = $region60
        $region59: #{tpu_custom_call.1} parent=51 // pred_region
          %s6332 = sand.u32 %s168, 1
          %s6333 = scalar_lea.sflag [#allocation7], %s6332
          %s6334 = sand.u32 %s168, 1
          %s6335 = smul.addr %s6334, 256
          %s6336 = scalar_lea.vmem [#allocation6], %s6335
          %6337 = dma.done %s6333, 4096
        $region60: #{tpu_custom_call.1} parent=51 // pred_fallthru
          _
      $region52: #{tpu_custom_call.1} parent=5 // pred_fallthru
        _
    $region6: #{tpu_custom_call.1} parent=1 // loop_footer
      %s25 = sadd.s32 1, %s21
    $region7: #{tpu_custom_call.1} parent=1 // loop_footer_branch
      %20 = sbr.rel target = $region3
    $region8: #{tpu_custom_call.1} parent=1 // loop_exit
      _
    %6338 = vsyncpa [#allocation3], 1
    %s6339 = scalar_lea.sflag [#allocation3], 1
    %6340 = vsyncpa %s6339, 1
    %6341 = vsyncpa [#allocation4], 1
    %s6342 = scalar_lea.sflag [#allocation4], 1
    %6343 = vsyncpa %s6342, 1
    %6344 = vsyncpa [#allocation7], 1
    %s6345 = scalar_lea.sflag [#allocation7], 1
    %6346 = vsyncpa %s6345, 1

</llo_original>
